<compile_context>
chip_gen: v5e
topology: v5e:2x2
jax: 0.10.0
libtpu: 0.0.40
codegen_flags: <defaults>
</compile_context>

<pallas_src>
import functools
import math

import jax
import jax.numpy as jnp
from jax.experimental import pallas as pl
from jax.experimental.pallas import tpu as pltpu

HIDDEN = 256  # fixed by the module architecture


def _round_up(x, m):
    return (x + m - 1) // m * m


def molecule_template_kernel(
    ecfp_ref, drfp_ref,          # (TB, ecfp_dim) int8, (TB, drfp_dim) int8
    w256_ref, wproj_ref,         # packed bf16 weight slabs
    b256_ref, bproj_ref,         # packed f32 bias slabs
    mol_ref, tmpl_ref, score_ref,
    *, ecfp_dim, drfp_dim, proj_dim,
):
    f32 = jnp.float32
    bf16 = jnp.bfloat16

    # Static row offsets into the packed weight slabs (Python ints).
    o_sw0 = 0
    o_sw1 = o_sw0 + ecfp_dim
    o_sw2 = o_sw1 + HIDDEN
    o_tw0 = o_sw2 + HIDDEN
    o_pw0 = o_tw0 + drfp_dim
    o_pw1 = o_pw0 + 2 * proj_dim

    o_sw3 = 0
    o_tw1 = o_sw3 + HIDDEN
    o_pw2 = o_tw1 + HIDDEN

    def mm(x, w_ref, row0, rows):
        # bf16 x bf16 operands, f32 accumulation on the MXU.
        return jnp.dot(x.astype(bf16), w_ref[row0:row0 + rows, :],
                       preferred_element_type=f32)

    def relu(v):
        return jnp.maximum(v, 0.0)

    # {0,1} int8 fingerprints -> bf16 (exact) right after the block load; the
    # VPU cast is cheap and the int8 HBM storage halves the input DMA.
    ecfp = ecfp_ref[...].astype(f32).astype(bf16)
    drfp = drfp_ref[...].astype(f32).astype(bf16)

    # --- smiles encoder: Linear(ecfp,256) ReLU x3 -> Linear(256,proj) ---
    h = relu(mm(ecfp, w256_ref, o_sw0, ecfp_dim) + b256_ref[0:1, :])
    h = relu(mm(h, w256_ref, o_sw1, HIDDEN) + b256_ref[1:2, :])
    h = relu(mm(h, w256_ref, o_sw2, HIDDEN) + b256_ref[2:3, :])
    mol = mm(h, wproj_ref, o_sw3, HIDDEN) + bproj_ref[0:1, :]      # (TB, proj) f32
    mol_bf = mol.astype(bf16)
    mol_ref[...] = mol_bf.astype(mol_ref.dtype)

    # --- template encoder: Linear(drfp,256) ReLU -> Linear(256,proj) ---
    t = relu(mm(drfp, w256_ref, o_tw0, drfp_dim) + b256_ref[3:4, :])
    tmpl = mm(t, wproj_ref, o_tw1, HIDDEN) + bproj_ref[1:2, :]     # (TB, proj) f32
    tmpl_bf = tmpl.astype(bf16)
    tmpl_ref[...] = tmpl_bf.astype(tmpl_ref.dtype)

    # --- predictor: single K = 2*proj matmul on the lane-concat mol|tmpl ---
    comb = jnp.concatenate([mol_bf, tmpl_bf], axis=-1)             # (TB, 2*proj) bf16
    p = relu(mm(comb, w256_ref, o_pw0, 2 * proj_dim) + b256_ref[4:5, :])
    p = relu(mm(p, w256_ref, o_pw1, HIDDEN) + b256_ref[5:6, :])
    # pw2 is padded to proj_dim output lanes for the MXU; the real logit is
    # column 0 and only that column is written back (no padded score slab).
    logits = mm(p, wproj_ref, o_pw2, HIDDEN) + bproj_ref[2:3, :]   # (TB, proj)
    score_ref[...] = jax.nn.sigmoid(logits[:, :1]).astype(score_ref.dtype)


def init_linear(key, in_dim, out_dim):
    """PyTorch nn.Linear default init: U(-1/sqrt(in), 1/sqrt(in)); stored (in, out)."""
    kw, kb = jax.random.split(key)
    bound = 1.0 / math.sqrt(in_dim)
    w = jax.random.uniform(kw, (in_dim, out_dim), jnp.float32, -bound, bound)
    b = jax.random.uniform(kb, (1, out_dim), jnp.float32, -bound, bound)
    return w, b


def make_params(key, ecfp_dim=1024, drfp_dim=256, proj_dim=128):
    keys = jax.random.split(key, 9)
    params = []
    # smiles_encoder
    params += init_linear(keys[0], ecfp_dim, HIDDEN)
    params += init_linear(keys[1], HIDDEN, HIDDEN)
    params += init_linear(keys[2], HIDDEN, HIDDEN)
    params += init_linear(keys[3], HIDDEN, proj_dim)
    # template_encoder
    params += init_linear(keys[4], drfp_dim, HIDDEN)
    params += init_linear(keys[5], HIDDEN, proj_dim)
    # predictor
    params += init_linear(keys[6], proj_dim * 2, HIDDEN)
    params += init_linear(keys[7], HIDDEN, HIDDEN)
    params += init_linear(keys[8], HIDDEN, 1)
    return tuple(params)


def pack_params(params, proj_dim=128):
    """Pack 18 f32 params into 2 bf16 weight slabs + 2 f32 bias slabs."""
    (sw0, sb0, sw1, sb1, sw2, sb2, sw3, sb3,
     tw0, tb0, tw1, tb1, pw0, pb0, pw1, pb1, pw2, pb2) = params
    ecfp_dim = sw0.shape[0]
    drfp_dim = tw0.shape[0]
    # Lane-axis (last-dim) constraints and packed-(16,128) slab-offset guards.
    assert proj_dim % 128 == 0, "proj_dim must be a multiple of 128 (lane axis)"
    assert drfp_dim % 128 == 0, "drfp_dim must be a multiple of 128 (lane axis)"
    assert ecfp_dim % 128 == 0, "ecfp_dim must be a multiple of 128 (lane axis)"
    for off in (0, ecfp_dim, ecfp_dim + HIDDEN, ecfp_dim + 2 * HIDDEN,
                ecfp_dim + 2 * HIDDEN + drfp_dim,
                ecfp_dim + 2 * HIDDEN + drfp_dim + 2 * proj_dim):
        assert off % 16 == 0, "w256 slab row offsets must sit on 16-row boundaries"
    # Slab of all weights with HIDDEN(=256) output columns, stacked on rows.
    w256 = jnp.concatenate(
        [sw0, sw1, sw2, tw0, pw0, pw1], axis=0).astype(jnp.bfloat16)
    # Slab of all weights with proj_dim output columns; score head padded.
    pw2_pad = jnp.pad(pw2, ((0, 0), (0, proj_dim - pw2.shape[1])))
    wproj = jnp.concatenate([sw3, tw1, pw2_pad], axis=0).astype(jnp.bfloat16)
    # Bias slabs (f32), padded to 8 rows for clean (8,128) tiling.
    b256 = jnp.concatenate(
        [sb0, sb1, sb2, tb0, pb0, pb1, jnp.zeros((2, HIDDEN), jnp.float32)], axis=0)
    pb2_pad = jnp.pad(pb2, ((0, 0), (0, proj_dim - pb2.shape[1])))
    bproj = jnp.concatenate(
        [sb3, tb1, pb2_pad, jnp.zeros((5, proj_dim), jnp.float32)], axis=0)
    return w256, wproj, b256, bproj


def _pick_tile(batch, batch_block):
    """Batch tile (multiple of 16) and padded batch size."""
    batch_block = max(16, _round_up(batch_block, 16))
    padded16 = _round_up(batch, 16)
    if padded16 > 512:
        # Guarantee >= 2 grid steps so the "parallel" batch axis can shard
        # across v7x's two TensorCores; round each half to 256 rows.
        half = _round_up((padded16 + 1) // 2, 256)
        tb = min(batch_block, half)
    else:
        tb = min(batch_block, padded16)
    padded = _round_up(padded16, tb)
    return tb, padded


def molecule_template_net(ecfp_batch, drfp_batch, packed, *, proj_dim=128,
                          batch_block=1024):
    """Forward pass. Returns (molecule_embeddings, template_embeddings, scores)."""
    w256, wproj, b256, bproj = packed
    batch, ecfp_dim = ecfp_batch.shape
    drfp_dim = drfp_batch.shape[1]

    tb, padded = _pick_tile(batch, batch_block)
    if padded != batch:
        pad = padded - batch
        ecfp_batch = jnp.pad(ecfp_batch, ((0, pad), (0, 0)))
        drfp_batch = jnp.pad(drfp_batch, ((0, pad), (0, 0)))
    # Binary fingerprints -> int8 in HBM (exact); cast to bf16 inside the kernel.
    ecfp_i8 = ecfp_batch.astype(jnp.int8)
    drfp_i8 = drfp_batch.astype(jnp.int8)

    grid = (padded // tb,)
    row_map = lambda i: (i, 0)
    const_map = lambda i: (0, 0)   # parameters resident across batch tiles

    kernel = functools.partial(
        molecule_template_kernel,
        ecfp_dim=ecfp_dim, drfp_dim=drfp_dim, proj_dim=proj_dim)

    mol, tmpl, score = pl.pallas_call(
        kernel,
        grid=grid,
        in_specs=[
            pl.BlockSpec((tb, ecfp_dim), row_map),
            pl.BlockSpec((tb, drfp_dim), row_map),
            pl.BlockSpec(w256.shape, const_map),
            pl.BlockSpec(wproj.shape, const_map),
            pl.BlockSpec(b256.shape, const_map),
            pl.BlockSpec(bproj.shape, const_map),
        ],
        out_specs=(
            pl.BlockSpec((tb, proj_dim), row_map),
            pl.BlockSpec((tb, proj_dim), row_map),
            pl.BlockSpec((tb, 1), row_map),      # scores: single real column
        ),
        out_shape=(
            jax.ShapeDtypeStruct((padded, proj_dim), jnp.bfloat16),
            jax.ShapeDtypeStruct((padded, proj_dim), jnp.bfloat16),
            jax.ShapeDtypeStruct((padded, 1), jnp.float32),
        ),
        compiler_params=pltpu.CompilerParams(
            dimension_semantics=("parallel",),
            vmem_limit_bytes=32 << 20,
        ),
    )(ecfp_i8, drfp_i8, w256, wproj, b256, bproj)

    return mol[:batch], tmpl[:batch], score[:batch]


def reference_forward(ecfp, drfp, params):
    """Pure-JAX reference emulating the same bf16-operand / f32-accumulate math."""
    bf16 = jnp.bfloat16

    def lin(x, w, b):
        return jnp.dot(x.astype(bf16), w.astype(bf16),
                       preferred_element_type=jnp.float32) + b

    (sw0, sb0, sw1, sb1, sw2, sb2, sw3, sb3,
     tw0, tb0, tw1, tb1, pw0, pb0, pw1, pb1, pw2, pb2) = params
    h = jnp.maximum(lin(ecfp, sw0, sb0), 0.0)
    h = jnp.maximum(lin(h, sw1, sb1), 0.0)
    h = jnp.maximum(lin(h, sw2, sb2), 0.0)
    mol = lin(h, sw3, sb3)
    t = jnp.maximum(lin(drfp, tw0, tb0), 0.0)
    tmpl = lin(t, tw1, tb1)
    c = jnp.concatenate([mol, tmpl], axis=-1)
    p = jnp.maximum(lin(c, pw0, pb0), 0.0)
    p = jnp.maximum(lin(p, pw1, pb1), 0.0)
    score = jax.nn.sigmoid(lin(p, pw2, pb2))
    return mol, tmpl, score


if __name__ == "__main__":
    key = jax.random.PRNGKey(0)
    k_params, k_ecfp, k_drfp = jax.random.split(key, 3)

    batch = 48
    ecfp_dim, drfp_dim, proj_dim = 1024, 256, 128

    params = make_params(k_params, ecfp_dim=ecfp_dim, drfp_dim=drfp_dim,
                         proj_dim=proj_dim)
    packed = pack_params(params, proj_dim=proj_dim)

    # ECFP / DRFP fingerprints are binary bit-vectors; emulate with {0,1} floats.
    ecfp = (jax.random.uniform(k_ecfp, (batch, ecfp_dim)) < 0.1).astype(jnp.float32)
    drfp = (jax.random.uniform(k_drfp, (batch, drfp_dim)) < 0.1).astype(jnp.float32)

    # batch_block=32 only so this tiny demo exercises the batch grid + padding
    # path (grid=(2,)); production keeps the default batch_block=1024.
    mol_emb, tmpl_emb, scores = molecule_template_net(
        ecfp, drfp, packed, proj_dim=proj_dim, batch_block=32)
    jax.block_until_ready((mol_emb, tmpl_emb, scores))

    # Sanity check against the pure-JAX reference (same bf16 quantization).
    mol_r, tmpl_r, scores_r = reference_forward(ecfp, drfp, params)
    assert mol_emb.shape == (batch, proj_dim)
    assert tmpl_emb.shape == (batch, proj_dim)
    assert scores.shape == (batch, 1)
    assert jnp.allclose(mol_emb.astype(jnp.float32), mol_r, atol=1e-2, rtol=1e-2)
    assert jnp.allclose(tmpl_emb.astype(jnp.float32), tmpl_r, atol=1e-2, rtol=1e-2)
    assert jnp.allclose(scores, scores_r, atol=1e-2, rtol=1e-2)

    print("KERNEL_OK")
</pallas_src>

<mosaic_0001>
module attributes {stable_mosaic.version = 11 : i64} {
  func.func @molecule_template_kernel(%arg0: i32, %arg1: memref<32x1024xi8, #tpu.memory_space<vmem>>, %arg2: memref<32x256xi8, #tpu.memory_space<vmem>>, %arg3: memref<2304x256xbf16, #tpu.memory_space<vmem>>, %arg4: memref<768x128xbf16, #tpu.memory_space<vmem>>, %arg5: memref<8x256xf32, #tpu.memory_space<vmem>>, %arg6: memref<8x128xf32, #tpu.memory_space<vmem>>, %arg7: memref<32x128xbf16, #tpu.memory_space<vmem>>, %arg8: memref<32x128xbf16, #tpu.memory_space<vmem>>, %arg9: memref<32x1xf32, #tpu.memory_space<vmem>>) attributes {dimension_semantics = [#tpu.dimension_semantics<parallel>], iteration_bounds = array<i64: 2>, scalar_prefetch = 0 : i64, scratch_operands = 0 : i64, tpu.core_type = #tpu.core_type<tc>, window_params = [{transform_indices = @transform_0, window_bounds = array<i64: 32, 1024>}, {transform_indices = @transform_1, window_bounds = array<i64: 32, 256>}, {pipeline_mode = #tpu.pipeline_mode<synchronous>, transform_indices = @transform_2, window_bounds = array<i64: 2304, 256>}, {pipeline_mode = #tpu.pipeline_mode<synchronous>, transform_indices = @transform_3, window_bounds = array<i64: 768, 128>}, {pipeline_mode = #tpu.pipeline_mode<synchronous>, transform_indices = @transform_4, window_bounds = array<i64: 8, 256>}, {pipeline_mode = #tpu.pipeline_mode<synchronous>, transform_indices = @transform_5, window_bounds = array<i64: 8, 128>}, {transform_indices = @transform_6, window_bounds = array<i64: 32, 128>}, {transform_indices = @transform_7, window_bounds = array<i64: 32, 128>}, {transform_indices = @transform_8, window_bounds = array<i64: 32, 1>}]} {
    %c0 = arith.constant 0 : index
    %c0_0 = arith.constant 0 : index
    %0 = vector.load %arg1[%c0, %c0_0] : memref<32x1024xi8, #tpu.memory_space<vmem>>, vector<32x1024xi8>
    %1 = arith.sitofp %0 : vector<32x1024xi8> to vector<32x1024xf32>
    %2 = arith.truncf %1 : vector<32x1024xf32> to vector<32x1024xbf16>
    %c0_1 = arith.constant 0 : index
    %c0_2 = arith.constant 0 : index
    %3 = vector.load %arg2[%c0_1, %c0_2] : memref<32x256xi8, #tpu.memory_space<vmem>>, vector<32x256xi8>
    %4 = arith.sitofp %3 : vector<32x256xi8> to vector<32x256xf32>
    %5 = arith.truncf %4 : vector<32x256xf32> to vector<32x256xbf16>
    %c0_3 = arith.constant 0 : index
    %c0_4 = arith.constant 0 : index
    %6 = vector.load %arg3[%c0_3, %c0_4] : memref<2304x256xbf16, #tpu.memory_space<vmem>>, vector<1024x256xbf16>
    %cst = arith.constant dense<0.000000e+00> : vector<32x256xf32>
    %7 = tpu.matmul %2, %6, %cst {dimension_numbers = #tpu.dot_dimension_numbers<[1], [0], [0], [1], [0, 0, 1, 1], [], []>} : vector<32x1024xbf16>, vector<1024x256xbf16>, vector<32x256xf32> -> vector<32x256xf32>
    %c0_5 = arith.constant 0 : index
    %c0_6 = arith.constant 0 : index
    %8 = vector.load %arg5[%c0_5, %c0_6] : memref<8x256xf32, #tpu.memory_space<vmem>>, vector<1x256xf32>
    %9 = vector.broadcast %8 : vector<1x256xf32> to vector<32x256xf32>
    %10 = arith.addf %7, %9 : vector<32x256xf32>
    %cst_7 = arith.constant 0.000000e+00 : f32
    %11 = vector.broadcast %cst_7 : f32 to vector<32x256xf32>
    %12 = arith.maximumf %10, %11 : vector<32x256xf32>
    %13 = arith.truncf %12 : vector<32x256xf32> to vector<32x256xbf16>
    %c1024 = arith.constant 1024 : index
    %c0_8 = arith.constant 0 : index
    %14 = vector.load %arg3[%c1024, %c0_8] : memref<2304x256xbf16, #tpu.memory_space<vmem>>, vector<256x256xbf16>
    %cst_9 = arith.constant dense<0.000000e+00> : vector<32x256xf32>
    %15 = tpu.matmul %13, %14, %cst_9 {dimension_numbers = #tpu.dot_dimension_numbers<[1], [0], [0], [1], [0, 0, 1, 1], [], []>} : vector<32x256xbf16>, vector<256x256xbf16>, vector<32x256xf32> -> vector<32x256xf32>
    %c1 = arith.constant 1 : index
    %c0_10 = arith.constant 0 : index
    %16 = vector.load %arg5[%c1, %c0_10] : memref<8x256xf32, #tpu.memory_space<vmem>>, vector<1x256xf32>
    %17 = vector.broadcast %16 : vector<1x256xf32> to vector<32x256xf32>
    %18 = arith.addf %15, %17 : vector<32x256xf32>
    %cst_11 = arith.constant 0.000000e+00 : f32
    %19 = vector.broadcast %cst_11 : f32 to vector<32x256xf32>
    %20 = arith.maximumf %18, %19 : vector<32x256xf32>
    %21 = arith.truncf %20 : vector<32x256xf32> to vector<32x256xbf16>
    %c1280 = arith.constant 1280 : index
    %c0_12 = arith.constant 0 : index
    %22 = vector.load %arg3[%c1280, %c0_12] : memref<2304x256xbf16, #tpu.memory_space<vmem>>, vector<256x256xbf16>
    %cst_13 = arith.constant dense<0.000000e+00> : vector<32x256xf32>
    %23 = tpu.matmul %21, %22, %cst_13 {dimension_numbers = #tpu.dot_dimension_numbers<[1], [0], [0], [1], [0, 0, 1, 1], [], []>} : vector<32x256xbf16>, vector<256x256xbf16>, vector<32x256xf32> -> vector<32x256xf32>
    %c2 = arith.constant 2 : index
    %c0_14 = arith.constant 0 : index
    %24 = vector.load %arg5[%c2, %c0_14] : memref<8x256xf32, #tpu.memory_space<vmem>>, vector<1x256xf32>
    %25 = vector.broadcast %24 : vector<1x256xf32> to vector<32x256xf32>
    %26 = arith.addf %23, %25 : vector<32x256xf32>
    %cst_15 = arith.constant 0.000000e+00 : f32
    %27 = vector.broadcast %cst_15 : f32 to vector<32x256xf32>
    %28 = arith.maximumf %26, %27 : vector<32x256xf32>
    %29 = arith.truncf %28 : vector<32x256xf32> to vector<32x256xbf16>
    %c0_16 = arith.constant 0 : index
    %c0_17 = arith.constant 0 : index
    %30 = vector.load %arg4[%c0_16, %c0_17] : memref<768x128xbf16, #tpu.memory_space<vmem>>, vector<256x128xbf16>
    %cst_18 = arith.constant dense<0.000000e+00> : vector<32x128xf32>
    %31 = tpu.matmul %29, %30, %cst_18 {dimension_numbers = #tpu.dot_dimension_numbers<[1], [0], [0], [1], [0, 0, 1, 1], [], []>} : vector<32x256xbf16>, vector<256x128xbf16>, vector<32x128xf32> -> vector<32x128xf32>
    %c0_19 = arith.constant 0 : index
    %c0_20 = arith.constant 0 : index
    %32 = vector.load %arg6[%c0_19, %c0_20] : memref<8x128xf32, #tpu.memory_space<vmem>>, vector<1x128xf32>
    %33 = vector.broadcast %32 : vector<1x128xf32> to vector<32x128xf32>
    %34 = arith.addf %31, %33 : vector<32x128xf32>
    %35 = arith.truncf %34 : vector<32x128xf32> to vector<32x128xbf16>
    %c0_21 = arith.constant 0 : index
    %c0_22 = arith.constant 0 : index
    %36 = vector.load %arg7[%c0_21, %c0_22] : memref<32x128xbf16, #tpu.memory_space<vmem>>, vector<32x128xbf16>
    tpu.vector_store %arg7[%c0_21, %c0_22], %35 {strides = array<i32>} : memref<32x128xbf16, #tpu.memory_space<vmem>>, vector<32x128xbf16>,
    %c1536 = arith.constant 1536 : index
    %c0_23 = arith.constant 0 : index
    %37 = vector.load %arg3[%c1536, %c0_23] : memref<2304x256xbf16, #tpu.memory_space<vmem>>, vector<256x256xbf16>
    %cst_24 = arith.constant dense<0.000000e+00> : vector<32x256xf32>
    %38 = tpu.matmul %5, %37, %cst_24 {dimension_numbers = #tpu.dot_dimension_numbers<[1], [0], [0], [1], [0, 0, 1, 1], [], []>} : vector<32x256xbf16>, vector<256x256xbf16>, vector<32x256xf32> -> vector<32x256xf32>
    %c3 = arith.constant 3 : index
    %c0_25 = arith.constant 0 : index
    %39 = vector.load %arg5[%c3, %c0_25] : memref<8x256xf32, #tpu.memory_space<vmem>>, vector<1x256xf32>
    %40 = vector.broadcast %39 : vector<1x256xf32> to vector<32x256xf32>
    %41 = arith.addf %38, %40 : vector<32x256xf32>
    %cst_26 = arith.constant 0.000000e+00 : f32
    %42 = vector.broadcast %cst_26 : f32 to vector<32x256xf32>
    %43 = arith.maximumf %41, %42 : vector<32x256xf32>
    %44 = arith.truncf %43 : vector<32x256xf32> to vector<32x256xbf16>
    %c256 = arith.constant 256 : index
    %c0_27 = arith.constant 0 : index
    %45 = vector.load %arg4[%c256, %c0_27] : memref<768x128xbf16, #tpu.memory_space<vmem>>, vector<256x128xbf16>
    %cst_28 = arith.constant dense<0.000000e+00> : vector<32x128xf32>
    %46 = tpu.matmul %44, %45, %cst_28 {dimension_numbers = #tpu.dot_dimension_numbers<[1], [0], [0], [1], [0, 0, 1, 1], [], []>} : vector<32x256xbf16>, vector<256x128xbf16>, vector<32x128xf32> -> vector<32x128xf32>
    %c1_29 = arith.constant 1 : index
    %c0_30 = arith.constant 0 : index
    %47 = vector.load %arg6[%c1_29, %c0_30] : memref<8x128xf32, #tpu.memory_space<vmem>>, vector<1x128xf32>
    %48 = vector.broadcast %47 : vector<1x128xf32> to vector<32x128xf32>
    %49 = arith.addf %46, %48 : vector<32x128xf32>
    %50 = arith.truncf %49 : vector<32x128xf32> to vector<32x128xbf16>
    %c0_31 = arith.constant 0 : index
    %c0_32 = arith.constant 0 : index
    %51 = vector.load %arg8[%c0_31, %c0_32] : memref<32x128xbf16, #tpu.memory_space<vmem>>, vector<32x128xbf16>
    tpu.vector_store %arg8[%c0_31, %c0_32], %50 {strides = array<i32>} : memref<32x128xbf16, #tpu.memory_space<vmem>>, vector<32x128xbf16>,
    %52 = tpu.concatenate %35, %50 in 1 : vector<32x128xbf16>, vector<32x128xbf16> -> vector<32x256xbf16>
    %c1792 = arith.constant 1792 : index
    %c0_33 = arith.constant 0 : index
    %53 = vector.load %arg3[%c1792, %c0_33] : memref<2304x256xbf16, #tpu.memory_space<vmem>>, vector<256x256xbf16>
    %cst_34 = arith.constant dense<0.000000e+00> : vector<32x256xf32>
    %54 = tpu.matmul %52, %53, %cst_34 {dimension_numbers = #tpu.dot_dimension_numbers<[1], [0], [0], [1], [0, 0, 1, 1], [], []>} : vector<32x256xbf16>, vector<256x256xbf16>, vector<32x256xf32> -> vector<32x256xf32>
    %c4 = arith.constant 4 : index
    %c0_35 = arith.constant 0 : index
    %55 = vector.load %arg5[%c4, %c0_35] : memref<8x256xf32, #tpu.memory_space<vmem>>, vector<1x256xf32>
    %56 = vector.broadcast %55 : vector<1x256xf32> to vector<32x256xf32>
    %57 = arith.addf %54, %56 : vector<32x256xf32>
    %cst_36 = arith.constant 0.000000e+00 : f32
    %58 = vector.broadcast %cst_36 : f32 to vector<32x256xf32>
    %59 = arith.maximumf %57, %58 : vector<32x256xf32>
    %60 = arith.truncf %59 : vector<32x256xf32> to vector<32x256xbf16>
    %c2048 = arith.constant 2048 : index
    %c0_37 = arith.constant 0 : index
    %61 = vector.load %arg3[%c2048, %c0_37] : memref<2304x256xbf16, #tpu.memory_space<vmem>>, vector<256x256xbf16>
    %cst_38 = arith.constant dense<0.000000e+00> : vector<32x256xf32>
    %62 = tpu.matmul %60, %61, %cst_38 {dimension_numbers = #tpu.dot_dimension_numbers<[1], [0], [0], [1], [0, 0, 1, 1], [], []>} : vector<32x256xbf16>, vector<256x256xbf16>, vector<32x256xf32> -> vector<32x256xf32>
    %c5 = arith.constant 5 : index
    %c0_39 = arith.constant 0 : index
    %63 = vector.load %arg5[%c5, %c0_39] : memref<8x256xf32, #tpu.memory_space<vmem>>, vector<1x256xf32>
    %64 = vector.broadcast %63 : vector<1x256xf32> to vector<32x256xf32>
    %65 = arith.addf %62, %64 : vector<32x256xf32>
    %cst_40 = arith.constant 0.000000e+00 : f32
    %66 = vector.broadcast %cst_40 : f32 to vector<32x256xf32>
    %67 = arith.maximumf %65, %66 : vector<32x256xf32>
    %68 = arith.truncf %67 : vector<32x256xf32> to vector<32x256xbf16>
    %c512 = arith.constant 512 : index
    %c0_41 = arith.constant 0 : index
    %69 = vector.load %arg4[%c512, %c0_41] : memref<768x128xbf16, #tpu.memory_space<vmem>>, vector<256x128xbf16>
    %cst_42 = arith.constant dense<0.000000e+00> : vector<32x128xf32>
    %70 = tpu.matmul %68, %69, %cst_42 {dimension_numbers = #tpu.dot_dimension_numbers<[1], [0], [0], [1], [0, 0, 1, 1], [], []>} : vector<32x256xbf16>, vector<256x128xbf16>, vector<32x128xf32> -> vector<32x128xf32>
    %c2_43 = arith.constant 2 : index
    %c0_44 = arith.constant 0 : index
    %71 = vector.load %arg6[%c2_43, %c0_44] : memref<8x128xf32, #tpu.memory_space<vmem>>, vector<1x128xf32>
    %72 = vector.broadcast %71 : vector<1x128xf32> to vector<32x128xf32>
    %73 = arith.addf %70, %72 : vector<32x128xf32>
    %74 = vector.extract_strided_slice %73 {offsets = [0, 0], sizes = [32, 1], strides = [1, 1]} : vector<32x128xf32> to vector<32x1xf32>
    %75 = arith.negf %74 : vector<32x1xf32>
    %76 = math.exp %75 : vector<32x1xf32>
    %cst_45 = arith.constant 1.000000e+00 : f32
    %77 = vector.broadcast %cst_45 : f32 to vector<32x1xf32>
    %78 = arith.addf %77, %76 : vector<32x1xf32>
    %79 = arith.divf %77, %78 : vector<32x1xf32>
    %c0_46 = arith.constant 0 : index
    %c0_47 = arith.constant 0 : index
    %80 = vector.load %arg9[%c0_46, %c0_47] : memref<32x1xf32, #tpu.memory_space<vmem>>, vector<32x1xf32>
    tpu.vector_store %arg9[%c0_46, %c0_47], %79 {strides = array<i32>} : memref<32x1xf32, #tpu.memory_space<vmem>>, vector<32x1xf32>,
    return
  }
  func.func @transform_0(%arg0: i32) -> (i32, i32) {
    %c0_i32 = arith.constant 0 : i32
    %c0_i32_0 = arith.constant 0 : i32
    return %arg0, %c0_i32 : i32, i32
  }
  func.func @transform_1(%arg0: i32) -> (i32, i32) {
    %c0_i32 = arith.constant 0 : i32
    %c0_i32_0 = arith.constant 0 : i32
    return %arg0, %c0_i32 : i32, i32
  }
  func.func @transform_2(%arg0: i32) -> (i32, i32) {
    %c0_i32 = arith.constant 0 : i32
    %c0_i32_0 = arith.constant 0 : i32
    %c0_i32_1 = arith.constant 0 : i32
    return %c0_i32, %c0_i32_0 : i32, i32
  }
  func.func @transform_3(%arg0: i32) -> (i32, i32) {
    %c0_i32 = arith.constant 0 : i32
    %c0_i32_0 = arith.constant 0 : i32
    %c0_i32_1 = arith.constant 0 : i32
    return %c0_i32, %c0_i32_0 : i32, i32
  }
  func.func @transform_4(%arg0: i32) -> (i32, i32) {
    %c0_i32 = arith.constant 0 : i32
    %c0_i32_0 = arith.constant 0 : i32
    %c0_i32_1 = arith.constant 0 : i32
    return %c0_i32, %c0_i32_0 : i32, i32
  }
  func.func @transform_5(%arg0: i32) -> (i32, i32) {
    %c0_i32 = arith.constant 0 : i32
    %c0_i32_0 = arith.constant 0 : i32
    %c0_i32_1 = arith.constant 0 : i32
    return %c0_i32, %c0_i32_0 : i32, i32
  }
  func.func @transform_6(%arg0: i32) -> (i32, i32) {
    %c0_i32 = arith.constant 0 : i32
    %c0_i32_0 = arith.constant 0 : i32
    return %arg0, %c0_i32 : i32, i32
  }
  func.func @transform_7(%arg0: i32) -> (i32, i32) {
    %c0_i32 = arith.constant 0 : i32
    %c0_i32_0 = arith.constant 0 : i32
    return %arg0, %c0_i32 : i32, i32
  }
  func.func @transform_8(%arg0: i32) -> (i32, i32) {
    %c0_i32 = arith.constant 0 : i32
    %c0_i32_0 = arith.constant 0 : i32
    return %arg0, %c0_i32 : i32, i32
  }
}

</mosaic_0001>

<llo_original>
// kernel: tpu_custom_call.1
$region0: #{tpu_custom_call.1}
  #allocation0 [shape = 'u32[]', space=smem, size = 0x4, offset = 0x4, fixed_abs, tag = 'smem constant byte address 0x4 - core index']
  #allocation1 [shape = 'u32[72,128]{1,0:T(1,128)}', space=vmem, size = 0x9000, scoped, tag = 'internal scratch']
  %s0 = inlined_call_operand.hbm [shape: s8[64,1024], index: 0, kind: input, shape index: {}]
  %s1 = inlined_call_operand.hbm [shape: s8[64,256], index: 1, kind: input, shape index: {}]
  %s2 = inlined_call_operand.hbm [shape: bf16[2304,256], index: 2, kind: input, shape index: {}]
  %s3 = inlined_call_operand.hbm [shape: bf16[768,128], index: 3, kind: input, shape index: {}]
  %s4 = inlined_call_operand.hbm [shape: f32[8,256], index: 4, kind: input, shape index: {}]
  %s5 = inlined_call_operand.hbm [shape: f32[8,128], index: 5, kind: input, shape index: {}]
  %s6 = inlined_call_operand.hbm [shape: bf16[64,128], index: 6, kind: output, shape index: {0}]
  %s7 = inlined_call_operand.hbm [shape: bf16[64,128], index: 7, kind: output, shape index: {1}]
  %s8 = inlined_call_operand.vmem [shape: f32[64,1], index: 8, kind: output, shape index: {2}]
  %9 = xla_tuple %s6, %s7, %s8
  %s10 = sld [smem:[#allocation0]]
  $region97: #{tpu_custom_call.1} parent=0
    _
  %s12 = ssub.s32 1, %s10
  %s13 = scalar_select 0, %s12, %s10
  $region1: #{tpu_custom_call.1} parent=0
    #allocation2 [shape = 'u8[65536]{0}', space=vmem, size = 0x10000, scoped, tag = 'input window, operand 0']
    #allocation3 [shape = 's32[2]{0}', space=sflag, size = 0x8, scoped, tag = 'scoped memory for tpu_custom_call.1']
    #allocation4 [shape = 's32[2]{0}', space=sflag, size = 0x8, scoped, tag = 'scoped memory for tpu_custom_call.1']
    #allocation5 [shape = 'u8[16384]{0}', space=vmem, size = 0x4000, scoped, tag = 'input window, operand 1']
    #allocation6 [shape = 's32[2]{0}', space=sflag, size = 0x8, scoped, tag = 'scoped memory for tpu_custom_call.1']
    #allocation7 [shape = 'u8[1179648]{0}', space=vmem, size = 0x120000, scoped, tag = 'input window, operand 2, single buffered']
    #allocation8 [shape = 'u8[196608]{0}', space=vmem, size = 0x30000, scoped, tag = 'input window, operand 3, single buffered']
    #allocation9 [shape = 's32[1]{0}', space=sflag, size = 0x4, scoped, tag = 'scoped memory for tpu_custom_call.1']
    #allocation10 [shape = 'u8[8192]{0}', space=vmem, size = 0x2000, scoped, tag = 'input window, operand 4, single buffered']
    #allocation11 [shape = 'u8[4096]{0}', space=vmem, size = 0x1000, scoped, tag = 'input window, operand 5, single buffered']
    #allocation12 [shape = 's32[1]{0}', space=sflag, size = 0x4, scoped, tag = 'scoped memory for tpu_custom_call.1']
    #allocation13 [shape = 'u8[16384]{0}', space=vmem, size = 0x4000, scoped, tag = 'output window, operand 0']
    #allocation14 [shape = 'u8[16384]{0}', space=vmem, size = 0x4000, scoped, tag = 'output window, operand 1']
    #allocation15 [shape = 's32[2]{0}', space=sflag, size = 0x8, scoped, tag = 'scoped memory for tpu_custom_call.1']
    %14 = vsyncpa [#allocation3], 0
    %s15 = scalar_lea.sflag [#allocation3], 1
    %16 = vsyncpa %s15, 0
    %17 = vsyncpa [#allocation6], 0
    %s18 = scalar_lea.sflag [#allocation6], 1
    %19 = vsyncpa %s18, 0
    %20 = vsyncpa [#allocation9], 0
    %21 = vsyncpa [#allocation12], 0
    %22 = vsyncpa [#allocation4], 0
    %s23 = scalar_lea.sflag [#allocation4], 1
    %24 = vsyncpa %s23, 0
    %25 = vsyncpa [#allocation15], 0
    %s26 = scalar_lea.sflag [#allocation15], 1
    %27 = vsyncpa %s26, 0
    loop: start=0, step=1, limit=4
    $region2: #{tpu_custom_call.1} parent=1 // loop_pre_header
      _
    $region3: #{tpu_custom_call.1} parent=1 // loop_header
      %s29 = sphi 0, %s33
      %p30 = scmp.ge.s32.totalorder %s29, 4
      %s39 = sphi 0, %s41
      %s42 = sphi 0, %s39
      %s43 = sphi 0, %s42
      %s59 = sphi 0, %s43
      %s65 = sphi 0, %s67
      %s68 = sphi 0, %s65
      %s69 = sphi 0, %s68
      %s85 = sphi 0, %s69
      %s89 = sphi 0, %s89
      %s91 = sphi 0, %s89
      %s92 = sphi 0, %s91
      %s106 = sphi 0, %s92
      %s110 = sphi 0, %s110
      %s112 = sphi 0, %s110
      %s113 = sphi 0, %s112
      %s127 = sphi 0, %s113
      %s131 = sphi 0, %s131
      %s133 = sphi 0, %s131
      %s134 = sphi 0, %s133
      %s148 = sphi 0, %s134
      %s152 = sphi 0, %s152
      %s154 = sphi 0, %s152
      %s155 = sphi 0, %s154
      %s169 = sphi 0, %s155
      %s175 = sphi 0, %s177
      %s178 = sphi 0, %s175
      %s179 = sphi 0, %s178
      %s195 = sphi 0, %s179
      %s201 = sphi 0, %s203
      %s204 = sphi 0, %s201
      %s205 = sphi 0, %s204
      %s221 = sphi 0, %s205
      %s227 = sphi 0, %s229
      %s230 = sphi 0, %s227
      %s231 = sphi 0, %s230
      %s247 = sphi 0, %s231
    $region4: #{tpu_custom_call.1} parent=1 // loop_header_branch
      %32 = sbr.rel (%p30) target = $region8
    $region5: #{tpu_custom_call.1} parent=1 // loop_body
      %s34 = ssub.s32 %s29, 1
      %s35 = ssub.s32 %s29, 2
      %s36 = sadd.s32 %s29, 1
      %s37 = ssub.s32 %s29, %s36
      %p38 = scmp.eq.s32.totalorder %s37, 0
      %s40 = sadd.s32 %s39, 1
      %s41 = scalar_select %p38, %s39, %s40
      %p44 = pneg %p38
      %p45 = scmp.eq.s32.totalorder %s29, 1
      %p46 = por %p44, %p45
      %p47 = scmp.ne.s32.totalorder %s39, %s42
      %p48 = scmp.eq.s32.totalorder %s29, 0
      %p49 = por %p47, %p48
      %p50 = scmp.ne.s32.totalorder %s39, %s42
      %p51 = scmp.eq.s32.totalorder %s34, 1
      %p52 = por %p50, %p51
      %p53 = scmp.ne.s32.totalorder %s42, %s43
      %p54 = scmp.eq.s32.totalorder %s34, 0
      %p55 = por %p53, %p54
      %p56 = scmp.ne.s32.totalorder %s42, %s43
      %p57 = scmp.eq.s32.totalorder %s35, 1
      %p58 = por %p56, %p57
      %p60 = scmp.ne.s32.totalorder %s43, %s59
      %p61 = scmp.eq.s32.totalorder %s35, 0
      %p62 = por %p60, %p61
      %s63 = ssub.s32 %s29, %s36
      %p64 = scmp.eq.s32.totalorder %s63, 0
      %s66 = sadd.s32 %s65, 1
      %s67 = scalar_select %p64, %s65, %s66
      %p70 = pneg %p64
      %p71 = scmp.eq.s32.totalorder %s29, 1
      %p72 = por %p70, %p71
      %p73 = scmp.ne.s32.totalorder %s65, %s68
      %p74 = scmp.eq.s32.totalorder %s29, 0
      %p75 = por %p73, %p74
      %p76 = scmp.ne.s32.totalorder %s65, %s68
      %p77 = scmp.eq.s32.totalorder %s34, 1
      %p78 = por %p76, %p77
      %p79 = scmp.ne.s32.totalorder %s68, %s69
      %p80 = scmp.eq.s32.totalorder %s34, 0
      %p81 = por %p79, %p80
      %p82 = scmp.ne.s32.totalorder %s68, %s69
      %p83 = scmp.eq.s32.totalorder %s35, 1
      %p84 = por %p82, %p83
      %p86 = scmp.ne.s32.totalorder %s69, %s85
      %p87 = scmp.eq.s32.totalorder %s35, 0
      %p88 = por %p86, %p87
      %s90 = sadd.s32 %s89, 1
      %p93 = scmp.eq.s32.totalorder %s29, 1
      %p94 = scmp.ne.s32.totalorder %s89, %s91
      %p95 = scmp.eq.s32.totalorder %s29, 0
      %p96 = por %p94, %p95
      %p97 = scmp.ne.s32.totalorder %s89, %s91
      %p98 = scmp.eq.s32.totalorder %s34, 1
      %p99 = por %p97, %p98
      %p100 = scmp.ne.s32.totalorder %s91, %s92
      %p101 = scmp.eq.s32.totalorder %s34, 0
      %p102 = por %p100, %p101
      %p103 = scmp.ne.s32.totalorder %s91, %s92
      %p104 = scmp.eq.s32.totalorder %s35, 1
      %p105 = por %p103, %p104
      %p107 = scmp.ne.s32.totalorder %s92, %s106
      %p108 = scmp.eq.s32.totalorder %s35, 0
      %p109 = por %p107, %p108
      %s111 = sadd.s32 %s110, 1
      %p114 = scmp.eq.s32.totalorder %s29, 1
      %p115 = scmp.ne.s32.totalorder %s110, %s112
      %p116 = scmp.eq.s32.totalorder %s29, 0
      %p117 = por %p115, %p116
      %p118 = scmp.ne.s32.totalorder %s110, %s112
      %p119 = scmp.eq.s32.totalorder %s34, 1
      %p120 = por %p118, %p119
      %p121 = scmp.ne.s32.totalorder %s112, %s113
      %p122 = scmp.eq.s32.totalorder %s34, 0
      %p123 = por %p121, %p122
      %p124 = scmp.ne.s32.totalorder %s112, %s113
      %p125 = scmp.eq.s32.totalorder %s35, 1
      %p126 = por %p124, %p125
      %p128 = scmp.ne.s32.totalorder %s113, %s127
      %p129 = scmp.eq.s32.totalorder %s35, 0
      %p130 = por %p128, %p129
      %s132 = sadd.s32 %s131, 1
      %p135 = scmp.eq.s32.totalorder %s29, 1
      %p136 = scmp.ne.s32.totalorder %s131, %s133
      %p137 = scmp.eq.s32.totalorder %s29, 0
      %p138 = por %p136, %p137
      %p139 = scmp.ne.s32.totalorder %s131, %s133
      %p140 = scmp.eq.s32.totalorder %s34, 1
      %p141 = por %p139, %p140
      %p142 = scmp.ne.s32.totalorder %s133, %s134
      %p143 = scmp.eq.s32.totalorder %s34, 0
      %p144 = por %p142, %p143
      %p145 = scmp.ne.s32.totalorder %s133, %s134
      %p146 = scmp.eq.s32.totalorder %s35, 1
      %p147 = por %p145, %p146
      %p149 = scmp.ne.s32.totalorder %s134, %s148
      %p150 = scmp.eq.s32.totalorder %s35, 0
      %p151 = por %p149, %p150
      %s153 = sadd.s32 %s152, 1
      %p156 = scmp.eq.s32.totalorder %s29, 1
      %p157 = scmp.ne.s32.totalorder %s152, %s154
      %p158 = scmp.eq.s32.totalorder %s29, 0
      %p159 = por %p157, %p158
      %p160 = scmp.ne.s32.totalorder %s152, %s154
      %p161 = scmp.eq.s32.totalorder %s34, 1
      %p162 = por %p160, %p161
      %p163 = scmp.ne.s32.totalorder %s154, %s155
      %p164 = scmp.eq.s32.totalorder %s34, 0
      %p165 = por %p163, %p164
      %p166 = scmp.ne.s32.totalorder %s154, %s155
      %p167 = scmp.eq.s32.totalorder %s35, 1
      %p168 = por %p166, %p167
      %p170 = scmp.ne.s32.totalorder %s155, %s169
      %p171 = scmp.eq.s32.totalorder %s35, 0
      %p172 = por %p170, %p171
      %s173 = ssub.s32 %s29, %s36
      %p174 = scmp.eq.s32.totalorder %s173, 0
      %s176 = sadd.s32 %s175, 1
      %s177 = scalar_select %p174, %s175, %s176
      %p180 = pneg %p174
      %p181 = scmp.eq.s32.totalorder %s29, 1
      %p182 = por %p180, %p181
      %p183 = scmp.ne.s32.totalorder %s175, %s178
      %p184 = scmp.eq.s32.totalorder %s29, 0
      %p185 = por %p183, %p184
      %p186 = scmp.ne.s32.totalorder %s175, %s178
      %p187 = scmp.eq.s32.totalorder %s34, 1
      %p188 = por %p186, %p187
      %p189 = scmp.ne.s32.totalorder %s178, %s179
      %p190 = scmp.eq.s32.totalorder %s34, 0
      %p191 = por %p189, %p190
      %p192 = scmp.ne.s32.totalorder %s178, %s179
      %p193 = scmp.eq.s32.totalorder %s35, 1
      %p194 = por %p192, %p193
      %p196 = scmp.ne.s32.totalorder %s179, %s195
      %p197 = scmp.eq.s32.totalorder %s35, 0
      %p198 = por %p196, %p197
      %s199 = ssub.s32 %s29, %s36
      %p200 = scmp.eq.s32.totalorder %s199, 0
      %s202 = sadd.s32 %s201, 1
      %s203 = scalar_select %p200, %s201, %s202
      %p206 = pneg %p200
      %p207 = scmp.eq.s32.totalorder %s29, 1
      %p208 = por %p206, %p207
      %p209 = scmp.ne.s32.totalorder %s201, %s204
      %p210 = scmp.eq.s32.totalorder %s29, 0
      %p211 = por %p209, %p210
      %p212 = scmp.ne.s32.totalorder %s201, %s204
      %p213 = scmp.eq.s32.totalorder %s34, 1
      %p214 = por %p212, %p213
      %p215 = scmp.ne.s32.totalorder %s204, %s205
      %p216 = scmp.eq.s32.totalorder %s34, 0
      %p217 = por %p215, %p216
      %p218 = scmp.ne.s32.totalorder %s204, %s205
      %p219 = scmp.eq.s32.totalorder %s35, 1
      %p220 = por %p218, %p219
      %p222 = scmp.ne.s32.totalorder %s205, %s221
      %p223 = scmp.eq.s32.totalorder %s35, 0
      %p224 = por %p222, %p223
      %s225 = ssub.s32 %s29, %s36
      %p226 = scmp.eq.s32.totalorder %s225, 0
      %s228 = sadd.s32 %s227, 1
      %s229 = scalar_select %p226, %s227, %s228
      %p232 = pneg %p226
      %p233 = scmp.eq.s32.totalorder %s29, 1
      %p234 = por %p232, %p233
      %p235 = scmp.ne.s32.totalorder %s227, %s230
      %p236 = scmp.eq.s32.totalorder %s29, 0
      %p237 = por %p235, %p236
      %p238 = scmp.ne.s32.totalorder %s227, %s230
      %p239 = scmp.eq.s32.totalorder %s34, 1
      %p240 = por %p238, %p239
      %p241 = scmp.ne.s32.totalorder %s230, %s231
      %p242 = scmp.eq.s32.totalorder %s34, 0
      %p243 = por %p241, %p242
      %p244 = scmp.ne.s32.totalorder %s230, %s231
      %p245 = scmp.eq.s32.totalorder %s35, 1
      %p246 = por %p244, %p245
      %p248 = scmp.ne.s32.totalorder %s231, %s247
      %p249 = scmp.eq.s32.totalorder %s35, 0
      %p250 = por %p248, %p249
      %p251 = scmp.le.s32.totalorder 1, %s29
      %p252 = scmp.lt.s32.totalorder %s29, 3
      %p253 = pnand %p251, %p252
      %p254 = pneg %p253
      // Predicated region
      $region9: #{tpu_custom_call.1} parent=5 // pred_check
        _
      $region10: #{tpu_custom_call.1} parent=5 // pred_check_branch
        %256 = sbr.rel (%p253) target = $region12
      $region11: #{tpu_custom_call.1} parent=5 // pred_region
        %s257 = ssub.s32 %s29, 1
        // Predicated region
        $region13: #{tpu_custom_call.1} parent=11 // pred_check
          %p258 = pneg %p102
        $region14: #{tpu_custom_call.1} parent=11 // pred_check_branch
          %260 = sbr.rel (%p258) target = $region16
        $region15: #{tpu_custom_call.1} parent=11 // pred_region
          %262 = vsyncadd [#allocation6], 0
          %s263 = sshll.u32 %s2, 4
          %s264 = int_to_ptr.hbm [resolvable:$true] %s263
          %s265 = sshll.u32 [#allocation7], 4
          %s266 = int_to_ptr.vmem [resolvable:$true] %s265
          %271 = dma.hbm_to_vmem [thread:$0]  %s264, 36864, %s266, [#allocation6], 128, 128, 8
        $region16: #{tpu_custom_call.1} parent=11 // pred_fallthru
          _
        // Predicated region
        $region17: #{tpu_custom_call.1} parent=11 // pred_check
          %p272 = pneg %p123
        $region18: #{tpu_custom_call.1} parent=11 // pred_check_branch
          %274 = sbr.rel (%p272) target = $region20
        $region19: #{tpu_custom_call.1} parent=11 // pred_region
          %276 = vsyncadd [#allocation9], 0
          %s277 = sshll.u32 %s3, 4
          %s278 = int_to_ptr.hbm [resolvable:$true] %s277
          %s279 = sshll.u32 [#allocation8], 4
          %s280 = int_to_ptr.vmem [resolvable:$true] %s279
          %285 = dma.hbm_to_vmem [thread:$0]  %s278, 6144, %s280, [#allocation9], 64, 64, 4
        $region20: #{tpu_custom_call.1} parent=11 // pred_fallthru
          _
        // Predicated region
        $region21: #{tpu_custom_call.1} parent=11 // pred_check
          %p286 = pneg %p144
        $region22: #{tpu_custom_call.1} parent=11 // pred_check_branch
          %288 = sbr.rel (%p286) target = $region24
        $region23: #{tpu_custom_call.1} parent=11 // pred_region
          %290 = vsyncadd [#allocation9], 0
          %s292 = sshll.u32 %s4, 4
          %s293 = int_to_ptr.hbm [resolvable:$true] %s292
          %s294 = sshll.u32 [#allocation10], 4
          %s295 = int_to_ptr.vmem [resolvable:$true] %s294
          %297 = dma.hbm_to_vmem [thread:$0]  %s293, 256, %s295, [#allocation9]
        $region24: #{tpu_custom_call.1} parent=11 // pred_fallthru
          _
        // Predicated region
        $region25: #{tpu_custom_call.1} parent=11 // pred_check
          %p298 = pneg %p165
        $region26: #{tpu_custom_call.1} parent=11 // pred_check_branch
          %300 = sbr.rel (%p298) target = $region28
        $region27: #{tpu_custom_call.1} parent=11 // pred_region
          %302 = vsyncadd [#allocation12], 0
          %s304 = sshll.u32 %s5, 4
          %s305 = int_to_ptr.hbm [resolvable:$true] %s304
          %s306 = sshll.u32 [#allocation11], 4
          %s307 = int_to_ptr.vmem [resolvable:$true] %s306
          %309 = dma.hbm_to_vmem [thread:$0]  %s305, 128, %s307, [#allocation12]
        $region28: #{tpu_custom_call.1} parent=11 // pred_fallthru
          _
      $region12: #{tpu_custom_call.1} parent=5 // pred_fallthru
        _
      %p310 = scmp.lt.s32.totalorder %s29, 2
      // Predicated region
      $region29: #{tpu_custom_call.1} parent=5 // pred_check
        %p311 = pneg %p310
      $region30: #{tpu_custom_call.1} parent=5 // pred_check_branch
        %313 = sbr.rel (%p311) target = $region32
      $region31: #{tpu_custom_call.1} parent=5 // pred_region
        // Predicated region
        $region33: #{tpu_custom_call.1} parent=31 // pred_check
          %p314 = pneg %p49
        $region34: #{tpu_custom_call.1} parent=31 // pred_check_branch
          %316 = sbr.rel (%p314) target = $region36
        $region35: #{tpu_custom_call.1} parent=31 // pred_region
          %s317 = sand.u32 %s39, 1
          %s318 = scalar_lea.sflag [#allocation3], %s317
          %s319 = sand.u32 %s39, 1
          %s320 = smul.addr %s319, 64
          %s321 = scalar_lea.vmem [#allocation2], %s320
          %323 = vsyncadd %s318, 0
          %s324 = smul.addr %s29, 8
          %s325 = smul.addr %s324, 8
          %s326 = scalar_lea.hbm %s0, %s325
          %s328 = sshll.u32 %s326, 4
          %s329 = int_to_ptr.hbm [resolvable:$true] %s328
          %s330 = sshll.u32 %s321, 4
          %s331 = int_to_ptr.vmem [resolvable:$true] %s330
          %333 = dma.hbm_to_vmem [thread:$0]  %s329, 1024, %s331, %s318
        $region36: #{tpu_custom_call.1} parent=31 // pred_fallthru
          _
        // Predicated region
        $region37: #{tpu_custom_call.1} parent=31 // pred_check
          %p334 = pneg %p75
        $region38: #{tpu_custom_call.1} parent=31 // pred_check_branch
          %336 = sbr.rel (%p334) target = $region40
        $region39: #{tpu_custom_call.1} parent=31 // pred_region
          %s337 = sand.u32 %s29, 1
          %s338 = scalar_lea.sflag [#allocation6], %s337
          %s339 = sand.u32 %s65, 1
          %s340 = smul.addr %s339, 16
          %s341 = scalar_lea.vmem [#allocation5], %s340
          %343 = vsyncadd %s338, 0
          %s344 = smul.addr %s29, 2
          %s345 = smul.addr %s344, 8
          %s346 = scalar_lea.hbm %s1, %s345
          %s348 = sshll.u32 %s346, 4
          %s349 = int_to_ptr.hbm [resolvable:$true] %s348
          %s350 = sshll.u32 %s341, 4
          %s351 = int_to_ptr.vmem [resolvable:$true] %s350
          %353 = dma.hbm_to_vmem [thread:$0]  %s349, 256, %s351, %s338
        $region40: #{tpu_custom_call.1} parent=31 // pred_fallthru
          _
      $region32: #{tpu_custom_call.1} parent=5 // pred_fallthru
        _
      %p354 = scmp.le.s32.totalorder 1, %s29
      %p355 = scmp.lt.s32.totalorder %s29, 3
      %p356 = pnand %p354, %p355
      %p357 = pneg %p356
      // Predicated region
      $region41: #{tpu_custom_call.1} parent=5 // pred_check
        _
      $region42: #{tpu_custom_call.1} parent=5 // pred_check_branch
        %359 = sbr.rel (%p356) target = $region44
      $region43: #{tpu_custom_call.1} parent=5 // pred_region
        %s360 = ssub.s32 %s29, 1
        %s361 = sand.u32 %s42, 1
        %s362 = scalar_lea.sflag [#allocation3], %s361
        %s363 = sand.u32 %s42, 1
        %s364 = smul.addr %s363, 64
        %s365 = scalar_lea.vmem [#allocation2], %s364
        // Predicated region
        $region45: #{tpu_custom_call.1} parent=43 // pred_check
          %p366 = pneg %p55
        $region46: #{tpu_custom_call.1} parent=43 // pred_check_branch
          %368 = sbr.rel (%p366) target = $region48
        $region47: #{tpu_custom_call.1} parent=43 // pred_region
          %370 = dma.done %s362, 1024
        $region48: #{tpu_custom_call.1} parent=43 // pred_fallthru
          _
        %s371 = sand.u32 %s34, 1
        %s372 = scalar_lea.sflag [#allocation6], %s371
        %s373 = sand.u32 %s68, 1
        %s374 = smul.addr %s373, 16
        %s375 = scalar_lea.vmem [#allocation5], %s374
        // Predicated region
        $region49: #{tpu_custom_call.1} parent=43 // pred_check
          %p376 = pneg %p81
        $region50: #{tpu_custom_call.1} parent=43 // pred_check_branch
          %378 = sbr.rel (%p376) target = $region52
        $region51: #{tpu_custom_call.1} parent=43 // pred_region
          %380 = dma.done %s372, 256
        $region52: #{tpu_custom_call.1} parent=43 // pred_fallthru
          _
        // Predicated region
        $region53: #{tpu_custom_call.1} parent=43 // pred_check
          %p381 = pneg %p102
        $region54: #{tpu_custom_call.1} parent=43 // pred_check_branch
          %383 = sbr.rel (%p381) target = $region56
        $region55: #{tpu_custom_call.1} parent=43 // pred_region
          %385 = dma.done [#allocation6], 36864
        $region56: #{tpu_custom_call.1} parent=43 // pred_fallthru
          _
        // Predicated region
        $region57: #{tpu_custom_call.1} parent=43 // pred_check
          %p386 = pneg %p123
        $region58: #{tpu_custom_call.1} parent=43 // pred_check_branch
          %388 = sbr.rel (%p386) target = $region60
        $region59: #{tpu_custom_call.1} parent=43 // pred_region
          %390 = dma.done [#allocation9], 6144
        $region60: #{tpu_custom_call.1} parent=43 // pred_fallthru
          _
        // Predicated region
        $region61: #{tpu_custom_call.1} parent=43 // pred_check
          %p391 = pneg %p144
        $region62: #{tpu_custom_call.1} parent=43 // pred_check_branch
          %393 = sbr.rel (%p391) target = $region64
        $region63: #{tpu_custom_call.1} parent=43 // pred_region
          %395 = dma.done [#allocation9], 256
        $region64: #{tpu_custom_call.1} parent=43 // pred_fallthru
          _
        // Predicated region
        $region65: #{tpu_custom_call.1} parent=43 // pred_check
          %p396 = pneg %p165
        $region66: #{tpu_custom_call.1} parent=43 // pred_check_branch
          %398 = sbr.rel (%p396) target = $region68
        $region67: #{tpu_custom_call.1} parent=43 // pred_region
          %400 = dma.done [#allocation12], 128
        $region68: #{tpu_custom_call.1} parent=43 // pred_fallthru
          _
        %s401 = sand.u32 %s42, 1
        %s402 = scalar_lea.sflag [#allocation3], %s401
        %s403 = sand.u32 %s42, 1
        %s404 = smul.addr %s403, 64
        %s405 = scalar_lea.vmem [#allocation2], %s404
        %p406 = pneg %p55
        %p407 = pneg %p52
        %s408 = sand.u32 %s34, 1
        %s409 = scalar_lea.sflag [#allocation6], %s408
        %s410 = sand.u32 %s68, 1
        %s411 = smul.addr %s410, 16
        %s412 = scalar_lea.vmem [#allocation5], %s411
        %p413 = pneg %p81
        %p414 = pneg %p78
        %p415 = pneg %p102
        %p416 = pneg %p99
        %p417 = pneg %p123
        %p418 = pneg %p120
        %p419 = pneg %p144
        %p420 = pneg %p141
        %p421 = pneg %p165
        %p422 = pneg %p162
        %p423 = pneg %p191
        %p424 = pneg %p188
        %s425 = sand.u32 %s178, 1
        %s426 = scalar_lea.sflag [#allocation4], %s425
        %s427 = sand.u32 %s178, 1
        %s428 = smul.addr %s427, 16
        %s429 = scalar_lea.vmem [#allocation13], %s428
        %p430 = pneg %p217
        %p431 = pneg %p214
        %s432 = sand.u32 %s204, 1
        %s433 = scalar_lea.sflag [#allocation15], %s432
        %s434 = sand.u32 %s204, 1
        %s435 = smul.addr %s434, 16
        %s436 = scalar_lea.vmem [#allocation14], %s435
        %p437 = pneg %p243
        %p438 = pneg %p240
        %s439 = smul.u32 4, %s34
        %p440 = scmp.lt.s32.totalorder %s439, 7
        %s441 = scalar_select %p440, %s439, 7
        %s442 = smul.addr %s441, 8
        %s443 = scalar_lea.vmem %s8, %s442
        %s444 = smul.u32 4, %s34
        %s445 = smul.u32 4, %s34
        %s446 = smul.u32 4, %s34
        %p447 = scmp.lt.s32.totalorder %s446, 7
        %s448 = scalar_select %p447, %s446, 7
        %s449 = smul.addr %s448, 8
        %s450 = scalar_lea.vmem %s8, %s449
        %s451 = smul.u32 4, %s34
        %v452 = vld [vmem:[%s365] sm:$0xff]
        %v453 = vld [vmem:[%s365 + $0x8] sm:$0xff]
        %v454 = vld [vmem:[%s365 + $0x10] sm:$0xff]
        %v455 = vld [vmem:[%s365 + $0x18] sm:$0xff]
        %v456 = vld [vmem:[%s365 + $0x20] sm:$0xff]
        %v457 = vld [vmem:[%s365 + $0x28] sm:$0xff]
        %v458 = vld [vmem:[%s365 + $0x30] sm:$0xff]
        %v459 = vld [vmem:[%s365 + $0x38] sm:$0xff]
        %v460 = vunpack.c.0.s8 %v452
        %v461 = vunpack.c.0.s8 %v453
        %v462 = vunpack.c.0.s8 %v454
        %v463 = vunpack.c.0.s8 %v455
        %v464 = vunpack.c.0.s8 %v456
        %v465 = vunpack.c.0.s8 %v457
        %v466 = vunpack.c.0.s8 %v458
        %v467 = vunpack.c.0.s8 %v459
        %v468 = vunpack.c.1.s8 %v452
        %v469 = vunpack.c.1.s8 %v453
        %v470 = vunpack.c.1.s8 %v454
        %v471 = vunpack.c.1.s8 %v455
        %v472 = vunpack.c.1.s8 %v456
        %v473 = vunpack.c.1.s8 %v457
        %v474 = vunpack.c.1.s8 %v458
        %v475 = vunpack.c.1.s8 %v459
        %v476 = vunpack.c.2.s8 %v452
        %v477 = vunpack.c.2.s8 %v453
        %v478 = vunpack.c.2.s8 %v454
        %v479 = vunpack.c.2.s8 %v455
        %v480 = vunpack.c.2.s8 %v456
        %v481 = vunpack.c.2.s8 %v457
        %v482 = vunpack.c.2.s8 %v458
        %v483 = vunpack.c.2.s8 %v459
        %v484 = vunpack.c.3.s8 %v452
        %v485 = vunpack.c.3.s8 %v453
        %v486 = vunpack.c.3.s8 %v454
        %v487 = vunpack.c.3.s8 %v455
        %v488 = vunpack.c.3.s8 %v456
        %v489 = vunpack.c.3.s8 %v457
        %v490 = vunpack.c.3.s8 %v458
        %v491 = vunpack.c.3.s8 %v459
        %v492 = vcvt.s32.f32 %v460
        %v493 = vcvt.s32.f32 %v461
        %v494 = vcvt.s32.f32 %v462
        %v495 = vcvt.s32.f32 %v463
        %v496 = vcvt.s32.f32 %v464
        %v497 = vcvt.s32.f32 %v465
        %v498 = vcvt.s32.f32 %v466
        %v499 = vcvt.s32.f32 %v467
        %v500 = vcvt.s32.f32 %v468
        %v501 = vcvt.s32.f32 %v469
        %v502 = vcvt.s32.f32 %v470
        %v503 = vcvt.s32.f32 %v471
        %v504 = vcvt.s32.f32 %v472
        %v505 = vcvt.s32.f32 %v473
        %v506 = vcvt.s32.f32 %v474
        %v507 = vcvt.s32.f32 %v475
        %v508 = vcvt.s32.f32 %v476
        %v509 = vcvt.s32.f32 %v477
        %v510 = vcvt.s32.f32 %v478
        %v511 = vcvt.s32.f32 %v479
        %v512 = vcvt.s32.f32 %v480
        %v513 = vcvt.s32.f32 %v481
        %v514 = vcvt.s32.f32 %v482
        %v515 = vcvt.s32.f32 %v483
        %v516 = vcvt.s32.f32 %v484
        %v517 = vcvt.s32.f32 %v485
        %v518 = vcvt.s32.f32 %v486
        %v519 = vcvt.s32.f32 %v487
        %v520 = vcvt.s32.f32 %v488
        %v521 = vcvt.s32.f32 %v489
        %v522 = vcvt.s32.f32 %v490
        %v523 = vcvt.s32.f32 %v491
        %v524 = vpack.c.bf16 %v500, %v492
        %v525 = vpack.c.bf16 %v501, %v493
        %v526 = vpack.c.bf16 %v502, %v494
        %v527 = vpack.c.bf16 %v503, %v495
        %v528 = vpack.c.bf16 %v504, %v496
        %v529 = vpack.c.bf16 %v505, %v497
        %v530 = vpack.c.bf16 %v506, %v498
        %v531 = vpack.c.bf16 %v507, %v499
        %v532 = vpack.c.bf16 %v516, %v508
        %v533 = vpack.c.bf16 %v517, %v509
        %v534 = vpack.c.bf16 %v518, %v510
        %v535 = vpack.c.bf16 %v519, %v511
        %v536 = vpack.c.bf16 %v520, %v512
        %v537 = vpack.c.bf16 %v521, %v513
        %v538 = vpack.c.bf16 %v522, %v514
        %v539 = vpack.c.bf16 %v523, %v515
        %v540 = vld [vmem:[%s375] sm:$0xff]
        %v541 = vld [vmem:[%s375 + $0x8] sm:$0xff]
        %v542 = vunpack.c.0.s8 %v540
        %v543 = vunpack.c.0.s8 %v541
        %v544 = vunpack.c.1.s8 %v540
        %v545 = vunpack.c.1.s8 %v541
        %v546 = vunpack.c.2.s8 %v540
        %v547 = vunpack.c.2.s8 %v541
        %v548 = vunpack.c.3.s8 %v540
        %v549 = vunpack.c.3.s8 %v541
        %v550 = vcvt.s32.f32 %v542
        %v551 = vcvt.s32.f32 %v543
        %v552 = vcvt.s32.f32 %v544
        %v553 = vcvt.s32.f32 %v545
        %v554 = vcvt.s32.f32 %v546
        %v555 = vcvt.s32.f32 %v547
        %v556 = vcvt.s32.f32 %v548
        %v557 = vcvt.s32.f32 %v549
        %v558 = vpack.c.bf16 %v552, %v550
        %v559 = vpack.c.bf16 %v553, %v551
        %v560 = vpack.c.bf16 %v556, %v554
        %v561 = vpack.c.bf16 %v557, %v555
        %v562 = vld [vmem:[#allocation7] sm:$0xff]
        %v563 = vld [vmem:[#allocation7 + $0x8] sm:$0xff]
        %v564 = vld [vmem:[#allocation7 + $0x10] sm:$0xff]
        %v565 = vld [vmem:[#allocation7 + $0x18] sm:$0xff]
        %v566 = vld [vmem:[#allocation7 + $0x20] sm:$0xff]
        %v567 = vld [vmem:[#allocation7 + $0x28] sm:$0xff]
        %v568 = vld [vmem:[#allocation7 + $0x30] sm:$0xff]
        %v569 = vld [vmem:[#allocation7 + $0x38] sm:$0xff]
        %v570 = vld [vmem:[#allocation7 + $0x40] sm:$0xff]
        %v571 = vld [vmem:[#allocation7 + $0x48] sm:$0xff]
        %v572 = vld [vmem:[#allocation7 + $0x50] sm:$0xff]
        %v573 = vld [vmem:[#allocation7 + $0x58] sm:$0xff]
        %v574 = vld [vmem:[#allocation7 + $0x60] sm:$0xff]
        %v575 = vld [vmem:[#allocation7 + $0x68] sm:$0xff]
        %v576 = vld [vmem:[#allocation7 + $0x70] sm:$0xff]
        %v577 = vld [vmem:[#allocation7 + $0x78] sm:$0xff]
        %v578 = vld [vmem:[#allocation7 + $0x80] sm:$0xff]
        %v579 = vld [vmem:[#allocation7 + $0x88] sm:$0xff]
        %v580 = vld [vmem:[#allocation7 + $0x90] sm:$0xff]
        %v581 = vld [vmem:[#allocation7 + $0x98] sm:$0xff]
        %v582 = vld [vmem:[#allocation7 + $0xa0] sm:$0xff]
        %v583 = vld [vmem:[#allocation7 + $0xa8] sm:$0xff]
        %v584 = vld [vmem:[#allocation7 + $0xb0] sm:$0xff]
        %v585 = vld [vmem:[#allocation7 + $0xb8] sm:$0xff]
        %v586 = vld [vmem:[#allocation7 + $0xc0] sm:$0xff]
        %v587 = vld [vmem:[#allocation7 + $0xc8] sm:$0xff]
        %v588 = vld [vmem:[#allocation7 + $0xd0] sm:$0xff]
        %v589 = vld [vmem:[#allocation7 + $0xd8] sm:$0xff]
        %v590 = vld [vmem:[#allocation7 + $0xe0] sm:$0xff]
        %v591 = vld [vmem:[#allocation7 + $0xe8] sm:$0xff]
        %v592 = vld [vmem:[#allocation7 + $0xf0] sm:$0xff]
        %v593 = vld [vmem:[#allocation7 + $0xf8] sm:$0xff]
        %v594 = vld [vmem:[#allocation7 + $0x100] sm:$0xff]
        %v595 = vld [vmem:[#allocation7 + $0x108] sm:$0xff]
        %v596 = vld [vmem:[#allocation7 + $0x110] sm:$0xff]
        %v597 = vld [vmem:[#allocation7 + $0x118] sm:$0xff]
        %v598 = vld [vmem:[#allocation7 + $0x120] sm:$0xff]
        %v599 = vld [vmem:[#allocation7 + $0x128] sm:$0xff]
        %v600 = vld [vmem:[#allocation7 + $0x130] sm:$0xff]
        %v601 = vld [vmem:[#allocation7 + $0x138] sm:$0xff]
        %v602 = vld [vmem:[#allocation7 + $0x140] sm:$0xff]
        %v603 = vld [vmem:[#allocation7 + $0x148] sm:$0xff]
        %v604 = vld [vmem:[#allocation7 + $0x150] sm:$0xff]
        %v605 = vld [vmem:[#allocation7 + $0x158] sm:$0xff]
        %v606 = vld [vmem:[#allocation7 + $0x160] sm:$0xff]
        %v607 = vld [vmem:[#allocation7 + $0x168] sm:$0xff]
        %v608 = vld [vmem:[#allocation7 + $0x170] sm:$0xff]
        %v609 = vld [vmem:[#allocation7 + $0x178] sm:$0xff]
        %v610 = vld [vmem:[#allocation7 + $0x180] sm:$0xff]
        %v611 = vld [vmem:[#allocation7 + $0x188] sm:$0xff]
        %v612 = vld [vmem:[#allocation7 + $0x190] sm:$0xff]
        %v613 = vld [vmem:[#allocation7 + $0x198] sm:$0xff]
        %v614 = vld [vmem:[#allocation7 + $0x1a0] sm:$0xff]
        %v615 = vld [vmem:[#allocation7 + $0x1a8] sm:$0xff]
        %v616 = vld [vmem:[#allocation7 + $0x1b0] sm:$0xff]
        %v617 = vld [vmem:[#allocation7 + $0x1b8] sm:$0xff]
        %v618 = vld [vmem:[#allocation7 + $0x1c0] sm:$0xff]
        %v619 = vld [vmem:[#allocation7 + $0x1c8] sm:$0xff]
        %v620 = vld [vmem:[#allocation7 + $0x1d0] sm:$0xff]
        %v621 = vld [vmem:[#allocation7 + $0x1d8] sm:$0xff]
        %v622 = vld [vmem:[#allocation7 + $0x1e0] sm:$0xff]
        %v623 = vld [vmem:[#allocation7 + $0x1e8] sm:$0xff]
        %v624 = vld [vmem:[#allocation7 + $0x1f0] sm:$0xff]
        %v625 = vld [vmem:[#allocation7 + $0x1f8] sm:$0xff]
        %v626 = vld [vmem:[#allocation7 + $0x200] sm:$0xff]
        %v627 = vld [vmem:[#allocation7 + $0x208] sm:$0xff]
        %v628 = vld [vmem:[#allocation7 + $0x210] sm:$0xff]
        %v629 = vld [vmem:[#allocation7 + $0x218] sm:$0xff]
        %v630 = vld [vmem:[#allocation7 + $0x220] sm:$0xff]
        %v631 = vld [vmem:[#allocation7 + $0x228] sm:$0xff]
        %v632 = vld [vmem:[#allocation7 + $0x230] sm:$0xff]
        %v633 = vld [vmem:[#allocation7 + $0x238] sm:$0xff]
        %v634 = vld [vmem:[#allocation7 + $0x240] sm:$0xff]
        %v635 = vld [vmem:[#allocation7 + $0x248] sm:$0xff]
        %v636 = vld [vmem:[#allocation7 + $0x250] sm:$0xff]
        %v637 = vld [vmem:[#allocation7 + $0x258] sm:$0xff]
        %v638 = vld [vmem:[#allocation7 + $0x260] sm:$0xff]
        %v639 = vld [vmem:[#allocation7 + $0x268] sm:$0xff]
        %v640 = vld [vmem:[#allocation7 + $0x270] sm:$0xff]
        %v641 = vld [vmem:[#allocation7 + $0x278] sm:$0xff]
        %v642 = vld [vmem:[#allocation7 + $0x280] sm:$0xff]
        %v643 = vld [vmem:[#allocation7 + $0x288] sm:$0xff]
        %v644 = vld [vmem:[#allocation7 + $0x290] sm:$0xff]
        %v645 = vld [vmem:[#allocation7 + $0x298] sm:$0xff]
        %v646 = vld [vmem:[#allocation7 + $0x2a0] sm:$0xff]
        %v647 = vld [vmem:[#allocation7 + $0x2a8] sm:$0xff]
        %v648 = vld [vmem:[#allocation7 + $0x2b0] sm:$0xff]
        %v649 = vld [vmem:[#allocation7 + $0x2b8] sm:$0xff]
        %v650 = vld [vmem:[#allocation7 + $0x2c0] sm:$0xff]
        %v651 = vld [vmem:[#allocation7 + $0x2c8] sm:$0xff]
        %v652 = vld [vmem:[#allocation7 + $0x2d0] sm:$0xff]
        %v653 = vld [vmem:[#allocation7 + $0x2d8] sm:$0xff]
        %v654 = vld [vmem:[#allocation7 + $0x2e0] sm:$0xff]
        %v655 = vld [vmem:[#allocation7 + $0x2e8] sm:$0xff]
        %v656 = vld [vmem:[#allocation7 + $0x2f0] sm:$0xff]
        %v657 = vld [vmem:[#allocation7 + $0x2f8] sm:$0xff]
        %v658 = vld [vmem:[#allocation7 + $0x300] sm:$0xff]
        %v659 = vld [vmem:[#allocation7 + $0x308] sm:$0xff]
        %v660 = vld [vmem:[#allocation7 + $0x310] sm:$0xff]
        %v661 = vld [vmem:[#allocation7 + $0x318] sm:$0xff]
        %v662 = vld [vmem:[#allocation7 + $0x320] sm:$0xff]
        %v663 = vld [vmem:[#allocation7 + $0x328] sm:$0xff]
        %v664 = vld [vmem:[#allocation7 + $0x330] sm:$0xff]
        %v665 = vld [vmem:[#allocation7 + $0x338] sm:$0xff]
        %v666 = vld [vmem:[#allocation7 + $0x340] sm:$0xff]
        %v667 = vld [vmem:[#allocation7 + $0x348] sm:$0xff]
        %v668 = vld [vmem:[#allocation7 + $0x350] sm:$0xff]
        %v669 = vld [vmem:[#allocation7 + $0x358] sm:$0xff]
        %v670 = vld [vmem:[#allocation7 + $0x360] sm:$0xff]
        %v671 = vld [vmem:[#allocation7 + $0x368] sm:$0xff]
        %v672 = vld [vmem:[#allocation7 + $0x370] sm:$0xff]
        %v673 = vld [vmem:[#allocation7 + $0x378] sm:$0xff]
        %v674 = vld [vmem:[#allocation7 + $0x380] sm:$0xff]
        %v675 = vld [vmem:[#allocation7 + $0x388] sm:$0xff]
        %v676 = vld [vmem:[#allocation7 + $0x390] sm:$0xff]
        %v677 = vld [vmem:[#allocation7 + $0x398] sm:$0xff]
        %v678 = vld [vmem:[#allocation7 + $0x3a0] sm:$0xff]
        %v679 = vld [vmem:[#allocation7 + $0x3a8] sm:$0xff]
        %v680 = vld [vmem:[#allocation7 + $0x3b0] sm:$0xff]
        %v681 = vld [vmem:[#allocation7 + $0x3b8] sm:$0xff]
        %v682 = vld [vmem:[#allocation7 + $0x3c0] sm:$0xff]
        %v683 = vld [vmem:[#allocation7 + $0x3c8] sm:$0xff]
        %v684 = vld [vmem:[#allocation7 + $0x3d0] sm:$0xff]
        %v685 = vld [vmem:[#allocation7 + $0x3d8] sm:$0xff]
        %v686 = vld [vmem:[#allocation7 + $0x3e0] sm:$0xff]
        %v687 = vld [vmem:[#allocation7 + $0x3e8] sm:$0xff]
        %v688 = vld [vmem:[#allocation7 + $0x3f0] sm:$0xff]
        %v689 = vld [vmem:[#allocation7 + $0x3f8] sm:$0xff]
        %v690 = vld [vmem:[#allocation10] ss:$8 sm:$0x3]
        %v692 = vperm.slane %v690, 0
        %v693 = vperm.slane %v690, 1
        %v824 = vunpack.c.l.b16 %v562
        %v825 = vunpack.c.h.b16 %v562
        %v826 = vunpack.c.l.b16 %v563
        %v827 = vunpack.c.h.b16 %v563
        %v828 = vunpack.c.l.b16 %v564
        %v829 = vunpack.c.h.b16 %v564
        %v830 = vunpack.c.l.b16 %v565
        %v831 = vunpack.c.h.b16 %v565
        %v832 = vunpack.c.l.b16 %v566
        %v833 = vunpack.c.h.b16 %v566
        %v834 = vunpack.c.l.b16 %v567
        %v835 = vunpack.c.h.b16 %v567
        %v836 = vunpack.c.l.b16 %v568
        %v837 = vunpack.c.h.b16 %v568
        %v838 = vunpack.c.l.b16 %v569
        %v839 = vunpack.c.h.b16 %v569
        %v840 = vunpack.c.l.b16 %v570
        %v841 = vunpack.c.h.b16 %v570
        %v842 = vunpack.c.l.b16 %v571
        %v843 = vunpack.c.h.b16 %v571
        %v844 = vunpack.c.l.b16 %v572
        %v845 = vunpack.c.h.b16 %v572
        %v846 = vunpack.c.l.b16 %v573
        %v847 = vunpack.c.h.b16 %v573
        %v848 = vunpack.c.l.b16 %v574
        %v849 = vunpack.c.h.b16 %v574
        %v850 = vunpack.c.l.b16 %v575
        %v851 = vunpack.c.h.b16 %v575
        %v852 = vunpack.c.l.b16 %v576
        %v853 = vunpack.c.h.b16 %v576
        %v854 = vunpack.c.l.b16 %v577
        %v855 = vunpack.c.h.b16 %v577
        %v856 = vunpack.c.l.b16 %v578
        %v857 = vunpack.c.h.b16 %v578
        %v858 = vunpack.c.l.b16 %v579
        %v859 = vunpack.c.h.b16 %v579
        %v860 = vunpack.c.l.b16 %v580
        %v861 = vunpack.c.h.b16 %v580
        %v862 = vunpack.c.l.b16 %v581
        %v863 = vunpack.c.h.b16 %v581
        %v864 = vunpack.c.l.b16 %v582
        %v865 = vunpack.c.h.b16 %v582
        %v866 = vunpack.c.l.b16 %v583
        %v867 = vunpack.c.h.b16 %v583
        %v868 = vunpack.c.l.b16 %v584
        %v869 = vunpack.c.h.b16 %v584
        %v870 = vunpack.c.l.b16 %v585
        %v871 = vunpack.c.h.b16 %v585
        %v872 = vunpack.c.l.b16 %v586
        %v873 = vunpack.c.h.b16 %v586
        %v874 = vunpack.c.l.b16 %v587
        %v875 = vunpack.c.h.b16 %v587
        %v876 = vunpack.c.l.b16 %v588
        %v877 = vunpack.c.h.b16 %v588
        %v878 = vunpack.c.l.b16 %v589
        %v879 = vunpack.c.h.b16 %v589
        %v880 = vunpack.c.l.b16 %v590
        %v881 = vunpack.c.h.b16 %v590
        %v882 = vunpack.c.l.b16 %v591
        %v883 = vunpack.c.h.b16 %v591
        %v884 = vunpack.c.l.b16 %v592
        %v885 = vunpack.c.h.b16 %v592
        %v886 = vunpack.c.l.b16 %v593
        %v887 = vunpack.c.h.b16 %v593
        %v888 = vunpack.c.l.b16 %v594
        %v889 = vunpack.c.h.b16 %v594
        %v890 = vunpack.c.l.b16 %v595
        %v891 = vunpack.c.h.b16 %v595
        %v892 = vunpack.c.l.b16 %v596
        %v893 = vunpack.c.h.b16 %v596
        %v894 = vunpack.c.l.b16 %v597
        %v895 = vunpack.c.h.b16 %v597
        %v896 = vunpack.c.l.b16 %v598
        %v897 = vunpack.c.h.b16 %v598
        %v898 = vunpack.c.l.b16 %v599
        %v899 = vunpack.c.h.b16 %v599
        %v900 = vunpack.c.l.b16 %v600
        %v901 = vunpack.c.h.b16 %v600
        %v902 = vunpack.c.l.b16 %v601
        %v903 = vunpack.c.h.b16 %v601
        %v904 = vunpack.c.l.b16 %v602
        %v905 = vunpack.c.h.b16 %v602
        %v906 = vunpack.c.l.b16 %v603
        %v907 = vunpack.c.h.b16 %v603
        %v908 = vunpack.c.l.b16 %v604
        %v909 = vunpack.c.h.b16 %v604
        %v910 = vunpack.c.l.b16 %v605
        %v911 = vunpack.c.h.b16 %v605
        %v912 = vunpack.c.l.b16 %v606
        %v913 = vunpack.c.h.b16 %v606
        %v914 = vunpack.c.l.b16 %v607
        %v915 = vunpack.c.h.b16 %v607
        %v916 = vunpack.c.l.b16 %v608
        %v917 = vunpack.c.h.b16 %v608
        %v918 = vunpack.c.l.b16 %v609
        %v919 = vunpack.c.h.b16 %v609
        %v920 = vunpack.c.l.b16 %v610
        %v921 = vunpack.c.h.b16 %v610
        %v922 = vunpack.c.l.b16 %v611
        %v923 = vunpack.c.h.b16 %v611
        %v924 = vunpack.c.l.b16 %v612
        %v925 = vunpack.c.h.b16 %v612
        %v926 = vunpack.c.l.b16 %v613
        %v927 = vunpack.c.h.b16 %v613
        %v928 = vunpack.c.l.b16 %v614
        %v929 = vunpack.c.h.b16 %v614
        %v930 = vunpack.c.l.b16 %v615
        %v931 = vunpack.c.h.b16 %v615
        %v932 = vunpack.c.l.b16 %v616
        %v933 = vunpack.c.h.b16 %v616
        %v934 = vunpack.c.l.b16 %v617
        %v935 = vunpack.c.h.b16 %v617
        %v936 = vunpack.c.l.b16 %v618
        %v937 = vunpack.c.h.b16 %v618
        %v938 = vunpack.c.l.b16 %v619
        %v939 = vunpack.c.h.b16 %v619
        %v940 = vunpack.c.l.b16 %v620
        %v941 = vunpack.c.h.b16 %v620
        %v942 = vunpack.c.l.b16 %v621
        %v943 = vunpack.c.h.b16 %v621
        %v944 = vunpack.c.l.b16 %v622
        %v945 = vunpack.c.h.b16 %v622
        %v946 = vunpack.c.l.b16 %v623
        %v947 = vunpack.c.h.b16 %v623
        %v948 = vunpack.c.l.b16 %v624
        %v949 = vunpack.c.h.b16 %v624
        %v950 = vunpack.c.l.b16 %v625
        %v951 = vunpack.c.h.b16 %v625
        %v952 = vunpack.c.l.b16 %v626
        %v953 = vunpack.c.h.b16 %v626
        %v954 = vunpack.c.l.b16 %v627
        %v955 = vunpack.c.h.b16 %v627
        %v956 = vunpack.c.l.b16 %v628
        %v957 = vunpack.c.h.b16 %v628
        %v958 = vunpack.c.l.b16 %v629
        %v959 = vunpack.c.h.b16 %v629
        %v960 = vunpack.c.l.b16 %v630
        %v961 = vunpack.c.h.b16 %v630
        %v962 = vunpack.c.l.b16 %v631
        %v963 = vunpack.c.h.b16 %v631
        %v964 = vunpack.c.l.b16 %v632
        %v965 = vunpack.c.h.b16 %v632
        %v966 = vunpack.c.l.b16 %v633
        %v967 = vunpack.c.h.b16 %v633
        %v968 = vunpack.c.l.b16 %v634
        %v969 = vunpack.c.h.b16 %v634
        %v970 = vunpack.c.l.b16 %v635
        %v971 = vunpack.c.h.b16 %v635
        %v972 = vunpack.c.l.b16 %v636
        %v973 = vunpack.c.h.b16 %v636
        %v974 = vunpack.c.l.b16 %v637
        %v975 = vunpack.c.h.b16 %v637
        %v976 = vunpack.c.l.b16 %v638
        %v977 = vunpack.c.h.b16 %v638
        %v978 = vunpack.c.l.b16 %v639
        %v979 = vunpack.c.h.b16 %v639
        %v980 = vunpack.c.l.b16 %v640
        %v981 = vunpack.c.h.b16 %v640
        %v982 = vunpack.c.l.b16 %v641
        %v983 = vunpack.c.h.b16 %v641
        %v984 = vunpack.c.l.b16 %v642
        %v985 = vunpack.c.h.b16 %v642
        %v986 = vunpack.c.l.b16 %v643
        %v987 = vunpack.c.h.b16 %v643
        %v988 = vunpack.c.l.b16 %v644
        %v989 = vunpack.c.h.b16 %v644
        %v990 = vunpack.c.l.b16 %v645
        %v991 = vunpack.c.h.b16 %v645
        %v992 = vunpack.c.l.b16 %v646
        %v993 = vunpack.c.h.b16 %v646
        %v994 = vunpack.c.l.b16 %v647
        %v995 = vunpack.c.h.b16 %v647
        %v996 = vunpack.c.l.b16 %v648
        %v997 = vunpack.c.h.b16 %v648
        %v998 = vunpack.c.l.b16 %v649
        %v999 = vunpack.c.h.b16 %v649
        %v1000 = vunpack.c.l.b16 %v650
        %v1001 = vunpack.c.h.b16 %v650
        %v1002 = vunpack.c.l.b16 %v651
        %v1003 = vunpack.c.h.b16 %v651
        %v1004 = vunpack.c.l.b16 %v652
        %v1005 = vunpack.c.h.b16 %v652
        %v1006 = vunpack.c.l.b16 %v653
        %v1007 = vunpack.c.h.b16 %v653
        %v1008 = vunpack.c.l.b16 %v654
        %v1009 = vunpack.c.h.b16 %v654
        %v1010 = vunpack.c.l.b16 %v655
        %v1011 = vunpack.c.h.b16 %v655
        %v1012 = vunpack.c.l.b16 %v656
        %v1013 = vunpack.c.h.b16 %v656
        %v1014 = vunpack.c.l.b16 %v657
        %v1015 = vunpack.c.h.b16 %v657
        %v1016 = vunpack.c.l.b16 %v658
        %v1017 = vunpack.c.h.b16 %v658
        %v1018 = vunpack.c.l.b16 %v659
        %v1019 = vunpack.c.h.b16 %v659
        %v1020 = vunpack.c.l.b16 %v660
        %v1021 = vunpack.c.h.b16 %v660
        %v1022 = vunpack.c.l.b16 %v661
        %v1023 = vunpack.c.h.b16 %v661
        %v1024 = vunpack.c.l.b16 %v662
        %v1025 = vunpack.c.h.b16 %v662
        %v1026 = vunpack.c.l.b16 %v663
        %v1027 = vunpack.c.h.b16 %v663
        %v1028 = vunpack.c.l.b16 %v664
        %v1029 = vunpack.c.h.b16 %v664
        %v1030 = vunpack.c.l.b16 %v665
        %v1031 = vunpack.c.h.b16 %v665
        %v1032 = vunpack.c.l.b16 %v666
        %v1033 = vunpack.c.h.b16 %v666
        %v1034 = vunpack.c.l.b16 %v667
        %v1035 = vunpack.c.h.b16 %v667
        %v1036 = vunpack.c.l.b16 %v668
        %v1037 = vunpack.c.h.b16 %v668
        %v1038 = vunpack.c.l.b16 %v669
        %v1039 = vunpack.c.h.b16 %v669
        %v1040 = vunpack.c.l.b16 %v670
        %v1041 = vunpack.c.h.b16 %v670
        %v1042 = vunpack.c.l.b16 %v671
        %v1043 = vunpack.c.h.b16 %v671
        %v1044 = vunpack.c.l.b16 %v672
        %v1045 = vunpack.c.h.b16 %v672
        %v1046 = vunpack.c.l.b16 %v673
        %v1047 = vunpack.c.h.b16 %v673
        %v1048 = vunpack.c.l.b16 %v674
        %v1049 = vunpack.c.h.b16 %v674
        %v1050 = vunpack.c.l.b16 %v675
        %v1051 = vunpack.c.h.b16 %v675
        %v1052 = vunpack.c.l.b16 %v676
        %v1053 = vunpack.c.h.b16 %v676
        %v1054 = vunpack.c.l.b16 %v677
        %v1055 = vunpack.c.h.b16 %v677
        %v1056 = vunpack.c.l.b16 %v678
        %v1057 = vunpack.c.h.b16 %v678
        %v1058 = vunpack.c.l.b16 %v679
        %v1059 = vunpack.c.h.b16 %v679
        %v1060 = vunpack.c.l.b16 %v680
        %v1061 = vunpack.c.h.b16 %v680
        %v1062 = vunpack.c.l.b16 %v681
        %v1063 = vunpack.c.h.b16 %v681
        %v1064 = vunpack.c.l.b16 %v682
        %v1065 = vunpack.c.h.b16 %v682
        %v1066 = vunpack.c.l.b16 %v683
        %v1067 = vunpack.c.h.b16 %v683
        %v1068 = vunpack.c.l.b16 %v684
        %v1069 = vunpack.c.h.b16 %v684
        %v1070 = vunpack.c.l.b16 %v685
        %v1071 = vunpack.c.h.b16 %v685
        %v1072 = vunpack.c.l.b16 %v686
        %v1073 = vunpack.c.h.b16 %v686
        %v1074 = vunpack.c.l.b16 %v687
        %v1075 = vunpack.c.h.b16 %v687
        %v1076 = vunpack.c.l.b16 %v688
        %v1077 = vunpack.c.h.b16 %v688
        %v1078 = vunpack.c.l.b16 %v689
        %v1079 = vunpack.c.h.b16 %v689
        %v1080 = vpack.c.b16 %v826, %v824
        %v1081 = vpack.c.b16 %v827, %v825
        %v1082 = vpack.c.b16 %v830, %v828
        %v1083 = vpack.c.b16 %v831, %v829
        %v1084 = vpack.c.b16 %v834, %v832
        %v1085 = vpack.c.b16 %v835, %v833
        %v1086 = vpack.c.b16 %v838, %v836
        %v1087 = vpack.c.b16 %v839, %v837
        %v1088 = vpack.c.b16 %v842, %v840
        %v1089 = vpack.c.b16 %v843, %v841
        %v1090 = vpack.c.b16 %v846, %v844
        %v1091 = vpack.c.b16 %v847, %v845
        %v1092 = vpack.c.b16 %v850, %v848
        %v1093 = vpack.c.b16 %v851, %v849
        %v1094 = vpack.c.b16 %v854, %v852
        %v1095 = vpack.c.b16 %v855, %v853
        %v1096 = vpack.c.b16 %v858, %v856
        %v1097 = vpack.c.b16 %v859, %v857
        %v1098 = vpack.c.b16 %v862, %v860
        %v1099 = vpack.c.b16 %v863, %v861
        %v1100 = vpack.c.b16 %v866, %v864
        %v1101 = vpack.c.b16 %v867, %v865
        %v1102 = vpack.c.b16 %v870, %v868
        %v1103 = vpack.c.b16 %v871, %v869
        %v1104 = vpack.c.b16 %v874, %v872
        %v1105 = vpack.c.b16 %v875, %v873
        %v1106 = vpack.c.b16 %v878, %v876
        %v1107 = vpack.c.b16 %v879, %v877
        %v1108 = vpack.c.b16 %v882, %v880
        %v1109 = vpack.c.b16 %v883, %v881
        %v1110 = vpack.c.b16 %v886, %v884
        %v1111 = vpack.c.b16 %v887, %v885
        %v1112 = vpack.c.b16 %v890, %v888
        %v1113 = vpack.c.b16 %v891, %v889
        %v1114 = vpack.c.b16 %v894, %v892
        %v1115 = vpack.c.b16 %v895, %v893
        %v1116 = vpack.c.b16 %v898, %v896
        %v1117 = vpack.c.b16 %v899, %v897
        %v1118 = vpack.c.b16 %v902, %v900
        %v1119 = vpack.c.b16 %v903, %v901
        %v1120 = vpack.c.b16 %v906, %v904
        %v1121 = vpack.c.b16 %v907, %v905
        %v1122 = vpack.c.b16 %v910, %v908
        %v1123 = vpack.c.b16 %v911, %v909
        %v1124 = vpack.c.b16 %v914, %v912
        %v1125 = vpack.c.b16 %v915, %v913
        %v1126 = vpack.c.b16 %v918, %v916
        %v1127 = vpack.c.b16 %v919, %v917
        %v1128 = vpack.c.b16 %v922, %v920
        %v1129 = vpack.c.b16 %v923, %v921
        %v1130 = vpack.c.b16 %v926, %v924
        %v1131 = vpack.c.b16 %v927, %v925
        %v1132 = vpack.c.b16 %v930, %v928
        %v1133 = vpack.c.b16 %v931, %v929
        %v1134 = vpack.c.b16 %v934, %v932
        %v1135 = vpack.c.b16 %v935, %v933
        %v1136 = vpack.c.b16 %v938, %v936
        %v1137 = vpack.c.b16 %v939, %v937
        %v1138 = vpack.c.b16 %v942, %v940
        %v1139 = vpack.c.b16 %v943, %v941
        %v1140 = vpack.c.b16 %v946, %v944
        %v1141 = vpack.c.b16 %v947, %v945
        %v1142 = vpack.c.b16 %v950, %v948
        %v1143 = vpack.c.b16 %v951, %v949
        %v1144 = vpack.c.b16 %v954, %v952
        %v1145 = vpack.c.b16 %v955, %v953
        %v1146 = vpack.c.b16 %v958, %v956
        %v1147 = vpack.c.b16 %v959, %v957
        %v1148 = vpack.c.b16 %v962, %v960
        %v1149 = vpack.c.b16 %v963, %v961
        %v1150 = vpack.c.b16 %v966, %v964
        %v1151 = vpack.c.b16 %v967, %v965
        %v1152 = vpack.c.b16 %v970, %v968
        %v1153 = vpack.c.b16 %v971, %v969
        %v1154 = vpack.c.b16 %v974, %v972
        %v1155 = vpack.c.b16 %v975, %v973
        %v1156 = vpack.c.b16 %v978, %v976
        %v1157 = vpack.c.b16 %v979, %v977
        %v1158 = vpack.c.b16 %v982, %v980
        %v1159 = vpack.c.b16 %v983, %v981
        %v1160 = vpack.c.b16 %v986, %v984
        %v1161 = vpack.c.b16 %v987, %v985
        %v1162 = vpack.c.b16 %v990, %v988
        %v1163 = vpack.c.b16 %v991, %v989
        %v1164 = vpack.c.b16 %v994, %v992
        %v1165 = vpack.c.b16 %v995, %v993
        %v1166 = vpack.c.b16 %v998, %v996
        %v1167 = vpack.c.b16 %v999, %v997
        %v1168 = vpack.c.b16 %v1002, %v1000
        %v1169 = vpack.c.b16 %v1003, %v1001
        %v1170 = vpack.c.b16 %v1006, %v1004
        %v1171 = vpack.c.b16 %v1007, %v1005
        %v1172 = vpack.c.b16 %v1010, %v1008
        %v1173 = vpack.c.b16 %v1011, %v1009
        %v1174 = vpack.c.b16 %v1014, %v1012
        %v1175 = vpack.c.b16 %v1015, %v1013
        %v1176 = vpack.c.b16 %v1018, %v1016
        %v1177 = vpack.c.b16 %v1019, %v1017
        %v1178 = vpack.c.b16 %v1022, %v1020
        %v1179 = vpack.c.b16 %v1023, %v1021
        %v1180 = vpack.c.b16 %v1026, %v1024
        %v1181 = vpack.c.b16 %v1027, %v1025
        %v1182 = vpack.c.b16 %v1030, %v1028
        %v1183 = vpack.c.b16 %v1031, %v1029
        %v1184 = vpack.c.b16 %v1034, %v1032
        %v1185 = vpack.c.b16 %v1035, %v1033
        %v1186 = vpack.c.b16 %v1038, %v1036
        %v1187 = vpack.c.b16 %v1039, %v1037
        %v1188 = vpack.c.b16 %v1042, %v1040
        %v1189 = vpack.c.b16 %v1043, %v1041
        %v1190 = vpack.c.b16 %v1046, %v1044
        %v1191 = vpack.c.b16 %v1047, %v1045
        %v1192 = vpack.c.b16 %v1050, %v1048
        %v1193 = vpack.c.b16 %v1051, %v1049
        %v1194 = vpack.c.b16 %v1054, %v1052
        %v1195 = vpack.c.b16 %v1055, %v1053
        %v1196 = vpack.c.b16 %v1058, %v1056
        %v1197 = vpack.c.b16 %v1059, %v1057
        %v1198 = vpack.c.b16 %v1062, %v1060
        %v1199 = vpack.c.b16 %v1063, %v1061
        %v1200 = vpack.c.b16 %v1066, %v1064
        %v1201 = vpack.c.b16 %v1067, %v1065
        %v1202 = vpack.c.b16 %v1070, %v1068
        %v1203 = vpack.c.b16 %v1071, %v1069
        %v1204 = vpack.c.b16 %v1074, %v1072
        %v1205 = vpack.c.b16 %v1075, %v1073
        %v1206 = vpack.c.b16 %v1078, %v1076
        %v1207 = vpack.c.b16 %v1079, %v1077
        %1336 = vmatpush.bf16.msra.mxu0 %v1094
        %1337 = vmatpush.bf16.msra.mxu0 %v1092
        %1338 = vmatpush.bf16.msra.mxu0 %v1090
        %1339 = vmatpush.bf16.msra.mxu0 %v1088
        %1340 = vmatpush.bf16.msra.mxu0 %v1086
        %1341 = vmatpush.bf16.msra.mxu0 %v1084
        %1342 = vmatpush.bf16.msra.mxu0 %v1082
        %1343 = vmatpush.bf16.msra.mxu0 %v1080
        %1344 = vmatmul.bf16.gmra.mxu0 %v524
        %v1345 = vpop.f32.mrf.mxu0
        %v1346 = vadd.f32 %v692, %v1345
        %v1347 = vpop.f32.mrf.mxu0
        %v1348 = vadd.f32 %v692, %v1347
        %1349 = vmatmul.bf16.gmra.mxu0 %v532
        %v1350 = vpop.f32.mrf.mxu0
        %v1351 = vadd.f32 %v692, %v1350
        %v1352 = vpop.f32.mrf.mxu0
        %v1353 = vadd.f32 %v692, %v1352
        %1354 = vdwg.mxu0
        %1355 = vmatpush.bf16.msra.mxu0 %v1110
        %1356 = vmatpush.bf16.msra.mxu0 %v1108
        %1357 = vmatpush.bf16.msra.mxu0 %v1106
        %1358 = vmatpush.bf16.msra.mxu0 %v1104
        %1359 = vmatpush.bf16.msra.mxu0 %v1102
        %1360 = vmatpush.bf16.msra.mxu0 %v1100
        %1361 = vmatpush.bf16.msra.mxu0 %v1098
        %1362 = vmatpush.bf16.msra.mxu0 %v1096
        %1363 = vmatmul.bf16.gmra.mxu0 %v525
        %v1364 = vpop.f32.mrf.mxu0
        %v1365 = vadd.f32 %v1346, %v1364
        %v1366 = vpop.f32.mrf.mxu0
        %v1367 = vadd.f32 %v1348, %v1366
        %1368 = vmatmul.bf16.gmra.mxu0 %v533
        %v1369 = vpop.f32.mrf.mxu0
        %v1370 = vadd.f32 %v1351, %v1369
        %v1371 = vpop.f32.mrf.mxu0
        %v1372 = vadd.f32 %v1353, %v1371
        %1373 = vdwg.mxu0
        %1374 = vmatpush.bf16.msra.mxu0 %v1126
        %1375 = vmatpush.bf16.msra.mxu0 %v1124
        %1376 = vmatpush.bf16.msra.mxu0 %v1122
        %1377 = vmatpush.bf16.msra.mxu0 %v1120
        %1378 = vmatpush.bf16.msra.mxu0 %v1118
        %1379 = vmatpush.bf16.msra.mxu0 %v1116
        %1380 = vmatpush.bf16.msra.mxu0 %v1114
        %1381 = vmatpush.bf16.msra.mxu0 %v1112
        %1382 = vmatmul.bf16.gmra.mxu0 %v526
        %v1383 = vpop.f32.mrf.mxu0
        %v1384 = vadd.f32 %v1365, %v1383
        %v1385 = vpop.f32.mrf.mxu0
        %v1386 = vadd.f32 %v1367, %v1385
        %1387 = vmatmul.bf16.gmra.mxu0 %v534
        %v1388 = vpop.f32.mrf.mxu0
        %v1389 = vadd.f32 %v1370, %v1388
        %v1390 = vpop.f32.mrf.mxu0
        %v1391 = vadd.f32 %v1372, %v1390
        %1392 = vdwg.mxu0
        %1393 = vmatpush.bf16.msra.mxu0 %v1142
        %1394 = vmatpush.bf16.msra.mxu0 %v1140
        %1395 = vmatpush.bf16.msra.mxu0 %v1138
        %1396 = vmatpush.bf16.msra.mxu0 %v1136
        %1397 = vmatpush.bf16.msra.mxu0 %v1134
        %1398 = vmatpush.bf16.msra.mxu0 %v1132
        %1399 = vmatpush.bf16.msra.mxu0 %v1130
        %1400 = vmatpush.bf16.msra.mxu0 %v1128
        %1401 = vmatmul.bf16.gmra.mxu0 %v527
        %v1402 = vpop.f32.mrf.mxu0
        %v1403 = vadd.f32 %v1384, %v1402
        %v1404 = vpop.f32.mrf.mxu0
        %v1405 = vadd.f32 %v1386, %v1404
        %1406 = vmatmul.bf16.gmra.mxu0 %v535
        %v1407 = vpop.f32.mrf.mxu0
        %v1408 = vadd.f32 %v1389, %v1407
        %v1409 = vpop.f32.mrf.mxu0
        %v1410 = vadd.f32 %v1391, %v1409
        %1411 = vdwg.mxu0
        %1412 = vmatpush.bf16.msra.mxu0 %v1158
        %1413 = vmatpush.bf16.msra.mxu0 %v1156
        %1414 = vmatpush.bf16.msra.mxu0 %v1154
        %1415 = vmatpush.bf16.msra.mxu0 %v1152
        %1416 = vmatpush.bf16.msra.mxu0 %v1150
        %1417 = vmatpush.bf16.msra.mxu0 %v1148
        %1418 = vmatpush.bf16.msra.mxu0 %v1146
        %1419 = vmatpush.bf16.msra.mxu0 %v1144
        %1420 = vmatmul.bf16.gmra.mxu0 %v528
        %v1421 = vpop.f32.mrf.mxu0
        %v1422 = vadd.f32 %v1403, %v1421
        %v1423 = vpop.f32.mrf.mxu0
        %v1424 = vadd.f32 %v1405, %v1423
        %1425 = vmatmul.bf16.gmra.mxu0 %v536
        %v1426 = vpop.f32.mrf.mxu0
        %v1427 = vadd.f32 %v1408, %v1426
        %v1428 = vpop.f32.mrf.mxu0
        %v1429 = vadd.f32 %v1410, %v1428
        %1430 = vdwg.mxu0
        %1431 = vmatpush.bf16.msra.mxu0 %v1174
        %1432 = vmatpush.bf16.msra.mxu0 %v1172
        %1433 = vmatpush.bf16.msra.mxu0 %v1170
        %1434 = vmatpush.bf16.msra.mxu0 %v1168
        %1435 = vmatpush.bf16.msra.mxu0 %v1166
        %1436 = vmatpush.bf16.msra.mxu0 %v1164
        %1437 = vmatpush.bf16.msra.mxu0 %v1162
        %1438 = vmatpush.bf16.msra.mxu0 %v1160
        %1439 = vmatmul.bf16.gmra.mxu0 %v529
        %v1440 = vpop.f32.mrf.mxu0
        %v1441 = vadd.f32 %v1422, %v1440
        %v1442 = vpop.f32.mrf.mxu0
        %v1443 = vadd.f32 %v1424, %v1442
        %1444 = vmatmul.bf16.gmra.mxu0 %v537
        %v1445 = vpop.f32.mrf.mxu0
        %v1446 = vadd.f32 %v1427, %v1445
        %v1447 = vpop.f32.mrf.mxu0
        %v1448 = vadd.f32 %v1429, %v1447
        %1449 = vdwg.mxu0
        %1450 = vmatpush.bf16.msra.mxu0 %v1190
        %1451 = vmatpush.bf16.msra.mxu0 %v1188
        %1452 = vmatpush.bf16.msra.mxu0 %v1186
        %1453 = vmatpush.bf16.msra.mxu0 %v1184
        %1454 = vmatpush.bf16.msra.mxu0 %v1182
        %1455 = vmatpush.bf16.msra.mxu0 %v1180
        %1456 = vmatpush.bf16.msra.mxu0 %v1178
        %1457 = vmatpush.bf16.msra.mxu0 %v1176
        %1458 = vmatmul.bf16.gmra.mxu0 %v530
        %v1459 = vpop.f32.mrf.mxu0
        %v1460 = vadd.f32 %v1441, %v1459
        %v1461 = vpop.f32.mrf.mxu0
        %v1462 = vadd.f32 %v1443, %v1461
        %1463 = vmatmul.bf16.gmra.mxu0 %v538
        %v1464 = vpop.f32.mrf.mxu0
        %v1465 = vadd.f32 %v1446, %v1464
        %v1466 = vpop.f32.mrf.mxu0
        %v1467 = vadd.f32 %v1448, %v1466
        %1468 = vdwg.mxu0
        %1469 = vmatpush.bf16.msra.mxu0 %v1206
        %1470 = vmatpush.bf16.msra.mxu0 %v1204
        %1471 = vmatpush.bf16.msra.mxu0 %v1202
        %1472 = vmatpush.bf16.msra.mxu0 %v1200
        %1473 = vmatpush.bf16.msra.mxu0 %v1198
        %1474 = vmatpush.bf16.msra.mxu0 %v1196
        %1475 = vmatpush.bf16.msra.mxu0 %v1194
        %1476 = vmatpush.bf16.msra.mxu0 %v1192
        %1477 = vmatmul.bf16.gmra.mxu0 %v531
        %v1478 = vpop.f32.mrf.mxu0
        %v1479 = vadd.f32 %v1460, %v1478
        %v1480 = vpop.f32.mrf.mxu0
        %v1481 = vadd.f32 %v1462, %v1480
        %1482 = vmatmul.bf16.gmra.mxu0 %v539
        %v1483 = vpop.f32.mrf.mxu0
        %v1484 = vadd.f32 %v1465, %v1483
        %v1485 = vpop.f32.mrf.mxu0
        %v1486 = vadd.f32 %v1467, %v1485
        %1487 = vdwg.mxu0
        %1488 = vmatpush.bf16.msra.mxu0 %v1095
        %1489 = vmatpush.bf16.msra.mxu0 %v1093
        %1490 = vmatpush.bf16.msra.mxu0 %v1091
        %1491 = vmatpush.bf16.msra.mxu0 %v1089
        %1492 = vmatpush.bf16.msra.mxu0 %v1087
        %1493 = vmatpush.bf16.msra.mxu0 %v1085
        %1494 = vmatpush.bf16.msra.mxu0 %v1083
        %1495 = vmatpush.bf16.msra.mxu0 %v1081
        %1496 = vmatmul.bf16.gmra.mxu0 %v524
        %v1497 = vpop.f32.mrf.mxu0
        %v1498 = vadd.f32 %v693, %v1497
        %v1499 = vpop.f32.mrf.mxu0
        %v1500 = vadd.f32 %v693, %v1499
        %1501 = vmatmul.bf16.gmra.mxu0 %v532
        %v1502 = vpop.f32.mrf.mxu0
        %v1503 = vadd.f32 %v693, %v1502
        %v1504 = vpop.f32.mrf.mxu0
        %v1505 = vadd.f32 %v693, %v1504
        %1506 = vdwg.mxu0
        %1507 = vmatpush.bf16.msra.mxu0 %v1111
        %1508 = vmatpush.bf16.msra.mxu0 %v1109
        %1509 = vmatpush.bf16.msra.mxu0 %v1107
        %1510 = vmatpush.bf16.msra.mxu0 %v1105
        %1511 = vmatpush.bf16.msra.mxu0 %v1103
        %1512 = vmatpush.bf16.msra.mxu0 %v1101
        %1513 = vmatpush.bf16.msra.mxu0 %v1099
        %1514 = vmatpush.bf16.msra.mxu0 %v1097
        %1515 = vmatmul.bf16.gmra.mxu0 %v525
        %v1516 = vpop.f32.mrf.mxu0
        %v1517 = vadd.f32 %v1498, %v1516
        %v1518 = vpop.f32.mrf.mxu0
        %v1519 = vadd.f32 %v1500, %v1518
        %1520 = vmatmul.bf16.gmra.mxu0 %v533
        %v1521 = vpop.f32.mrf.mxu0
        %v1522 = vadd.f32 %v1503, %v1521
        %v1523 = vpop.f32.mrf.mxu0
        %v1524 = vadd.f32 %v1505, %v1523
        %1525 = vdwg.mxu0
        %1526 = vmatpush.bf16.msra.mxu0 %v1127
        %1527 = vmatpush.bf16.msra.mxu0 %v1125
        %1528 = vmatpush.bf16.msra.mxu0 %v1123
        %1529 = vmatpush.bf16.msra.mxu0 %v1121
        %1530 = vmatpush.bf16.msra.mxu0 %v1119
        %1531 = vmatpush.bf16.msra.mxu0 %v1117
        %1532 = vmatpush.bf16.msra.mxu0 %v1115
        %1533 = vmatpush.bf16.msra.mxu0 %v1113
        %1534 = vmatmul.bf16.gmra.mxu0 %v526
        %v1535 = vpop.f32.mrf.mxu0
        %v1536 = vadd.f32 %v1517, %v1535
        %v1537 = vpop.f32.mrf.mxu0
        %v1538 = vadd.f32 %v1519, %v1537
        %1539 = vmatmul.bf16.gmra.mxu0 %v534
        %v1540 = vpop.f32.mrf.mxu0
        %v1541 = vadd.f32 %v1522, %v1540
        %v1542 = vpop.f32.mrf.mxu0
        %v1543 = vadd.f32 %v1524, %v1542
        %1544 = vdwg.mxu0
        %1545 = vmatpush.bf16.msra.mxu0 %v1143
        %1546 = vmatpush.bf16.msra.mxu0 %v1141
        %1547 = vmatpush.bf16.msra.mxu0 %v1139
        %1548 = vmatpush.bf16.msra.mxu0 %v1137
        %1549 = vmatpush.bf16.msra.mxu0 %v1135
        %1550 = vmatpush.bf16.msra.mxu0 %v1133
        %1551 = vmatpush.bf16.msra.mxu0 %v1131
        %1552 = vmatpush.bf16.msra.mxu0 %v1129
        %1553 = vmatmul.bf16.gmra.mxu0 %v527
        %v1554 = vpop.f32.mrf.mxu0
        %v1555 = vadd.f32 %v1536, %v1554
        %v1556 = vpop.f32.mrf.mxu0
        %v1557 = vadd.f32 %v1538, %v1556
        %1558 = vmatmul.bf16.gmra.mxu0 %v535
        %v1559 = vpop.f32.mrf.mxu0
        %v1560 = vadd.f32 %v1541, %v1559
        %v1561 = vpop.f32.mrf.mxu0
        %v1562 = vadd.f32 %v1543, %v1561
        %1563 = vdwg.mxu0
        %1564 = vmatpush.bf16.msra.mxu0 %v1159
        %1565 = vmatpush.bf16.msra.mxu0 %v1157
        %1566 = vmatpush.bf16.msra.mxu0 %v1155
        %1567 = vmatpush.bf16.msra.mxu0 %v1153
        %1568 = vmatpush.bf16.msra.mxu0 %v1151
        %1569 = vmatpush.bf16.msra.mxu0 %v1149
        %1570 = vmatpush.bf16.msra.mxu0 %v1147
        %1571 = vmatpush.bf16.msra.mxu0 %v1145
        %1572 = vmatmul.bf16.gmra.mxu0 %v528
        %v1573 = vpop.f32.mrf.mxu0
        %v1574 = vadd.f32 %v1555, %v1573
        %v1575 = vpop.f32.mrf.mxu0
        %v1576 = vadd.f32 %v1557, %v1575
        %1577 = vmatmul.bf16.gmra.mxu0 %v536
        %v1578 = vpop.f32.mrf.mxu0
        %v1579 = vadd.f32 %v1560, %v1578
        %v1580 = vpop.f32.mrf.mxu0
        %v1581 = vadd.f32 %v1562, %v1580
        %1582 = vdwg.mxu0
        %1583 = vmatpush.bf16.msra.mxu0 %v1175
        %1584 = vmatpush.bf16.msra.mxu0 %v1173
        %1585 = vmatpush.bf16.msra.mxu0 %v1171
        %1586 = vmatpush.bf16.msra.mxu0 %v1169
        %1587 = vmatpush.bf16.msra.mxu0 %v1167
        %1588 = vmatpush.bf16.msra.mxu0 %v1165
        %1589 = vmatpush.bf16.msra.mxu0 %v1163
        %1590 = vmatpush.bf16.msra.mxu0 %v1161
        %1591 = vmatmul.bf16.gmra.mxu0 %v529
        %v1592 = vpop.f32.mrf.mxu0
        %v1593 = vadd.f32 %v1574, %v1592
        %v1594 = vpop.f32.mrf.mxu0
        %v1595 = vadd.f32 %v1576, %v1594
        %1596 = vmatmul.bf16.gmra.mxu0 %v537
        %v1597 = vpop.f32.mrf.mxu0
        %v1598 = vadd.f32 %v1579, %v1597
        %v1599 = vpop.f32.mrf.mxu0
        %v1600 = vadd.f32 %v1581, %v1599
        %1601 = vdwg.mxu0
        %1602 = vmatpush.bf16.msra.mxu0 %v1191
        %1603 = vmatpush.bf16.msra.mxu0 %v1189
        %1604 = vmatpush.bf16.msra.mxu0 %v1187
        %1605 = vmatpush.bf16.msra.mxu0 %v1185
        %1606 = vmatpush.bf16.msra.mxu0 %v1183
        %1607 = vmatpush.bf16.msra.mxu0 %v1181
        %1608 = vmatpush.bf16.msra.mxu0 %v1179
        %1609 = vmatpush.bf16.msra.mxu0 %v1177
        %1610 = vmatmul.bf16.gmra.mxu0 %v530
        %v1611 = vpop.f32.mrf.mxu0
        %v1612 = vadd.f32 %v1593, %v1611
        %v1613 = vpop.f32.mrf.mxu0
        %v1614 = vadd.f32 %v1595, %v1613
        %1615 = vmatmul.bf16.gmra.mxu0 %v538
        %v1616 = vpop.f32.mrf.mxu0
        %v1617 = vadd.f32 %v1598, %v1616
        %v1618 = vpop.f32.mrf.mxu0
        %v1619 = vadd.f32 %v1600, %v1618
        %1620 = vdwg.mxu0
        %1621 = vmatpush.bf16.msra.mxu0 %v1207
        %1622 = vmatpush.bf16.msra.mxu0 %v1205
        %1623 = vmatpush.bf16.msra.mxu0 %v1203
        %1624 = vmatpush.bf16.msra.mxu0 %v1201
        %1625 = vmatpush.bf16.msra.mxu0 %v1199
        %1626 = vmatpush.bf16.msra.mxu0 %v1197
        %1627 = vmatpush.bf16.msra.mxu0 %v1195
        %1628 = vmatpush.bf16.msra.mxu0 %v1193
        %1629 = vmatmul.bf16.gmra.mxu0 %v531
        %v1630 = vpop.f32.mrf.mxu0
        %v1631 = vadd.f32 %v1612, %v1630
        %v1632 = vpop.f32.mrf.mxu0
        %v1633 = vadd.f32 %v1614, %v1632
        %1634 = vmatmul.bf16.gmra.mxu0 %v539
        %v1635 = vpop.f32.mrf.mxu0
        %v1636 = vadd.f32 %v1617, %v1635
        %v1637 = vpop.f32.mrf.mxu0
        %v1638 = vadd.f32 %v1619, %v1637
        %1639 = vdwg.mxu0
        %v1640 = vmax.f32 %v1479, 0.0
        %v1641 = vmax.f32 %v1631, 0.0
        %v1642 = vmax.f32 %v1481, 0.0
        %v1643 = vmax.f32 %v1633, 0.0
        %v1644 = vmax.f32 %v1484, 0.0
        %v1645 = vmax.f32 %v1636, 0.0
        %v1646 = vmax.f32 %v1486, 0.0
        %v1647 = vmax.f32 %v1638, 0.0
        %v1648 = vpack.c.bf16 %v1642, %v1640
        %v1649 = vpack.c.bf16 %v1643, %v1641
        %v1650 = vpack.c.bf16 %v1646, %v1644
        %v1651 = vpack.c.bf16 %v1647, %v1645
        %v1652 = vld [vmem:[#allocation7 + $0x400] sm:$0xff]
        %v1653 = vld [vmem:[#allocation7 + $0x408] sm:$0xff]
        %v1654 = vld [vmem:[#allocation7 + $0x410] sm:$0xff]
        %v1655 = vld [vmem:[#allocation7 + $0x418] sm:$0xff]
        %v1656 = vld [vmem:[#allocation7 + $0x420] sm:$0xff]
        %v1657 = vld [vmem:[#allocation7 + $0x428] sm:$0xff]
        %v1658 = vld [vmem:[#allocation7 + $0x430] sm:$0xff]
        %v1659 = vld [vmem:[#allocation7 + $0x438] sm:$0xff]
        %v1660 = vld [vmem:[#allocation7 + $0x440] sm:$0xff]
        %v1661 = vld [vmem:[#allocation7 + $0x448] sm:$0xff]
        %v1662 = vld [vmem:[#allocation7 + $0x450] sm:$0xff]
        %v1663 = vld [vmem:[#allocation7 + $0x458] sm:$0xff]
        %v1664 = vld [vmem:[#allocation7 + $0x460] sm:$0xff]
        %v1665 = vld [vmem:[#allocation7 + $0x468] sm:$0xff]
        %v1666 = vld [vmem:[#allocation7 + $0x470] sm:$0xff]
        %v1667 = vld [vmem:[#allocation7 + $0x478] sm:$0xff]
        %v1668 = vld [vmem:[#allocation7 + $0x480] sm:$0xff]
        %v1669 = vld [vmem:[#allocation7 + $0x488] sm:$0xff]
        %v1670 = vld [vmem:[#allocation7 + $0x490] sm:$0xff]
        %v1671 = vld [vmem:[#allocation7 + $0x498] sm:$0xff]
        %v1672 = vld [vmem:[#allocation7 + $0x4a0] sm:$0xff]
        %v1673 = vld [vmem:[#allocation7 + $0x4a8] sm:$0xff]
        %v1674 = vld [vmem:[#allocation7 + $0x4b0] sm:$0xff]
        %v1675 = vld [vmem:[#allocation7 + $0x4b8] sm:$0xff]
        %v1676 = vld [vmem:[#allocation7 + $0x4c0] sm:$0xff]
        %v1677 = vld [vmem:[#allocation7 + $0x4c8] sm:$0xff]
        %v1678 = vld [vmem:[#allocation7 + $0x4d0] sm:$0xff]
        %v1679 = vld [vmem:[#allocation7 + $0x4d8] sm:$0xff]
        %v1680 = vld [vmem:[#allocation7 + $0x4e0] sm:$0xff]
        %v1681 = vld [vmem:[#allocation7 + $0x4e8] sm:$0xff]
        %v1682 = vld [vmem:[#allocation7 + $0x4f0] sm:$0xff]
        %v1683 = vld [vmem:[#allocation7 + $0x4f8] sm:$0xff]
        %s1684 = scalar_lea.vmem [#allocation10], 1
        %v1685 = vld [vmem:[%s1684] ss:$8 sm:$0x3]
        %v1687 = vperm.slane %v1685, 0
        %v1688 = vperm.slane %v1685, 1
        %v1723 = vunpack.c.l.b16 %v1652
        %v1724 = vunpack.c.h.b16 %v1652
        %v1725 = vunpack.c.l.b16 %v1653
        %v1726 = vunpack.c.h.b16 %v1653
        %v1727 = vunpack.c.l.b16 %v1654
        %v1728 = vunpack.c.h.b16 %v1654
        %v1729 = vunpack.c.l.b16 %v1655
        %v1730 = vunpack.c.h.b16 %v1655
        %v1731 = vunpack.c.l.b16 %v1656
        %v1732 = vunpack.c.h.b16 %v1656
        %v1733 = vunpack.c.l.b16 %v1657
        %v1734 = vunpack.c.h.b16 %v1657
        %v1735 = vunpack.c.l.b16 %v1658
        %v1736 = vunpack.c.h.b16 %v1658
        %v1737 = vunpack.c.l.b16 %v1659
        %v1738 = vunpack.c.h.b16 %v1659
        %v1739 = vunpack.c.l.b16 %v1660
        %v1740 = vunpack.c.h.b16 %v1660
        %v1741 = vunpack.c.l.b16 %v1661
        %v1742 = vunpack.c.h.b16 %v1661
        %v1743 = vunpack.c.l.b16 %v1662
        %v1744 = vunpack.c.h.b16 %v1662
        %v1745 = vunpack.c.l.b16 %v1663
        %v1746 = vunpack.c.h.b16 %v1663
        %v1747 = vunpack.c.l.b16 %v1664
        %v1748 = vunpack.c.h.b16 %v1664
        %v1749 = vunpack.c.l.b16 %v1665
        %v1750 = vunpack.c.h.b16 %v1665
        %v1751 = vunpack.c.l.b16 %v1666
        %v1752 = vunpack.c.h.b16 %v1666
        %v1753 = vunpack.c.l.b16 %v1667
        %v1754 = vunpack.c.h.b16 %v1667
        %v1755 = vunpack.c.l.b16 %v1668
        %v1756 = vunpack.c.h.b16 %v1668
        %v1757 = vunpack.c.l.b16 %v1669
        %v1758 = vunpack.c.h.b16 %v1669
        %v1759 = vunpack.c.l.b16 %v1670
        %v1760 = vunpack.c.h.b16 %v1670
        %v1761 = vunpack.c.l.b16 %v1671
        %v1762 = vunpack.c.h.b16 %v1671
        %v1763 = vunpack.c.l.b16 %v1672
        %v1764 = vunpack.c.h.b16 %v1672
        %v1765 = vunpack.c.l.b16 %v1673
        %v1766 = vunpack.c.h.b16 %v1673
        %v1767 = vunpack.c.l.b16 %v1674
        %v1768 = vunpack.c.h.b16 %v1674
        %v1769 = vunpack.c.l.b16 %v1675
        %v1770 = vunpack.c.h.b16 %v1675
        %v1771 = vunpack.c.l.b16 %v1676
        %v1772 = vunpack.c.h.b16 %v1676
        %v1773 = vunpack.c.l.b16 %v1677
        %v1774 = vunpack.c.h.b16 %v1677
        %v1775 = vunpack.c.l.b16 %v1678
        %v1776 = vunpack.c.h.b16 %v1678
        %v1777 = vunpack.c.l.b16 %v1679
        %v1778 = vunpack.c.h.b16 %v1679
        %v1779 = vunpack.c.l.b16 %v1680
        %v1780 = vunpack.c.h.b16 %v1680
        %v1781 = vunpack.c.l.b16 %v1681
        %v1782 = vunpack.c.h.b16 %v1681
        %v1783 = vunpack.c.l.b16 %v1682
        %v1784 = vunpack.c.h.b16 %v1682
        %v1785 = vunpack.c.l.b16 %v1683
        %v1786 = vunpack.c.h.b16 %v1683
        %v1787 = vpack.c.b16 %v1725, %v1723
        %v1788 = vpack.c.b16 %v1726, %v1724
        %v1789 = vpack.c.b16 %v1729, %v1727
        %v1790 = vpack.c.b16 %v1730, %v1728
        %v1791 = vpack.c.b16 %v1733, %v1731
        %v1792 = vpack.c.b16 %v1734, %v1732
        %v1793 = vpack.c.b16 %v1737, %v1735
        %v1794 = vpack.c.b16 %v1738, %v1736
        %v1795 = vpack.c.b16 %v1741, %v1739
        %v1796 = vpack.c.b16 %v1742, %v1740
        %v1797 = vpack.c.b16 %v1745, %v1743
        %v1798 = vpack.c.b16 %v1746, %v1744
        %v1799 = vpack.c.b16 %v1749, %v1747
        %v1800 = vpack.c.b16 %v1750, %v1748
        %v1801 = vpack.c.b16 %v1753, %v1751
        %v1802 = vpack.c.b16 %v1754, %v1752
        %v1803 = vpack.c.b16 %v1757, %v1755
        %v1804 = vpack.c.b16 %v1758, %v1756
        %v1805 = vpack.c.b16 %v1761, %v1759
        %v1806 = vpack.c.b16 %v1762, %v1760
        %v1807 = vpack.c.b16 %v1765, %v1763
        %v1808 = vpack.c.b16 %v1766, %v1764
        %v1809 = vpack.c.b16 %v1769, %v1767
        %v1810 = vpack.c.b16 %v1770, %v1768
        %v1811 = vpack.c.b16 %v1773, %v1771
        %v1812 = vpack.c.b16 %v1774, %v1772
        %v1813 = vpack.c.b16 %v1777, %v1775
        %v1814 = vpack.c.b16 %v1778, %v1776
        %v1815 = vpack.c.b16 %v1781, %v1779
        %v1816 = vpack.c.b16 %v1782, %v1780
        %v1817 = vpack.c.b16 %v1785, %v1783
        %v1818 = vpack.c.b16 %v1786, %v1784
        %1851 = vmatpush.bf16.msra.mxu0 %v1801
        %1852 = vmatpush.bf16.msra.mxu0 %v1799
        %1853 = vmatpush.bf16.msra.mxu0 %v1797
        %1854 = vmatpush.bf16.msra.mxu0 %v1795
        %1855 = vmatpush.bf16.msra.mxu0 %v1793
        %1856 = vmatpush.bf16.msra.mxu0 %v1791
        %1857 = vmatpush.bf16.msra.mxu0 %v1789
        %1858 = vmatpush.bf16.msra.mxu0 %v1787
        %1859 = vmatmul.bf16.gmra.mxu0 %v1648
        %v1860 = vpop.f32.mrf.mxu0
        %v1861 = vadd.f32 %v1687, %v1860
        %v1862 = vpop.f32.mrf.mxu0
        %v1863 = vadd.f32 %v1687, %v1862
        %1864 = vmatmul.bf16.gmra.mxu0 %v1650
        %v1865 = vpop.f32.mrf.mxu0
        %v1866 = vadd.f32 %v1687, %v1865
        %v1867 = vpop.f32.mrf.mxu0
        %v1868 = vadd.f32 %v1687, %v1867
        %1869 = vdwg.mxu0
        %1870 = vmatpush.bf16.msra.mxu0 %v1817
        %1871 = vmatpush.bf16.msra.mxu0 %v1815
        %1872 = vmatpush.bf16.msra.mxu0 %v1813
        %1873 = vmatpush.bf16.msra.mxu0 %v1811
        %1874 = vmatpush.bf16.msra.mxu0 %v1809
        %1875 = vmatpush.bf16.msra.mxu0 %v1807
        %1876 = vmatpush.bf16.msra.mxu0 %v1805
        %1877 = vmatpush.bf16.msra.mxu0 %v1803
        %1878 = vmatmul.bf16.gmra.mxu0 %v1649
        %v1879 = vpop.f32.mrf.mxu0
        %v1880 = vadd.f32 %v1861, %v1879
        %v1881 = vpop.f32.mrf.mxu0
        %v1882 = vadd.f32 %v1863, %v1881
        %1883 = vmatmul.bf16.gmra.mxu0 %v1651
        %v1884 = vpop.f32.mrf.mxu0
        %v1885 = vadd.f32 %v1866, %v1884
        %v1886 = vpop.f32.mrf.mxu0
        %v1887 = vadd.f32 %v1868, %v1886
        %1888 = vdwg.mxu0
        %1889 = vmatpush.bf16.msra.mxu0 %v1802
        %1890 = vmatpush.bf16.msra.mxu0 %v1800
        %1891 = vmatpush.bf16.msra.mxu0 %v1798
        %1892 = vmatpush.bf16.msra.mxu0 %v1796
        %1893 = vmatpush.bf16.msra.mxu0 %v1794
        %1894 = vmatpush.bf16.msra.mxu0 %v1792
        %1895 = vmatpush.bf16.msra.mxu0 %v1790
        %1896 = vmatpush.bf16.msra.mxu0 %v1788
        %1897 = vmatmul.bf16.gmra.mxu0 %v1648
        %v1898 = vpop.f32.mrf.mxu0
        %v1899 = vadd.f32 %v1688, %v1898
        %v1900 = vpop.f32.mrf.mxu0
        %v1901 = vadd.f32 %v1688, %v1900
        %1902 = vmatmul.bf16.gmra.mxu0 %v1650
        %v1903 = vpop.f32.mrf.mxu0
        %v1904 = vadd.f32 %v1688, %v1903
        %v1905 = vpop.f32.mrf.mxu0
        %v1906 = vadd.f32 %v1688, %v1905
        %1907 = vdwg.mxu0
        %1908 = vmatpush.bf16.msra.mxu0 %v1818
        %1909 = vmatpush.bf16.msra.mxu0 %v1816
        %1910 = vmatpush.bf16.msra.mxu0 %v1814
        %1911 = vmatpush.bf16.msra.mxu0 %v1812
        %1912 = vmatpush.bf16.msra.mxu0 %v1810
        %1913 = vmatpush.bf16.msra.mxu0 %v1808
        %1914 = vmatpush.bf16.msra.mxu0 %v1806
        %1915 = vmatpush.bf16.msra.mxu0 %v1804
        %1916 = vmatmul.bf16.gmra.mxu0 %v1649
        %v1917 = vpop.f32.mrf.mxu0
        %v1918 = vadd.f32 %v1899, %v1917
        %v1919 = vpop.f32.mrf.mxu0
        %v1920 = vadd.f32 %v1901, %v1919
        %1921 = vmatmul.bf16.gmra.mxu0 %v1651
        %v1922 = vpop.f32.mrf.mxu0
        %v1923 = vadd.f32 %v1904, %v1922
        %v1924 = vpop.f32.mrf.mxu0
        %v1925 = vadd.f32 %v1906, %v1924
        %1926 = vdwg.mxu0
        %v1927 = vmax.f32 %v1880, 0.0
        %v1928 = vmax.f32 %v1918, 0.0
        %v1929 = vmax.f32 %v1882, 0.0
        %v1930 = vmax.f32 %v1920, 0.0
        %v1931 = vmax.f32 %v1885, 0.0
        %v1932 = vmax.f32 %v1923, 0.0
        %v1933 = vmax.f32 %v1887, 0.0
        %v1934 = vmax.f32 %v1925, 0.0
        %v1935 = vpack.c.bf16 %v1929, %v1927
        %v1936 = vpack.c.bf16 %v1930, %v1928
        %v1937 = vpack.c.bf16 %v1933, %v1931
        %v1938 = vpack.c.bf16 %v1934, %v1932
        %v1939 = vld [vmem:[#allocation7 + $0x500] sm:$0xff]
        %v1940 = vld [vmem:[#allocation7 + $0x508] sm:$0xff]
        %v1941 = vld [vmem:[#allocation7 + $0x510] sm:$0xff]
        %v1942 = vld [vmem:[#allocation7 + $0x518] sm:$0xff]
        %v1943 = vld [vmem:[#allocation7 + $0x520] sm:$0xff]
        %v1944 = vld [vmem:[#allocation7 + $0x528] sm:$0xff]
        %v1945 = vld [vmem:[#allocation7 + $0x530] sm:$0xff]
        %v1946 = vld [vmem:[#allocation7 + $0x538] sm:$0xff]
        %v1947 = vld [vmem:[#allocation7 + $0x540] sm:$0xff]
        %v1948 = vld [vmem:[#allocation7 + $0x548] sm:$0xff]
        %v1949 = vld [vmem:[#allocation7 + $0x550] sm:$0xff]
        %v1950 = vld [vmem:[#allocation7 + $0x558] sm:$0xff]
        %v1951 = vld [vmem:[#allocation7 + $0x560] sm:$0xff]
        %v1952 = vld [vmem:[#allocation7 + $0x568] sm:$0xff]
        %v1953 = vld [vmem:[#allocation7 + $0x570] sm:$0xff]
        %v1954 = vld [vmem:[#allocation7 + $0x578] sm:$0xff]
        %v1955 = vld [vmem:[#allocation7 + $0x580] sm:$0xff]
        %v1956 = vld [vmem:[#allocation7 + $0x588] sm:$0xff]
        %v1957 = vld [vmem:[#allocation7 + $0x590] sm:$0xff]
        %v1958 = vld [vmem:[#allocation7 + $0x598] sm:$0xff]
        %v1959 = vld [vmem:[#allocation7 + $0x5a0] sm:$0xff]
        %v1960 = vld [vmem:[#allocation7 + $0x5a8] sm:$0xff]
        %v1961 = vld [vmem:[#allocation7 + $0x5b0] sm:$0xff]
        %v1962 = vld [vmem:[#allocation7 + $0x5b8] sm:$0xff]
        %v1963 = vld [vmem:[#allocation7 + $0x5c0] sm:$0xff]
        %v1964 = vld [vmem:[#allocation7 + $0x5c8] sm:$0xff]
        %v1965 = vld [vmem:[#allocation7 + $0x5d0] sm:$0xff]
        %v1966 = vld [vmem:[#allocation7 + $0x5d8] sm:$0xff]
        %v1967 = vld [vmem:[#allocation7 + $0x5e0] sm:$0xff]
        %v1968 = vld [vmem:[#allocation7 + $0x5e8] sm:$0xff]
        %v1969 = vld [vmem:[#allocation7 + $0x5f0] sm:$0xff]
        %v1970 = vld [vmem:[#allocation7 + $0x5f8] sm:$0xff]
        %s1971 = scalar_lea.vmem [#allocation10], 2
        %v1972 = vld [vmem:[%s1971] ss:$8 sm:$0x3]
        %v1974 = vperm.slane %v1972, 0
        %v1975 = vperm.slane %v1972, 1
        %v2010 = vunpack.c.l.b16 %v1939
        %v2011 = vunpack.c.h.b16 %v1939
        %v2012 = vunpack.c.l.b16 %v1940
        %v2013 = vunpack.c.h.b16 %v1940
        %v2014 = vunpack.c.l.b16 %v1941
        %v2015 = vunpack.c.h.b16 %v1941
        %v2016 = vunpack.c.l.b16 %v1942
        %v2017 = vunpack.c.h.b16 %v1942
        %v2018 = vunpack.c.l.b16 %v1943
        %v2019 = vunpack.c.h.b16 %v1943
        %v2020 = vunpack.c.l.b16 %v1944
        %v2021 = vunpack.c.h.b16 %v1944
        %v2022 = vunpack.c.l.b16 %v1945
        %v2023 = vunpack.c.h.b16 %v1945
        %v2024 = vunpack.c.l.b16 %v1946
        %v2025 = vunpack.c.h.b16 %v1946
        %v2026 = vunpack.c.l.b16 %v1947
        %v2027 = vunpack.c.h.b16 %v1947
        %v2028 = vunpack.c.l.b16 %v1948
        %v2029 = vunpack.c.h.b16 %v1948
        %v2030 = vunpack.c.l.b16 %v1949
        %v2031 = vunpack.c.h.b16 %v1949
        %v2032 = vunpack.c.l.b16 %v1950
        %v2033 = vunpack.c.h.b16 %v1950
        %v2034 = vunpack.c.l.b16 %v1951
        %v2035 = vunpack.c.h.b16 %v1951
        %v2036 = vunpack.c.l.b16 %v1952
        %v2037 = vunpack.c.h.b16 %v1952
        %v2038 = vunpack.c.l.b16 %v1953
        %v2039 = vunpack.c.h.b16 %v1953
        %v2040 = vunpack.c.l.b16 %v1954
        %v2041 = vunpack.c.h.b16 %v1954
        %v2042 = vunpack.c.l.b16 %v1955
        %v2043 = vunpack.c.h.b16 %v1955
        %v2044 = vunpack.c.l.b16 %v1956
        %v2045 = vunpack.c.h.b16 %v1956
        %v2046 = vunpack.c.l.b16 %v1957
        %v2047 = vunpack.c.h.b16 %v1957
        %v2048 = vunpack.c.l.b16 %v1958
        %v2049 = vunpack.c.h.b16 %v1958
        %v2050 = vunpack.c.l.b16 %v1959
        %v2051 = vunpack.c.h.b16 %v1959
        %v2052 = vunpack.c.l.b16 %v1960
        %v2053 = vunpack.c.h.b16 %v1960
        %v2054 = vunpack.c.l.b16 %v1961
        %v2055 = vunpack.c.h.b16 %v1961
        %v2056 = vunpack.c.l.b16 %v1962
        %v2057 = vunpack.c.h.b16 %v1962
        %v2058 = vunpack.c.l.b16 %v1963
        %v2059 = vunpack.c.h.b16 %v1963
        %v2060 = vunpack.c.l.b16 %v1964
        %v2061 = vunpack.c.h.b16 %v1964
        %v2062 = vunpack.c.l.b16 %v1965
        %v2063 = vunpack.c.h.b16 %v1965
        %v2064 = vunpack.c.l.b16 %v1966
        %v2065 = vunpack.c.h.b16 %v1966
        %v2066 = vunpack.c.l.b16 %v1967
        %v2067 = vunpack.c.h.b16 %v1967
        %v2068 = vunpack.c.l.b16 %v1968
        %v2069 = vunpack.c.h.b16 %v1968
        %v2070 = vunpack.c.l.b16 %v1969
        %v2071 = vunpack.c.h.b16 %v1969
        %v2072 = vunpack.c.l.b16 %v1970
        %v2073 = vunpack.c.h.b16 %v1970
        %v2074 = vpack.c.b16 %v2012, %v2010
        %v2075 = vpack.c.b16 %v2013, %v2011
        %v2076 = vpack.c.b16 %v2016, %v2014
        %v2077 = vpack.c.b16 %v2017, %v2015
        %v2078 = vpack.c.b16 %v2020, %v2018
        %v2079 = vpack.c.b16 %v2021, %v2019
        %v2080 = vpack.c.b16 %v2024, %v2022
        %v2081 = vpack.c.b16 %v2025, %v2023
        %v2082 = vpack.c.b16 %v2028, %v2026
        %v2083 = vpack.c.b16 %v2029, %v2027
        %v2084 = vpack.c.b16 %v2032, %v2030
        %v2085 = vpack.c.b16 %v2033, %v2031
        %v2086 = vpack.c.b16 %v2036, %v2034
        %v2087 = vpack.c.b16 %v2037, %v2035
        %v2088 = vpack.c.b16 %v2040, %v2038
        %v2089 = vpack.c.b16 %v2041, %v2039
        %v2090 = vpack.c.b16 %v2044, %v2042
        %v2091 = vpack.c.b16 %v2045, %v2043
        %v2092 = vpack.c.b16 %v2048, %v2046
        %v2093 = vpack.c.b16 %v2049, %v2047
        %v2094 = vpack.c.b16 %v2052, %v2050
        %v2095 = vpack.c.b16 %v2053, %v2051
        %v2096 = vpack.c.b16 %v2056, %v2054
        %v2097 = vpack.c.b16 %v2057, %v2055
        %v2098 = vpack.c.b16 %v2060, %v2058
        %v2099 = vpack.c.b16 %v2061, %v2059
        %v2100 = vpack.c.b16 %v2064, %v2062
        %v2101 = vpack.c.b16 %v2065, %v2063
        %v2102 = vpack.c.b16 %v2068, %v2066
        %v2103 = vpack.c.b16 %v2069, %v2067
        %v2104 = vpack.c.b16 %v2072, %v2070
        %v2105 = vpack.c.b16 %v2073, %v2071
        %2138 = vmatpush.bf16.msra.mxu0 %v2088
        %2139 = vmatpush.bf16.msra.mxu0 %v2086
        %2140 = vmatpush.bf16.msra.mxu0 %v2084
        %2141 = vmatpush.bf16.msra.mxu0 %v2082
        %2142 = vmatpush.bf16.msra.mxu0 %v2080
        %2143 = vmatpush.bf16.msra.mxu0 %v2078
        %2144 = vmatpush.bf16.msra.mxu0 %v2076
        %2145 = vmatpush.bf16.msra.mxu0 %v2074
        %2146 = vmatmul.bf16.gmra.mxu0 %v1935
        %v2147 = vpop.f32.mrf.mxu0
        %v2148 = vadd.f32 %v1974, %v2147
        %v2149 = vpop.f32.mrf.mxu0
        %v2150 = vadd.f32 %v1974, %v2149
        %2151 = vmatmul.bf16.gmra.mxu0 %v1937
        %v2152 = vpop.f32.mrf.mxu0
        %v2153 = vadd.f32 %v1974, %v2152
        %v2154 = vpop.f32.mrf.mxu0
        %v2155 = vadd.f32 %v1974, %v2154
        %2156 = vdwg.mxu0
        %2157 = vmatpush.bf16.msra.mxu0 %v2104
        %2158 = vmatpush.bf16.msra.mxu0 %v2102
        %2159 = vmatpush.bf16.msra.mxu0 %v2100
        %2160 = vmatpush.bf16.msra.mxu0 %v2098
        %2161 = vmatpush.bf16.msra.mxu0 %v2096
        %2162 = vmatpush.bf16.msra.mxu0 %v2094
        %2163 = vmatpush.bf16.msra.mxu0 %v2092
        %2164 = vmatpush.bf16.msra.mxu0 %v2090
        %2165 = vmatmul.bf16.gmra.mxu0 %v1936
        %v2166 = vpop.f32.mrf.mxu0
        %v2167 = vadd.f32 %v2148, %v2166
        %v2168 = vpop.f32.mrf.mxu0
        %v2169 = vadd.f32 %v2150, %v2168
        %2170 = vmatmul.bf16.gmra.mxu0 %v1938
        %v2171 = vpop.f32.mrf.mxu0
        %v2172 = vadd.f32 %v2153, %v2171
        %v2173 = vpop.f32.mrf.mxu0
        %v2174 = vadd.f32 %v2155, %v2173
        %2175 = vdwg.mxu0
        %2176 = vmatpush.bf16.msra.mxu0 %v2089
        %2177 = vmatpush.bf16.msra.mxu0 %v2087
        %2178 = vmatpush.bf16.msra.mxu0 %v2085
        %2179 = vmatpush.bf16.msra.mxu0 %v2083
        %2180 = vmatpush.bf16.msra.mxu0 %v2081
        %2181 = vmatpush.bf16.msra.mxu0 %v2079
        %2182 = vmatpush.bf16.msra.mxu0 %v2077
        %2183 = vmatpush.bf16.msra.mxu0 %v2075
        %2184 = vmatmul.bf16.gmra.mxu0 %v1935
        %v2185 = vpop.f32.mrf.mxu0
        %v2186 = vadd.f32 %v1975, %v2185
        %v2187 = vpop.f32.mrf.mxu0
        %v2188 = vadd.f32 %v1975, %v2187
        %2189 = vmatmul.bf16.gmra.mxu0 %v1937
        %v2190 = vpop.f32.mrf.mxu0
        %v2191 = vadd.f32 %v1975, %v2190
        %v2192 = vpop.f32.mrf.mxu0
        %v2193 = vadd.f32 %v1975, %v2192
        %2194 = vdwg.mxu0
        %2195 = vmatpush.bf16.msra.mxu0 %v2105
        %2196 = vmatpush.bf16.msra.mxu0 %v2103
        %2197 = vmatpush.bf16.msra.mxu0 %v2101
        %2198 = vmatpush.bf16.msra.mxu0 %v2099
        %2199 = vmatpush.bf16.msra.mxu0 %v2097
        %2200 = vmatpush.bf16.msra.mxu0 %v2095
        %2201 = vmatpush.bf16.msra.mxu0 %v2093
        %2202 = vmatpush.bf16.msra.mxu0 %v2091
        %2203 = vmatmul.bf16.gmra.mxu0 %v1936
        %v2204 = vpop.f32.mrf.mxu0
        %v2205 = vadd.f32 %v2186, %v2204
        %v2206 = vpop.f32.mrf.mxu0
        %v2207 = vadd.f32 %v2188, %v2206
        %2208 = vmatmul.bf16.gmra.mxu0 %v1938
        %v2209 = vpop.f32.mrf.mxu0
        %v2210 = vadd.f32 %v2191, %v2209
        %v2211 = vpop.f32.mrf.mxu0
        %v2212 = vadd.f32 %v2193, %v2211
        %2213 = vdwg.mxu0
        %v2214 = vmax.f32 %v2167, 0.0
        %v2215 = vmax.f32 %v2205, 0.0
        %v2216 = vmax.f32 %v2169, 0.0
        %v2217 = vmax.f32 %v2207, 0.0
        %v2218 = vmax.f32 %v2172, 0.0
        %v2219 = vmax.f32 %v2210, 0.0
        %v2220 = vmax.f32 %v2174, 0.0
        %v2221 = vmax.f32 %v2212, 0.0
        %v2222 = vpack.c.bf16 %v2216, %v2214
        %v2223 = vpack.c.bf16 %v2217, %v2215
        %v2224 = vpack.c.bf16 %v2220, %v2218
        %v2225 = vpack.c.bf16 %v2221, %v2219
        %v2226 = vld [vmem:[#allocation8] sm:$0xf]
        %v2227 = vld [vmem:[#allocation8 + $0x4] sm:$0xf]
        %v2228 = vld [vmem:[#allocation8 + $0x8] sm:$0xf]
        %v2229 = vld [vmem:[#allocation8 + $0xc] sm:$0xf]
        %v2230 = vld [vmem:[#allocation8 + $0x10] sm:$0xf]
        %v2231 = vld [vmem:[#allocation8 + $0x14] sm:$0xf]
        %v2232 = vld [vmem:[#allocation8 + $0x18] sm:$0xf]
        %v2233 = vld [vmem:[#allocation8 + $0x1c] sm:$0xf]
        %v2234 = vld [vmem:[#allocation8 + $0x20] sm:$0xf]
        %v2235 = vld [vmem:[#allocation8 + $0x24] sm:$0xf]
        %v2236 = vld [vmem:[#allocation8 + $0x28] sm:$0xf]
        %v2237 = vld [vmem:[#allocation8 + $0x2c] sm:$0xf]
        %v2238 = vld [vmem:[#allocation8 + $0x30] sm:$0xf]
        %v2239 = vld [vmem:[#allocation8 + $0x34] sm:$0xf]
        %v2240 = vld [vmem:[#allocation8 + $0x38] sm:$0xf]
        %v2241 = vld [vmem:[#allocation8 + $0x3c] sm:$0xf]
        %v2242 = vld [vmem:[#allocation8 + $0x40] sm:$0xf]
        %v2243 = vld [vmem:[#allocation8 + $0x44] sm:$0xf]
        %v2244 = vld [vmem:[#allocation8 + $0x48] sm:$0xf]
        %v2245 = vld [vmem:[#allocation8 + $0x4c] sm:$0xf]
        %v2246 = vld [vmem:[#allocation8 + $0x50] sm:$0xf]
        %v2247 = vld [vmem:[#allocation8 + $0x54] sm:$0xf]
        %v2248 = vld [vmem:[#allocation8 + $0x58] sm:$0xf]
        %v2249 = vld [vmem:[#allocation8 + $0x5c] sm:$0xf]
        %v2250 = vld [vmem:[#allocation8 + $0x60] sm:$0xf]
        %v2251 = vld [vmem:[#allocation8 + $0x64] sm:$0xf]
        %v2252 = vld [vmem:[#allocation8 + $0x68] sm:$0xf]
        %v2253 = vld [vmem:[#allocation8 + $0x6c] sm:$0xf]
        %v2254 = vld [vmem:[#allocation8 + $0x70] sm:$0xf]
        %v2255 = vld [vmem:[#allocation8 + $0x74] sm:$0xf]
        %v2256 = vld [vmem:[#allocation8 + $0x78] sm:$0xf]
        %v2257 = vld [vmem:[#allocation8 + $0x7c] sm:$0xf]
        %v2258 = vld [vmem:[#allocation11] sm:$0x1]
        %v2259 = vperm.slane %v2258, 0
        %v2292 = vunpack.c.l.b16 %v2226
        %v2293 = vunpack.c.l.b16 %v2227
        %v2294 = vunpack.c.l.b16 %v2228
        %v2295 = vunpack.c.l.b16 %v2229
        %v2296 = vunpack.c.l.b16 %v2230
        %v2297 = vunpack.c.l.b16 %v2231
        %v2298 = vunpack.c.l.b16 %v2232
        %v2299 = vunpack.c.l.b16 %v2233
        %v2300 = vunpack.c.l.b16 %v2234
        %v2301 = vunpack.c.l.b16 %v2235
        %v2302 = vunpack.c.l.b16 %v2236
        %v2303 = vunpack.c.l.b16 %v2237
        %v2304 = vunpack.c.l.b16 %v2238
        %v2305 = vunpack.c.l.b16 %v2239
        %v2306 = vunpack.c.l.b16 %v2240
        %v2307 = vunpack.c.l.b16 %v2241
        %v2308 = vunpack.c.l.b16 %v2242
        %v2309 = vunpack.c.l.b16 %v2243
        %v2310 = vunpack.c.l.b16 %v2244
        %v2311 = vunpack.c.l.b16 %v2245
        %v2312 = vunpack.c.l.b16 %v2246
        %v2313 = vunpack.c.l.b16 %v2247
        %v2314 = vunpack.c.l.b16 %v2248
        %v2315 = vunpack.c.l.b16 %v2249
        %v2316 = vunpack.c.l.b16 %v2250
        %v2317 = vunpack.c.l.b16 %v2251
        %v2318 = vunpack.c.l.b16 %v2252
        %v2319 = vunpack.c.l.b16 %v2253
        %v2320 = vunpack.c.l.b16 %v2254
        %v2321 = vunpack.c.l.b16 %v2255
        %v2322 = vunpack.c.l.b16 %v2256
        %v2323 = vunpack.c.l.b16 %v2257
        %v2324 = vpack.c.b16 %v2293, %v2292
        %v2325 = vpack.c.b16 %v2295, %v2294
        %v2326 = vpack.c.b16 %v2297, %v2296
        %v2327 = vpack.c.b16 %v2299, %v2298
        %v2328 = vpack.c.b16 %v2301, %v2300
        %v2329 = vpack.c.b16 %v2303, %v2302
        %v2330 = vpack.c.b16 %v2305, %v2304
        %v2331 = vpack.c.b16 %v2307, %v2306
        %v2332 = vpack.c.b16 %v2309, %v2308
        %v2333 = vpack.c.b16 %v2311, %v2310
        %v2334 = vpack.c.b16 %v2313, %v2312
        %v2335 = vpack.c.b16 %v2315, %v2314
        %v2336 = vpack.c.b16 %v2317, %v2316
        %v2337 = vpack.c.b16 %v2319, %v2318
        %v2338 = vpack.c.b16 %v2321, %v2320
        %v2339 = vpack.c.b16 %v2323, %v2322
        %2356 = vmatpush.bf16.msra.mxu0 %v2331
        %2357 = vmatpush.bf16.msra.mxu0 %v2330
        %2358 = vmatpush.bf16.msra.mxu0 %v2329
        %2359 = vmatpush.bf16.msra.mxu0 %v2328
        %2360 = vmatpush.bf16.msra.mxu0 %v2327
        %2361 = vmatpush.bf16.msra.mxu0 %v2326
        %2362 = vmatpush.bf16.msra.mxu0 %v2325
        %2363 = vmatpush.bf16.msra.mxu0 %v2324
        %2364 = vmatmul.bf16.gmra.mxu0 %v2222
        %v2365 = vpop.f32.mrf.mxu0
        %v2366 = vadd.f32 %v2259, %v2365
        %v2367 = vpop.f32.mrf.mxu0
        %v2368 = vadd.f32 %v2259, %v2367
        %2369 = vmatmul.bf16.gmra.mxu0 %v2224
        %v2370 = vpop.f32.mrf.mxu0
        %v2371 = vadd.f32 %v2259, %v2370
        %v2372 = vpop.f32.mrf.mxu0
        %v2373 = vadd.f32 %v2259, %v2372
        %2374 = vdwg.mxu0
        %2375 = vmatpush.bf16.msra.mxu0 %v2339
        %2376 = vmatpush.bf16.msra.mxu0 %v2338
        %2377 = vmatpush.bf16.msra.mxu0 %v2337
        %2378 = vmatpush.bf16.msra.mxu0 %v2336
        %2379 = vmatpush.bf16.msra.mxu0 %v2335
        %2380 = vmatpush.bf16.msra.mxu0 %v2334
        %2381 = vmatpush.bf16.msra.mxu0 %v2333
        %2382 = vmatpush.bf16.msra.mxu0 %v2332
        %2383 = vmatmul.bf16.gmra.mxu0 %v2223
        %v2384 = vpop.f32.mrf.mxu0
        %v2385 = vadd.f32 %v2366, %v2384
        %v2386 = vpop.f32.mrf.mxu0
        %v2387 = vadd.f32 %v2368, %v2386
        %2388 = vmatmul.bf16.gmra.mxu0 %v2225
        %v2389 = vpop.f32.mrf.mxu0
        %v2390 = vadd.f32 %v2371, %v2389
        %v2391 = vpop.f32.mrf.mxu0
        %v2392 = vadd.f32 %v2373, %v2391
        %2393 = vdwg.mxu0
        %v2394 = vpack.c.bf16 %v2385, %v2385
        %v2395 = vpack.c.bf16 %v2387, %v2387
        %v2396 = vpack.c.bf16 %v2390, %v2390
        %v2397 = vpack.c.bf16 %v2392, %v2392
        %2398 = vst [vmem:[%s429] sm:$0xf] %v2394
        %2399 = vst [vmem:[%s429 + $0x4] sm:$0xf] %v2395
        %2400 = vst [vmem:[%s429 + $0x8] sm:$0xf] %v2396
        %2401 = vst [vmem:[%s429 + $0xc] sm:$0xf] %v2397
        %v2402 = vld [vmem:[#allocation7 + $0x600] sm:$0xff]
        %v2403 = vld [vmem:[#allocation7 + $0x608] sm:$0xff]
        %v2404 = vld [vmem:[#allocation7 + $0x610] sm:$0xff]
        %v2405 = vld [vmem:[#allocation7 + $0x618] sm:$0xff]
        %v2406 = vld [vmem:[#allocation7 + $0x620] sm:$0xff]
        %v2407 = vld [vmem:[#allocation7 + $0x628] sm:$0xff]
        %v2408 = vld [vmem:[#allocation7 + $0x630] sm:$0xff]
        %v2409 = vld [vmem:[#allocation7 + $0x638] sm:$0xff]
        %v2410 = vld [vmem:[#allocation7 + $0x640] sm:$0xff]
        %v2411 = vld [vmem:[#allocation7 + $0x648] sm:$0xff]
        %v2412 = vld [vmem:[#allocation7 + $0x650] sm:$0xff]
        %v2413 = vld [vmem:[#allocation7 + $0x658] sm:$0xff]
        %v2414 = vld [vmem:[#allocation7 + $0x660] sm:$0xff]
        %v2415 = vld [vmem:[#allocation7 + $0x668] sm:$0xff]
        %v2416 = vld [vmem:[#allocation7 + $0x670] sm:$0xff]
        %v2417 = vld [vmem:[#allocation7 + $0x678] sm:$0xff]
        %v2418 = vld [vmem:[#allocation7 + $0x680] sm:$0xff]
        %v2419 = vld [vmem:[#allocation7 + $0x688] sm:$0xff]
        %v2420 = vld [vmem:[#allocation7 + $0x690] sm:$0xff]
        %v2421 = vld [vmem:[#allocation7 + $0x698] sm:$0xff]
        %v2422 = vld [vmem:[#allocation7 + $0x6a0] sm:$0xff]
        %v2423 = vld [vmem:[#allocation7 + $0x6a8] sm:$0xff]
        %v2424 = vld [vmem:[#allocation7 + $0x6b0] sm:$0xff]
        %v2425 = vld [vmem:[#allocation7 + $0x6b8] sm:$0xff]
        %v2426 = vld [vmem:[#allocation7 + $0x6c0] sm:$0xff]
        %v2427 = vld [vmem:[#allocation7 + $0x6c8] sm:$0xff]
        %v2428 = vld [vmem:[#allocation7 + $0x6d0] sm:$0xff]
        %v2429 = vld [vmem:[#allocation7 + $0x6d8] sm:$0xff]
        %v2430 = vld [vmem:[#allocation7 + $0x6e0] sm:$0xff]
        %v2431 = vld [vmem:[#allocation7 + $0x6e8] sm:$0xff]
        %v2432 = vld [vmem:[#allocation7 + $0x6f0] sm:$0xff]
        %v2433 = vld [vmem:[#allocation7 + $0x6f8] sm:$0xff]
        %s2434 = scalar_lea.vmem [#allocation10], 3
        %v2435 = vld [vmem:[%s2434] ss:$8 sm:$0x3]
        %v2437 = vperm.slane %v2435, 0
        %v2438 = vperm.slane %v2435, 1
        %v2473 = vunpack.c.l.b16 %v2402
        %v2474 = vunpack.c.h.b16 %v2402
        %v2475 = vunpack.c.l.b16 %v2403
        %v2476 = vunpack.c.h.b16 %v2403
        %v2477 = vunpack.c.l.b16 %v2404
        %v2478 = vunpack.c.h.b16 %v2404
        %v2479 = vunpack.c.l.b16 %v2405
        %v2480 = vunpack.c.h.b16 %v2405
        %v2481 = vunpack.c.l.b16 %v2406
        %v2482 = vunpack.c.h.b16 %v2406
        %v2483 = vunpack.c.l.b16 %v2407
        %v2484 = vunpack.c.h.b16 %v2407
        %v2485 = vunpack.c.l.b16 %v2408
        %v2486 = vunpack.c.h.b16 %v2408
        %v2487 = vunpack.c.l.b16 %v2409
        %v2488 = vunpack.c.h.b16 %v2409
        %v2489 = vunpack.c.l.b16 %v2410
        %v2490 = vunpack.c.h.b16 %v2410
        %v2491 = vunpack.c.l.b16 %v2411
        %v2492 = vunpack.c.h.b16 %v2411
        %v2493 = vunpack.c.l.b16 %v2412
        %v2494 = vunpack.c.h.b16 %v2412
        %v2495 = vunpack.c.l.b16 %v2413
        %v2496 = vunpack.c.h.b16 %v2413
        %v2497 = vunpack.c.l.b16 %v2414
        %v2498 = vunpack.c.h.b16 %v2414
        %v2499 = vunpack.c.l.b16 %v2415
        %v2500 = vunpack.c.h.b16 %v2415
        %v2501 = vunpack.c.l.b16 %v2416
        %v2502 = vunpack.c.h.b16 %v2416
        %v2503 = vunpack.c.l.b16 %v2417
        %v2504 = vunpack.c.h.b16 %v2417
        %v2505 = vunpack.c.l.b16 %v2418
        %v2506 = vunpack.c.h.b16 %v2418
        %v2507 = vunpack.c.l.b16 %v2419
        %v2508 = vunpack.c.h.b16 %v2419
        %v2509 = vunpack.c.l.b16 %v2420
        %v2510 = vunpack.c.h.b16 %v2420
        %v2511 = vunpack.c.l.b16 %v2421
        %v2512 = vunpack.c.h.b16 %v2421
        %v2513 = vunpack.c.l.b16 %v2422
        %v2514 = vunpack.c.h.b16 %v2422
        %v2515 = vunpack.c.l.b16 %v2423
        %v2516 = vunpack.c.h.b16 %v2423
        %v2517 = vunpack.c.l.b16 %v2424
        %v2518 = vunpack.c.h.b16 %v2424
        %v2519 = vunpack.c.l.b16 %v2425
        %v2520 = vunpack.c.h.b16 %v2425
        %v2521 = vunpack.c.l.b16 %v2426
        %v2522 = vunpack.c.h.b16 %v2426
        %v2523 = vunpack.c.l.b16 %v2427
        %v2524 = vunpack.c.h.b16 %v2427
        %v2525 = vunpack.c.l.b16 %v2428
        %v2526 = vunpack.c.h.b16 %v2428
        %v2527 = vunpack.c.l.b16 %v2429
        %v2528 = vunpack.c.h.b16 %v2429
        %v2529 = vunpack.c.l.b16 %v2430
        %v2530 = vunpack.c.h.b16 %v2430
        %v2531 = vunpack.c.l.b16 %v2431
        %v2532 = vunpack.c.h.b16 %v2431
        %v2533 = vunpack.c.l.b16 %v2432
        %v2534 = vunpack.c.h.b16 %v2432
        %v2535 = vunpack.c.l.b16 %v2433
        %v2536 = vunpack.c.h.b16 %v2433
        %v2537 = vpack.c.b16 %v2475, %v2473
        %v2538 = vpack.c.b16 %v2476, %v2474
        %v2539 = vpack.c.b16 %v2479, %v2477
        %v2540 = vpack.c.b16 %v2480, %v2478
        %v2541 = vpack.c.b16 %v2483, %v2481
        %v2542 = vpack.c.b16 %v2484, %v2482
        %v2543 = vpack.c.b16 %v2487, %v2485
        %v2544 = vpack.c.b16 %v2488, %v2486
        %v2545 = vpack.c.b16 %v2491, %v2489
        %v2546 = vpack.c.b16 %v2492, %v2490
        %v2547 = vpack.c.b16 %v2495, %v2493
        %v2548 = vpack.c.b16 %v2496, %v2494
        %v2549 = vpack.c.b16 %v2499, %v2497
        %v2550 = vpack.c.b16 %v2500, %v2498
        %v2551 = vpack.c.b16 %v2503, %v2501
        %v2552 = vpack.c.b16 %v2504, %v2502
        %v2553 = vpack.c.b16 %v2507, %v2505
        %v2554 = vpack.c.b16 %v2508, %v2506
        %v2555 = vpack.c.b16 %v2511, %v2509
        %v2556 = vpack.c.b16 %v2512, %v2510
        %v2557 = vpack.c.b16 %v2515, %v2513
        %v2558 = vpack.c.b16 %v2516, %v2514
        %v2559 = vpack.c.b16 %v2519, %v2517
        %v2560 = vpack.c.b16 %v2520, %v2518
        %v2561 = vpack.c.b16 %v2523, %v2521
        %v2562 = vpack.c.b16 %v2524, %v2522
        %v2563 = vpack.c.b16 %v2527, %v2525
        %v2564 = vpack.c.b16 %v2528, %v2526
        %v2565 = vpack.c.b16 %v2531, %v2529
        %v2566 = vpack.c.b16 %v2532, %v2530
        %v2567 = vpack.c.b16 %v2535, %v2533
        %v2568 = vpack.c.b16 %v2536, %v2534
        %2601 = vmatpush.bf16.msra.mxu0 %v2551
        %2602 = vmatpush.bf16.msra.mxu0 %v2549
        %2603 = vmatpush.bf16.msra.mxu0 %v2547
        %2604 = vmatpush.bf16.msra.mxu0 %v2545
        %2605 = vmatpush.bf16.msra.mxu0 %v2543
        %2606 = vmatpush.bf16.msra.mxu0 %v2541
        %2607 = vmatpush.bf16.msra.mxu0 %v2539
        %2608 = vmatpush.bf16.msra.mxu0 %v2537
        %2609 = vmatmul.bf16.gmra.mxu0 %v558
        %v2610 = vpop.f32.mrf.mxu0
        %v2611 = vadd.f32 %v2437, %v2610
        %v2612 = vpop.f32.mrf.mxu0
        %v2613 = vadd.f32 %v2437, %v2612
        %2614 = vmatmul.bf16.gmra.mxu0 %v560
        %v2615 = vpop.f32.mrf.mxu0
        %v2616 = vadd.f32 %v2437, %v2615
        %v2617 = vpop.f32.mrf.mxu0
        %v2618 = vadd.f32 %v2437, %v2617
        %2619 = vdwg.mxu0
        %2620 = vmatpush.bf16.msra.mxu0 %v2567
        %2621 = vmatpush.bf16.msra.mxu0 %v2565
        %2622 = vmatpush.bf16.msra.mxu0 %v2563
        %2623 = vmatpush.bf16.msra.mxu0 %v2561
        %2624 = vmatpush.bf16.msra.mxu0 %v2559
        %2625 = vmatpush.bf16.msra.mxu0 %v2557
        %2626 = vmatpush.bf16.msra.mxu0 %v2555
        %2627 = vmatpush.bf16.msra.mxu0 %v2553
        %2628 = vmatmul.bf16.gmra.mxu0 %v559
        %v2629 = vpop.f32.mrf.mxu0
        %v2630 = vadd.f32 %v2611, %v2629
        %v2631 = vpop.f32.mrf.mxu0
        %v2632 = vadd.f32 %v2613, %v2631
        %2633 = vmatmul.bf16.gmra.mxu0 %v561
        %v2634 = vpop.f32.mrf.mxu0
        %v2635 = vadd.f32 %v2616, %v2634
        %v2636 = vpop.f32.mrf.mxu0
        %v2637 = vadd.f32 %v2618, %v2636
        %2638 = vdwg.mxu0
        %2639 = vmatpush.bf16.msra.mxu0 %v2552
        %2640 = vmatpush.bf16.msra.mxu0 %v2550
        %2641 = vmatpush.bf16.msra.mxu0 %v2548
        %2642 = vmatpush.bf16.msra.mxu0 %v2546
        %2643 = vmatpush.bf16.msra.mxu0 %v2544
        %2644 = vmatpush.bf16.msra.mxu0 %v2542
        %2645 = vmatpush.bf16.msra.mxu0 %v2540
        %2646 = vmatpush.bf16.msra.mxu0 %v2538
        %2647 = vmatmul.bf16.gmra.mxu0 %v558
        %v2648 = vpop.f32.mrf.mxu0
        %v2649 = vadd.f32 %v2438, %v2648
        %v2650 = vpop.f32.mrf.mxu0
        %v2651 = vadd.f32 %v2438, %v2650
        %2652 = vmatmul.bf16.gmra.mxu0 %v560
        %v2653 = vpop.f32.mrf.mxu0
        %v2654 = vadd.f32 %v2438, %v2653
        %v2655 = vpop.f32.mrf.mxu0
        %v2656 = vadd.f32 %v2438, %v2655
        %2657 = vdwg.mxu0
        %2658 = vmatpush.bf16.msra.mxu0 %v2568
        %2659 = vmatpush.bf16.msra.mxu0 %v2566
        %2660 = vmatpush.bf16.msra.mxu0 %v2564
        %2661 = vmatpush.bf16.msra.mxu0 %v2562
        %2662 = vmatpush.bf16.msra.mxu0 %v2560
        %2663 = vmatpush.bf16.msra.mxu0 %v2558
        %2664 = vmatpush.bf16.msra.mxu0 %v2556
        %2665 = vmatpush.bf16.msra.mxu0 %v2554
        %2666 = vmatmul.bf16.gmra.mxu0 %v559
        %v2667 = vpop.f32.mrf.mxu0
        %v2668 = vadd.f32 %v2649, %v2667
        %v2669 = vpop.f32.mrf.mxu0
        %v2670 = vadd.f32 %v2651, %v2669
        %2671 = vmatmul.bf16.gmra.mxu0 %v561
        %v2672 = vpop.f32.mrf.mxu0
        %v2673 = vadd.f32 %v2654, %v2672
        %v2674 = vpop.f32.mrf.mxu0
        %v2675 = vadd.f32 %v2656, %v2674
        %2676 = vdwg.mxu0
        %v2677 = vmax.f32 %v2630, 0.0
        %v2678 = vmax.f32 %v2668, 0.0
        %v2679 = vmax.f32 %v2632, 0.0
        %v2680 = vmax.f32 %v2670, 0.0
        %v2681 = vmax.f32 %v2635, 0.0
        %v2682 = vmax.f32 %v2673, 0.0
        %v2683 = vmax.f32 %v2637, 0.0
        %v2684 = vmax.f32 %v2675, 0.0
        %v2685 = vpack.c.bf16 %v2679, %v2677
        %v2686 = vpack.c.bf16 %v2680, %v2678
        %v2687 = vpack.c.bf16 %v2683, %v2681
        %v2688 = vpack.c.bf16 %v2684, %v2682
        %v2689 = vld [vmem:[#allocation8 + $0x80] sm:$0xf]
        %v2690 = vld [vmem:[#allocation8 + $0x84] sm:$0xf]
        %v2691 = vld [vmem:[#allocation8 + $0x88] sm:$0xf]
        %v2692 = vld [vmem:[#allocation8 + $0x8c] sm:$0xf]
        %v2693 = vld [vmem:[#allocation8 + $0x90] sm:$0xf]
        %v2694 = vld [vmem:[#allocation8 + $0x94] sm:$0xf]
        %v2695 = vld [vmem:[#allocation8 + $0x98] sm:$0xf]
        %v2696 = vld [vmem:[#allocation8 + $0x9c] sm:$0xf]
        %v2697 = vld [vmem:[#allocation8 + $0xa0] sm:$0xf]
        %v2698 = vld [vmem:[#allocation8 + $0xa4] sm:$0xf]
        %v2699 = vld [vmem:[#allocation8 + $0xa8] sm:$0xf]
        %v2700 = vld [vmem:[#allocation8 + $0xac] sm:$0xf]
        %v2701 = vld [vmem:[#allocation8 + $0xb0] sm:$0xf]
        %v2702 = vld [vmem:[#allocation8 + $0xb4] sm:$0xf]
        %v2703 = vld [vmem:[#allocation8 + $0xb8] sm:$0xf]
        %v2704 = vld [vmem:[#allocation8 + $0xbc] sm:$0xf]
        %v2705 = vld [vmem:[#allocation8 + $0xc0] sm:$0xf]
        %v2706 = vld [vmem:[#allocation8 + $0xc4] sm:$0xf]
        %v2707 = vld [vmem:[#allocation8 + $0xc8] sm:$0xf]
        %v2708 = vld [vmem:[#allocation8 + $0xcc] sm:$0xf]
        %v2709 = vld [vmem:[#allocation8 + $0xd0] sm:$0xf]
        %v2710 = vld [vmem:[#allocation8 + $0xd4] sm:$0xf]
        %v2711 = vld [vmem:[#allocation8 + $0xd8] sm:$0xf]
        %v2712 = vld [vmem:[#allocation8 + $0xdc] sm:$0xf]
        %v2713 = vld [vmem:[#allocation8 + $0xe0] sm:$0xf]
        %v2714 = vld [vmem:[#allocation8 + $0xe4] sm:$0xf]
        %v2715 = vld [vmem:[#allocation8 + $0xe8] sm:$0xf]
        %v2716 = vld [vmem:[#allocation8 + $0xec] sm:$0xf]
        %v2717 = vld [vmem:[#allocation8 + $0xf0] sm:$0xf]
        %v2718 = vld [vmem:[#allocation8 + $0xf4] sm:$0xf]
        %v2719 = vld [vmem:[#allocation8 + $0xf8] sm:$0xf]
        %v2720 = vld [vmem:[#allocation8 + $0xfc] sm:$0xf]
        %v2721 = vld [vmem:[#allocation11 + $0x1] sm:$0x1]
        %v2722 = vperm.slane %v2721, 0
        %v2755 = vunpack.c.l.b16 %v2689
        %v2756 = vunpack.c.l.b16 %v2690
        %v2757 = vunpack.c.l.b16 %v2691
        %v2758 = vunpack.c.l.b16 %v2692
        %v2759 = vunpack.c.l.b16 %v2693
        %v2760 = vunpack.c.l.b16 %v2694
        %v2761 = vunpack.c.l.b16 %v2695
        %v2762 = vunpack.c.l.b16 %v2696
        %v2763 = vunpack.c.l.b16 %v2697
        %v2764 = vunpack.c.l.b16 %v2698
        %v2765 = vunpack.c.l.b16 %v2699
        %v2766 = vunpack.c.l.b16 %v2700
        %v2767 = vunpack.c.l.b16 %v2701
        %v2768 = vunpack.c.l.b16 %v2702
        %v2769 = vunpack.c.l.b16 %v2703
        %v2770 = vunpack.c.l.b16 %v2704
        %v2771 = vunpack.c.l.b16 %v2705
        %v2772 = vunpack.c.l.b16 %v2706
        %v2773 = vunpack.c.l.b16 %v2707
        %v2774 = vunpack.c.l.b16 %v2708
        %v2775 = vunpack.c.l.b16 %v2709
        %v2776 = vunpack.c.l.b16 %v2710
        %v2777 = vunpack.c.l.b16 %v2711
        %v2778 = vunpack.c.l.b16 %v2712
        %v2779 = vunpack.c.l.b16 %v2713
        %v2780 = vunpack.c.l.b16 %v2714
        %v2781 = vunpack.c.l.b16 %v2715
        %v2782 = vunpack.c.l.b16 %v2716
        %v2783 = vunpack.c.l.b16 %v2717
        %v2784 = vunpack.c.l.b16 %v2718
        %v2785 = vunpack.c.l.b16 %v2719
        %v2786 = vunpack.c.l.b16 %v2720
        %v2787 = vpack.c.b16 %v2756, %v2755
        %v2788 = vpack.c.b16 %v2758, %v2757
        %v2789 = vpack.c.b16 %v2760, %v2759
        %v2790 = vpack.c.b16 %v2762, %v2761
        %v2791 = vpack.c.b16 %v2764, %v2763
        %v2792 = vpack.c.b16 %v2766, %v2765
        %v2793 = vpack.c.b16 %v2768, %v2767
        %v2794 = vpack.c.b16 %v2770, %v2769
        %v2795 = vpack.c.b16 %v2772, %v2771
        %v2796 = vpack.c.b16 %v2774, %v2773
        %v2797 = vpack.c.b16 %v2776, %v2775
        %v2798 = vpack.c.b16 %v2778, %v2777
        %v2799 = vpack.c.b16 %v2780, %v2779
        %v2800 = vpack.c.b16 %v2782, %v2781
        %v2801 = vpack.c.b16 %v2784, %v2783
        %v2802 = vpack.c.b16 %v2786, %v2785
        %2819 = vmatpush.bf16.msra.mxu0 %v2794
        %2820 = vmatpush.bf16.msra.mxu0 %v2793
        %2821 = vmatpush.bf16.msra.mxu0 %v2792
        %2822 = vmatpush.bf16.msra.mxu0 %v2791
        %2823 = vmatpush.bf16.msra.mxu0 %v2790
        %2824 = vmatpush.bf16.msra.mxu0 %v2789
        %2825 = vmatpush.bf16.msra.mxu0 %v2788
        %2826 = vmatpush.bf16.msra.mxu0 %v2787
        %2827 = vmatmul.bf16.gmra.mxu0 %v2685
        %v2828 = vpop.f32.mrf.mxu0
        %v2829 = vadd.f32 %v2722, %v2828
        %v2830 = vpop.f32.mrf.mxu0
        %v2831 = vadd.f32 %v2722, %v2830
        %2832 = vmatmul.bf16.gmra.mxu0 %v2687
        %v2833 = vpop.f32.mrf.mxu0
        %v2834 = vadd.f32 %v2722, %v2833
        %v2835 = vpop.f32.mrf.mxu0
        %v2836 = vadd.f32 %v2722, %v2835
        %2837 = vdwg.mxu0
        %2838 = vmatpush.bf16.msra.mxu0 %v2802
        %2839 = vmatpush.bf16.msra.mxu0 %v2801
        %2840 = vmatpush.bf16.msra.mxu0 %v2800
        %2841 = vmatpush.bf16.msra.mxu0 %v2799
        %2842 = vmatpush.bf16.msra.mxu0 %v2798
        %2843 = vmatpush.bf16.msra.mxu0 %v2797
        %2844 = vmatpush.bf16.msra.mxu0 %v2796
        %2845 = vmatpush.bf16.msra.mxu0 %v2795
        %2846 = vmatmul.bf16.gmra.mxu0 %v2686
        %v2847 = vpop.f32.mrf.mxu0
        %v2848 = vadd.f32 %v2829, %v2847
        %v2849 = vpop.f32.mrf.mxu0
        %v2850 = vadd.f32 %v2831, %v2849
        %2851 = vmatmul.bf16.gmra.mxu0 %v2688
        %v2852 = vpop.f32.mrf.mxu0
        %v2853 = vadd.f32 %v2834, %v2852
        %v2854 = vpop.f32.mrf.mxu0
        %v2855 = vadd.f32 %v2836, %v2854
        %2856 = vdwg.mxu0
        %v2857 = vpack.c.bf16 %v2848, %v2848
        %v2858 = vpack.c.bf16 %v2850, %v2850
        %v2859 = vpack.c.bf16 %v2853, %v2853
        %v2860 = vpack.c.bf16 %v2855, %v2855
        %2861 = vst [vmem:[%s436] sm:$0xf] %v2857
        %2862 = vst [vmem:[%s436 + $0x4] sm:$0xf] %v2858
        %2863 = vst [vmem:[%s436 + $0x8] sm:$0xf] %v2859
        %2864 = vst [vmem:[%s436 + $0xc] sm:$0xf] %v2860
        %v2869 = vunpack.c.l.b16 %v2394
        %v2870 = vunpack.c.l.b16 %v2395
        %v2871 = vunpack.c.l.b16 %v2396
        %v2872 = vunpack.c.l.b16 %v2397
        %v2873 = vpack.c.b16 %v2870, %v2869
        %v2874 = vpack.c.b16 %v2872, %v2871
        %v2881 = vunpack.c.l.b16 %v2857
        %v2882 = vunpack.c.l.b16 %v2858
        %v2883 = vunpack.c.l.b16 %v2859
        %v2884 = vunpack.c.l.b16 %v2860
        %v2885 = vpack.c.b16 %v2882, %v2881
        %v2886 = vpack.c.b16 %v2884, %v2883
        %v2889 = vld [vmem:[#allocation7 + $0x700] sm:$0xff]
        %v2890 = vld [vmem:[#allocation7 + $0x708] sm:$0xff]
        %v2891 = vld [vmem:[#allocation7 + $0x710] sm:$0xff]
        %v2892 = vld [vmem:[#allocation7 + $0x718] sm:$0xff]
        %v2893 = vld [vmem:[#allocation7 + $0x720] sm:$0xff]
        %v2894 = vld [vmem:[#allocation7 + $0x728] sm:$0xff]
        %v2895 = vld [vmem:[#allocation7 + $0x730] sm:$0xff]
        %v2896 = vld [vmem:[#allocation7 + $0x738] sm:$0xff]
        %v2897 = vld [vmem:[#allocation7 + $0x740] sm:$0xff]
        %v2898 = vld [vmem:[#allocation7 + $0x748] sm:$0xff]
        %v2899 = vld [vmem:[#allocation7 + $0x750] sm:$0xff]
        %v2900 = vld [vmem:[#allocation7 + $0x758] sm:$0xff]
        %v2901 = vld [vmem:[#allocation7 + $0x760] sm:$0xff]
        %v2902 = vld [vmem:[#allocation7 + $0x768] sm:$0xff]
        %v2903 = vld [vmem:[#allocation7 + $0x770] sm:$0xff]
        %v2904 = vld [vmem:[#allocation7 + $0x778] sm:$0xff]
        %v2905 = vld [vmem:[#allocation7 + $0x780] sm:$0xff]
        %v2906 = vld [vmem:[#allocation7 + $0x788] sm:$0xff]
        %v2907 = vld [vmem:[#allocation7 + $0x790] sm:$0xff]
        %v2908 = vld [vmem:[#allocation7 + $0x798] sm:$0xff]
        %v2909 = vld [vmem:[#allocation7 + $0x7a0] sm:$0xff]
        %v2910 = vld [vmem:[#allocation7 + $0x7a8] sm:$0xff]
        %v2911 = vld [vmem:[#allocation7 + $0x7b0] sm:$0xff]
        %v2912 = vld [vmem:[#allocation7 + $0x7b8] sm:$0xff]
        %v2913 = vld [vmem:[#allocation7 + $0x7c0] sm:$0xff]
        %v2914 = vld [vmem:[#allocation7 + $0x7c8] sm:$0xff]
        %v2915 = vld [vmem:[#allocation7 + $0x7d0] sm:$0xff]
        %v2916 = vld [vmem:[#allocation7 + $0x7d8] sm:$0xff]
        %v2917 = vld [vmem:[#allocation7 + $0x7e0] sm:$0xff]
        %v2918 = vld [vmem:[#allocation7 + $0x7e8] sm:$0xff]
        %v2919 = vld [vmem:[#allocation7 + $0x7f0] sm:$0xff]
        %v2920 = vld [vmem:[#allocation7 + $0x7f8] sm:$0xff]
        %s2921 = scalar_lea.vmem [#allocation10], 4
        %v2922 = vld [vmem:[%s2921] ss:$8 sm:$0x3]
        %v2924 = vperm.slane %v2922, 0
        %v2925 = vperm.slane %v2922, 1
        %v2960 = vunpack.c.l.b16 %v2889
        %v2961 = vunpack.c.h.b16 %v2889
        %v2962 = vunpack.c.l.b16 %v2890
        %v2963 = vunpack.c.h.b16 %v2890
        %v2964 = vunpack.c.l.b16 %v2891
        %v2965 = vunpack.c.h.b16 %v2891
        %v2966 = vunpack.c.l.b16 %v2892
        %v2967 = vunpack.c.h.b16 %v2892
        %v2968 = vunpack.c.l.b16 %v2893
        %v2969 = vunpack.c.h.b16 %v2893
        %v2970 = vunpack.c.l.b16 %v2894
        %v2971 = vunpack.c.h.b16 %v2894
        %v2972 = vunpack.c.l.b16 %v2895
        %v2973 = vunpack.c.h.b16 %v2895
        %v2974 = vunpack.c.l.b16 %v2896
        %v2975 = vunpack.c.h.b16 %v2896
        %v2976 = vunpack.c.l.b16 %v2897
        %v2977 = vunpack.c.h.b16 %v2897
        %v2978 = vunpack.c.l.b16 %v2898
        %v2979 = vunpack.c.h.b16 %v2898
        %v2980 = vunpack.c.l.b16 %v2899
        %v2981 = vunpack.c.h.b16 %v2899
        %v2982 = vunpack.c.l.b16 %v2900
        %v2983 = vunpack.c.h.b16 %v2900
        %v2984 = vunpack.c.l.b16 %v2901
        %v2985 = vunpack.c.h.b16 %v2901
        %v2986 = vunpack.c.l.b16 %v2902
        %v2987 = vunpack.c.h.b16 %v2902
        %v2988 = vunpack.c.l.b16 %v2903
        %v2989 = vunpack.c.h.b16 %v2903
        %v2990 = vunpack.c.l.b16 %v2904
        %v2991 = vunpack.c.h.b16 %v2904
        %v2992 = vunpack.c.l.b16 %v2905
        %v2993 = vunpack.c.h.b16 %v2905
        %v2994 = vunpack.c.l.b16 %v2906
        %v2995 = vunpack.c.h.b16 %v2906
        %v2996 = vunpack.c.l.b16 %v2907
        %v2997 = vunpack.c.h.b16 %v2907
        %v2998 = vunpack.c.l.b16 %v2908
        %v2999 = vunpack.c.h.b16 %v2908
        %v3000 = vunpack.c.l.b16 %v2909
        %v3001 = vunpack.c.h.b16 %v2909
        %v3002 = vunpack.c.l.b16 %v2910
        %v3003 = vunpack.c.h.b16 %v2910
        %v3004 = vunpack.c.l.b16 %v2911
        %v3005 = vunpack.c.h.b16 %v2911
        %v3006 = vunpack.c.l.b16 %v2912
        %v3007 = vunpack.c.h.b16 %v2912
        %v3008 = vunpack.c.l.b16 %v2913
        %v3009 = vunpack.c.h.b16 %v2913
        %v3010 = vunpack.c.l.b16 %v2914
        %v3011 = vunpack.c.h.b16 %v2914
        %v3012 = vunpack.c.l.b16 %v2915
        %v3013 = vunpack.c.h.b16 %v2915
        %v3014 = vunpack.c.l.b16 %v2916
        %v3015 = vunpack.c.h.b16 %v2916
        %v3016 = vunpack.c.l.b16 %v2917
        %v3017 = vunpack.c.h.b16 %v2917
        %v3018 = vunpack.c.l.b16 %v2918
        %v3019 = vunpack.c.h.b16 %v2918
        %v3020 = vunpack.c.l.b16 %v2919
        %v3021 = vunpack.c.h.b16 %v2919
        %v3022 = vunpack.c.l.b16 %v2920
        %v3023 = vunpack.c.h.b16 %v2920
        %v3024 = vpack.c.b16 %v2962, %v2960
        %v3025 = vpack.c.b16 %v2963, %v2961
        %v3026 = vpack.c.b16 %v2966, %v2964
        %v3027 = vpack.c.b16 %v2967, %v2965
        %v3028 = vpack.c.b16 %v2970, %v2968
        %v3029 = vpack.c.b16 %v2971, %v2969
        %v3030 = vpack.c.b16 %v2974, %v2972
        %v3031 = vpack.c.b16 %v2975, %v2973
        %v3032 = vpack.c.b16 %v2978, %v2976
        %v3033 = vpack.c.b16 %v2979, %v2977
        %v3034 = vpack.c.b16 %v2982, %v2980
        %v3035 = vpack.c.b16 %v2983, %v2981
        %v3036 = vpack.c.b16 %v2986, %v2984
        %v3037 = vpack.c.b16 %v2987, %v2985
        %v3038 = vpack.c.b16 %v2990, %v2988
        %v3039 = vpack.c.b16 %v2991, %v2989
        %v3040 = vpack.c.b16 %v2994, %v2992
        %v3041 = vpack.c.b16 %v2995, %v2993
        %v3042 = vpack.c.b16 %v2998, %v2996
        %v3043 = vpack.c.b16 %v2999, %v2997
        %v3044 = vpack.c.b16 %v3002, %v3000
        %v3045 = vpack.c.b16 %v3003, %v3001
        %v3046 = vpack.c.b16 %v3006, %v3004
        %v3047 = vpack.c.b16 %v3007, %v3005
        %v3048 = vpack.c.b16 %v3010, %v3008
        %v3049 = vpack.c.b16 %v3011, %v3009
        %v3050 = vpack.c.b16 %v3014, %v3012
        %v3051 = vpack.c.b16 %v3015, %v3013
        %v3052 = vpack.c.b16 %v3018, %v3016
        %v3053 = vpack.c.b16 %v3019, %v3017
        %v3054 = vpack.c.b16 %v3022, %v3020
        %v3055 = vpack.c.b16 %v3023, %v3021
        %3088 = vmatpush.bf16.msra.mxu0 %v3038
        %3089 = vmatpush.bf16.msra.mxu0 %v3036
        %3090 = vmatpush.bf16.msra.mxu0 %v3034
        %3091 = vmatpush.bf16.msra.mxu0 %v3032
        %3092 = vmatpush.bf16.msra.mxu0 %v3030
        %3093 = vmatpush.bf16.msra.mxu0 %v3028
        %3094 = vmatpush.bf16.msra.mxu0 %v3026
        %3095 = vmatpush.bf16.msra.mxu0 %v3024
        %3096 = vmatmul.bf16.gmra.mxu0 %v2873
        %v3097 = vpop.f32.mrf.mxu0
        %v3098 = vadd.f32 %v2924, %v3097
        %v3099 = vpop.f32.mrf.mxu0
        %v3100 = vadd.f32 %v2924, %v3099
        %3101 = vmatmul.bf16.gmra.mxu0 %v2874
        %v3102 = vpop.f32.mrf.mxu0
        %v3103 = vadd.f32 %v2924, %v3102
        %v3104 = vpop.f32.mrf.mxu0
        %v3105 = vadd.f32 %v2924, %v3104
        %3106 = vdwg.mxu0
        %3107 = vmatpush.bf16.msra.mxu0 %v3054
        %3108 = vmatpush.bf16.msra.mxu0 %v3052
        %3109 = vmatpush.bf16.msra.mxu0 %v3050
        %3110 = vmatpush.bf16.msra.mxu0 %v3048
        %3111 = vmatpush.bf16.msra.mxu0 %v3046
        %3112 = vmatpush.bf16.msra.mxu0 %v3044
        %3113 = vmatpush.bf16.msra.mxu0 %v3042
        %3114 = vmatpush.bf16.msra.mxu0 %v3040
        %3115 = vmatmul.bf16.gmra.mxu0 %v2885
        %v3116 = vpop.f32.mrf.mxu0
        %v3117 = vadd.f32 %v3098, %v3116
        %v3118 = vpop.f32.mrf.mxu0
        %v3119 = vadd.f32 %v3100, %v3118
        %3120 = vmatmul.bf16.gmra.mxu0 %v2886
        %v3121 = vpop.f32.mrf.mxu0
        %v3122 = vadd.f32 %v3103, %v3121
        %v3123 = vpop.f32.mrf.mxu0
        %v3124 = vadd.f32 %v3105, %v3123
        %3125 = vdwg.mxu0
        %3126 = vmatpush.bf16.msra.mxu0 %v3039
        %3127 = vmatpush.bf16.msra.mxu0 %v3037
        %3128 = vmatpush.bf16.msra.mxu0 %v3035
        %3129 = vmatpush.bf16.msra.mxu0 %v3033
        %3130 = vmatpush.bf16.msra.mxu0 %v3031
        %3131 = vmatpush.bf16.msra.mxu0 %v3029
        %3132 = vmatpush.bf16.msra.mxu0 %v3027
        %3133 = vmatpush.bf16.msra.mxu0 %v3025
        %3134 = vmatmul.bf16.gmra.mxu0 %v2873
        %v3135 = vpop.f32.mrf.mxu0
        %v3136 = vadd.f32 %v2925, %v3135
        %v3137 = vpop.f32.mrf.mxu0
        %v3138 = vadd.f32 %v2925, %v3137
        %3139 = vmatmul.bf16.gmra.mxu0 %v2874
        %v3140 = vpop.f32.mrf.mxu0
        %v3141 = vadd.f32 %v2925, %v3140
        %v3142 = vpop.f32.mrf.mxu0
        %v3143 = vadd.f32 %v2925, %v3142
        %3144 = vdwg.mxu0
        %3145 = vmatpush.bf16.msra.mxu0 %v3055
        %3146 = vmatpush.bf16.msra.mxu0 %v3053
        %3147 = vmatpush.bf16.msra.mxu0 %v3051
        %3148 = vmatpush.bf16.msra.mxu0 %v3049
        %3149 = vmatpush.bf16.msra.mxu0 %v3047
        %3150 = vmatpush.bf16.msra.mxu0 %v3045
        %3151 = vmatpush.bf16.msra.mxu0 %v3043
        %3152 = vmatpush.bf16.msra.mxu0 %v3041
        %3153 = vmatmul.bf16.gmra.mxu0 %v2885
        %v3154 = vpop.f32.mrf.mxu0
        %v3155 = vadd.f32 %v3136, %v3154
        %v3156 = vpop.f32.mrf.mxu0
        %v3157 = vadd.f32 %v3138, %v3156
        %3158 = vmatmul.bf16.gmra.mxu0 %v2886
        %v3159 = vpop.f32.mrf.mxu0
        %v3160 = vadd.f32 %v3141, %v3159
        %v3161 = vpop.f32.mrf.mxu0
        %v3162 = vadd.f32 %v3143, %v3161
        %3163 = vdwg.mxu0
        %v3164 = vmax.f32 %v3117, 0.0
        %v3165 = vmax.f32 %v3155, 0.0
        %v3166 = vmax.f32 %v3119, 0.0
        %v3167 = vmax.f32 %v3157, 0.0
        %v3168 = vmax.f32 %v3122, 0.0
        %v3169 = vmax.f32 %v3160, 0.0
        %v3170 = vmax.f32 %v3124, 0.0
        %v3171 = vmax.f32 %v3162, 0.0
        %v3172 = vpack.c.bf16 %v3166, %v3164
        %v3173 = vpack.c.bf16 %v3167, %v3165
        %v3174 = vpack.c.bf16 %v3170, %v3168
        %v3175 = vpack.c.bf16 %v3171, %v3169
        %v3176 = vld [vmem:[#allocation7 + $0x800] sm:$0xff]
        %v3177 = vld [vmem:[#allocation7 + $0x808] sm:$0xff]
        %v3178 = vld [vmem:[#allocation7 + $0x810] sm:$0xff]
        %v3179 = vld [vmem:[#allocation7 + $0x818] sm:$0xff]
        %v3180 = vld [vmem:[#allocation7 + $0x820] sm:$0xff]
        %v3181 = vld [vmem:[#allocation7 + $0x828] sm:$0xff]
        %v3182 = vld [vmem:[#allocation7 + $0x830] sm:$0xff]
        %v3183 = vld [vmem:[#allocation7 + $0x838] sm:$0xff]
        %v3184 = vld [vmem:[#allocation7 + $0x840] sm:$0xff]
        %v3185 = vld [vmem:[#allocation7 + $0x848] sm:$0xff]
        %v3186 = vld [vmem:[#allocation7 + $0x850] sm:$0xff]
        %v3187 = vld [vmem:[#allocation7 + $0x858] sm:$0xff]
        %v3188 = vld [vmem:[#allocation7 + $0x860] sm:$0xff]
        %v3189 = vld [vmem:[#allocation7 + $0x868] sm:$0xff]
        %v3190 = vld [vmem:[#allocation7 + $0x870] sm:$0xff]
        %v3191 = vld [vmem:[#allocation7 + $0x878] sm:$0xff]
        %v3192 = vld [vmem:[#allocation7 + $0x880] sm:$0xff]
        %v3193 = vld [vmem:[#allocation7 + $0x888] sm:$0xff]
        %v3194 = vld [vmem:[#allocation7 + $0x890] sm:$0xff]
        %v3195 = vld [vmem:[#allocation7 + $0x898] sm:$0xff]
        %v3196 = vld [vmem:[#allocation7 + $0x8a0] sm:$0xff]
        %v3197 = vld [vmem:[#allocation7 + $0x8a8] sm:$0xff]
        %v3198 = vld [vmem:[#allocation7 + $0x8b0] sm:$0xff]
        %v3199 = vld [vmem:[#allocation7 + $0x8b8] sm:$0xff]
        %v3200 = vld [vmem:[#allocation7 + $0x8c0] sm:$0xff]
        %v3201 = vld [vmem:[#allocation7 + $0x8c8] sm:$0xff]
        %v3202 = vld [vmem:[#allocation7 + $0x8d0] sm:$0xff]
        %v3203 = vld [vmem:[#allocation7 + $0x8d8] sm:$0xff]
        %v3204 = vld [vmem:[#allocation7 + $0x8e0] sm:$0xff]
        %v3205 = vld [vmem:[#allocation7 + $0x8e8] sm:$0xff]
        %v3206 = vld [vmem:[#allocation7 + $0x8f0] sm:$0xff]
        %v3207 = vld [vmem:[#allocation7 + $0x8f8] sm:$0xff]
        %s3208 = scalar_lea.vmem [#allocation10], 5
        %v3209 = vld [vmem:[%s3208] ss:$8 sm:$0x3]
        %v3211 = vperm.slane %v3209, 0
        %v3212 = vperm.slane %v3209, 1
        %v3247 = vunpack.c.l.b16 %v3176
        %v3248 = vunpack.c.h.b16 %v3176
        %v3249 = vunpack.c.l.b16 %v3177
        %v3250 = vunpack.c.h.b16 %v3177
        %v3251 = vunpack.c.l.b16 %v3178
        %v3252 = vunpack.c.h.b16 %v3178
        %v3253 = vunpack.c.l.b16 %v3179
        %v3254 = vunpack.c.h.b16 %v3179
        %v3255 = vunpack.c.l.b16 %v3180
        %v3256 = vunpack.c.h.b16 %v3180
        %v3257 = vunpack.c.l.b16 %v3181
        %v3258 = vunpack.c.h.b16 %v3181
        %v3259 = vunpack.c.l.b16 %v3182
        %v3260 = vunpack.c.h.b16 %v3182
        %v3261 = vunpack.c.l.b16 %v3183
        %v3262 = vunpack.c.h.b16 %v3183
        %v3263 = vunpack.c.l.b16 %v3184
        %v3264 = vunpack.c.h.b16 %v3184
        %v3265 = vunpack.c.l.b16 %v3185
        %v3266 = vunpack.c.h.b16 %v3185
        %v3267 = vunpack.c.l.b16 %v3186
        %v3268 = vunpack.c.h.b16 %v3186
        %v3269 = vunpack.c.l.b16 %v3187
        %v3270 = vunpack.c.h.b16 %v3187
        %v3271 = vunpack.c.l.b16 %v3188
        %v3272 = vunpack.c.h.b16 %v3188
        %v3273 = vunpack.c.l.b16 %v3189
        %v3274 = vunpack.c.h.b16 %v3189
        %v3275 = vunpack.c.l.b16 %v3190
        %v3276 = vunpack.c.h.b16 %v3190
        %v3277 = vunpack.c.l.b16 %v3191
        %v3278 = vunpack.c.h.b16 %v3191
        %v3279 = vunpack.c.l.b16 %v3192
        %v3280 = vunpack.c.h.b16 %v3192
        %v3281 = vunpack.c.l.b16 %v3193
        %v3282 = vunpack.c.h.b16 %v3193
        %v3283 = vunpack.c.l.b16 %v3194
        %v3284 = vunpack.c.h.b16 %v3194
        %v3285 = vunpack.c.l.b16 %v3195
        %v3286 = vunpack.c.h.b16 %v3195
        %v3287 = vunpack.c.l.b16 %v3196
        %v3288 = vunpack.c.h.b16 %v3196
        %v3289 = vunpack.c.l.b16 %v3197
        %v3290 = vunpack.c.h.b16 %v3197
        %v3291 = vunpack.c.l.b16 %v3198
        %v3292 = vunpack.c.h.b16 %v3198
        %v3293 = vunpack.c.l.b16 %v3199
        %v3294 = vunpack.c.h.b16 %v3199
        %v3295 = vunpack.c.l.b16 %v3200
        %v3296 = vunpack.c.h.b16 %v3200
        %v3297 = vunpack.c.l.b16 %v3201
        %v3298 = vunpack.c.h.b16 %v3201
        %v3299 = vunpack.c.l.b16 %v3202
        %v3300 = vunpack.c.h.b16 %v3202
        %v3301 = vunpack.c.l.b16 %v3203
        %v3302 = vunpack.c.h.b16 %v3203
        %v3303 = vunpack.c.l.b16 %v3204
        %v3304 = vunpack.c.h.b16 %v3204
        %v3305 = vunpack.c.l.b16 %v3205
        %v3306 = vunpack.c.h.b16 %v3205
        %v3307 = vunpack.c.l.b16 %v3206
        %v3308 = vunpack.c.h.b16 %v3206
        %v3309 = vunpack.c.l.b16 %v3207
        %v3310 = vunpack.c.h.b16 %v3207
        %v3311 = vpack.c.b16 %v3249, %v3247
        %v3312 = vpack.c.b16 %v3250, %v3248
        %v3313 = vpack.c.b16 %v3253, %v3251
        %v3314 = vpack.c.b16 %v3254, %v3252
        %v3315 = vpack.c.b16 %v3257, %v3255
        %v3316 = vpack.c.b16 %v3258, %v3256
        %v3317 = vpack.c.b16 %v3261, %v3259
        %v3318 = vpack.c.b16 %v3262, %v3260
        %v3319 = vpack.c.b16 %v3265, %v3263
        %v3320 = vpack.c.b16 %v3266, %v3264
        %v3321 = vpack.c.b16 %v3269, %v3267
        %v3322 = vpack.c.b16 %v3270, %v3268
        %v3323 = vpack.c.b16 %v3273, %v3271
        %v3324 = vpack.c.b16 %v3274, %v3272
        %v3325 = vpack.c.b16 %v3277, %v3275
        %v3326 = vpack.c.b16 %v3278, %v3276
        %v3327 = vpack.c.b16 %v3281, %v3279
        %v3328 = vpack.c.b16 %v3282, %v3280
        %v3329 = vpack.c.b16 %v3285, %v3283
        %v3330 = vpack.c.b16 %v3286, %v3284
        %v3331 = vpack.c.b16 %v3289, %v3287
        %v3332 = vpack.c.b16 %v3290, %v3288
        %v3333 = vpack.c.b16 %v3293, %v3291
        %v3334 = vpack.c.b16 %v3294, %v3292
        %v3335 = vpack.c.b16 %v3297, %v3295
        %v3336 = vpack.c.b16 %v3298, %v3296
        %v3337 = vpack.c.b16 %v3301, %v3299
        %v3338 = vpack.c.b16 %v3302, %v3300
        %v3339 = vpack.c.b16 %v3305, %v3303
        %v3340 = vpack.c.b16 %v3306, %v3304
        %v3341 = vpack.c.b16 %v3309, %v3307
        %v3342 = vpack.c.b16 %v3310, %v3308
        %3375 = vmatpush.bf16.msra.mxu0 %v3325
        %3376 = vmatpush.bf16.msra.mxu0 %v3323
        %3377 = vmatpush.bf16.msra.mxu0 %v3321
        %3378 = vmatpush.bf16.msra.mxu0 %v3319
        %3379 = vmatpush.bf16.msra.mxu0 %v3317
        %3380 = vmatpush.bf16.msra.mxu0 %v3315
        %3381 = vmatpush.bf16.msra.mxu0 %v3313
        %3382 = vmatpush.bf16.msra.mxu0 %v3311
        %3383 = vmatmul.bf16.gmra.mxu0 %v3172
        %v3384 = vpop.f32.mrf.mxu0
        %v3385 = vadd.f32 %v3211, %v3384
        %v3386 = vpop.f32.mrf.mxu0
        %v3387 = vadd.f32 %v3211, %v3386
        %3388 = vmatmul.bf16.gmra.mxu0 %v3174
        %v3389 = vpop.f32.mrf.mxu0
        %v3390 = vadd.f32 %v3211, %v3389
        %v3391 = vpop.f32.mrf.mxu0
        %v3392 = vadd.f32 %v3211, %v3391
        %3393 = vdwg.mxu0
        %3394 = vmatpush.bf16.msra.mxu0 %v3341
        %3395 = vmatpush.bf16.msra.mxu0 %v3339
        %3396 = vmatpush.bf16.msra.mxu0 %v3337
        %3397 = vmatpush.bf16.msra.mxu0 %v3335
        %3398 = vmatpush.bf16.msra.mxu0 %v3333
        %3399 = vmatpush.bf16.msra.mxu0 %v3331
        %3400 = vmatpush.bf16.msra.mxu0 %v3329
        %3401 = vmatpush.bf16.msra.mxu0 %v3327
        %3402 = vmatmul.bf16.gmra.mxu0 %v3173
        %v3403 = vpop.f32.mrf.mxu0
        %v3404 = vadd.f32 %v3385, %v3403
        %v3405 = vpop.f32.mrf.mxu0
        %v3406 = vadd.f32 %v3387, %v3405
        %3407 = vmatmul.bf16.gmra.mxu0 %v3175
        %v3408 = vpop.f32.mrf.mxu0
        %v3409 = vadd.f32 %v3390, %v3408
        %v3410 = vpop.f32.mrf.mxu0
        %v3411 = vadd.f32 %v3392, %v3410
        %3412 = vdwg.mxu0
        %3413 = vmatpush.bf16.msra.mxu0 %v3326
        %3414 = vmatpush.bf16.msra.mxu0 %v3324
        %3415 = vmatpush.bf16.msra.mxu0 %v3322
        %3416 = vmatpush.bf16.msra.mxu0 %v3320
        %3417 = vmatpush.bf16.msra.mxu0 %v3318
        %3418 = vmatpush.bf16.msra.mxu0 %v3316
        %3419 = vmatpush.bf16.msra.mxu0 %v3314
        %3420 = vmatpush.bf16.msra.mxu0 %v3312
        %3421 = vmatmul.bf16.gmra.mxu0 %v3172
        %v3422 = vpop.f32.mrf.mxu0
        %v3423 = vadd.f32 %v3212, %v3422
        %v3424 = vpop.f32.mrf.mxu0
        %v3425 = vadd.f32 %v3212, %v3424
        %3426 = vmatmul.bf16.gmra.mxu0 %v3174
        %v3427 = vpop.f32.mrf.mxu0
        %v3428 = vadd.f32 %v3212, %v3427
        %v3429 = vpop.f32.mrf.mxu0
        %v3430 = vadd.f32 %v3212, %v3429
        %3431 = vdwg.mxu0
        %3432 = vmatpush.bf16.msra.mxu0 %v3342
        %3433 = vmatpush.bf16.msra.mxu0 %v3340
        %3434 = vmatpush.bf16.msra.mxu0 %v3338
        %3435 = vmatpush.bf16.msra.mxu0 %v3336
        %3436 = vmatpush.bf16.msra.mxu0 %v3334
        %3437 = vmatpush.bf16.msra.mxu0 %v3332
        %3438 = vmatpush.bf16.msra.mxu0 %v3330
        %3439 = vmatpush.bf16.msra.mxu0 %v3328
        %3440 = vmatmul.bf16.gmra.mxu0 %v3173
        %v3441 = vpop.f32.mrf.mxu0
        %v3442 = vadd.f32 %v3423, %v3441
        %v3443 = vpop.f32.mrf.mxu0
        %v3444 = vadd.f32 %v3425, %v3443
        %3445 = vmatmul.bf16.gmra.mxu0 %v3175
        %v3446 = vpop.f32.mrf.mxu0
        %v3447 = vadd.f32 %v3428, %v3446
        %v3448 = vpop.f32.mrf.mxu0
        %v3449 = vadd.f32 %v3430, %v3448
        %3450 = vdwg.mxu0
        %v3451 = vmax.f32 %v3404, 0.0
        %v3452 = vmax.f32 %v3442, 0.0
        %v3453 = vmax.f32 %v3406, 0.0
        %v3454 = vmax.f32 %v3444, 0.0
        %v3455 = vmax.f32 %v3409, 0.0
        %v3456 = vmax.f32 %v3447, 0.0
        %v3457 = vmax.f32 %v3411, 0.0
        %v3458 = vmax.f32 %v3449, 0.0
        %v3459 = vpack.c.bf16 %v3453, %v3451
        %v3460 = vpack.c.bf16 %v3454, %v3452
        %v3461 = vpack.c.bf16 %v3457, %v3455
        %v3462 = vpack.c.bf16 %v3458, %v3456
        %v3463 = vld [vmem:[#allocation8 + $0x100] sm:$0xf]
        %v3464 = vld [vmem:[#allocation8 + $0x104] sm:$0xf]
        %v3465 = vld [vmem:[#allocation8 + $0x108] sm:$0xf]
        %v3466 = vld [vmem:[#allocation8 + $0x10c] sm:$0xf]
        %v3467 = vld [vmem:[#allocation8 + $0x110] sm:$0xf]
        %v3468 = vld [vmem:[#allocation8 + $0x114] sm:$0xf]
        %v3469 = vld [vmem:[#allocation8 + $0x118] sm:$0xf]
        %v3470 = vld [vmem:[#allocation8 + $0x11c] sm:$0xf]
        %v3471 = vld [vmem:[#allocation8 + $0x120] sm:$0xf]
        %v3472 = vld [vmem:[#allocation8 + $0x124] sm:$0xf]
        %v3473 = vld [vmem:[#allocation8 + $0x128] sm:$0xf]
        %v3474 = vld [vmem:[#allocation8 + $0x12c] sm:$0xf]
        %v3475 = vld [vmem:[#allocation8 + $0x130] sm:$0xf]
        %v3476 = vld [vmem:[#allocation8 + $0x134] sm:$0xf]
        %v3477 = vld [vmem:[#allocation8 + $0x138] sm:$0xf]
        %v3478 = vld [vmem:[#allocation8 + $0x13c] sm:$0xf]
        %v3479 = vld [vmem:[#allocation8 + $0x140] sm:$0xf]
        %v3480 = vld [vmem:[#allocation8 + $0x144] sm:$0xf]
        %v3481 = vld [vmem:[#allocation8 + $0x148] sm:$0xf]
        %v3482 = vld [vmem:[#allocation8 + $0x14c] sm:$0xf]
        %v3483 = vld [vmem:[#allocation8 + $0x150] sm:$0xf]
        %v3484 = vld [vmem:[#allocation8 + $0x154] sm:$0xf]
        %v3485 = vld [vmem:[#allocation8 + $0x158] sm:$0xf]
        %v3486 = vld [vmem:[#allocation8 + $0x15c] sm:$0xf]
        %v3487 = vld [vmem:[#allocation8 + $0x160] sm:$0xf]
        %v3488 = vld [vmem:[#allocation8 + $0x164] sm:$0xf]
        %v3489 = vld [vmem:[#allocation8 + $0x168] sm:$0xf]
        %v3490 = vld [vmem:[#allocation8 + $0x16c] sm:$0xf]
        %v3491 = vld [vmem:[#allocation8 + $0x170] sm:$0xf]
        %v3492 = vld [vmem:[#allocation8 + $0x174] sm:$0xf]
        %v3493 = vld [vmem:[#allocation8 + $0x178] sm:$0xf]
        %v3494 = vld [vmem:[#allocation8 + $0x17c] sm:$0xf]
        %v3495 = vld [vmem:[#allocation11 + $0x2] sm:$0x1]
        %v3496 = vperm.slane %v3495, 0
        %v3529 = vunpack.c.l.b16 %v3463
        %v3530 = vunpack.c.l.b16 %v3464
        %v3531 = vunpack.c.l.b16 %v3465
        %v3532 = vunpack.c.l.b16 %v3466
        %v3533 = vunpack.c.l.b16 %v3467
        %v3534 = vunpack.c.l.b16 %v3468
        %v3535 = vunpack.c.l.b16 %v3469
        %v3536 = vunpack.c.l.b16 %v3470
        %v3537 = vunpack.c.l.b16 %v3471
        %v3538 = vunpack.c.l.b16 %v3472
        %v3539 = vunpack.c.l.b16 %v3473
        %v3540 = vunpack.c.l.b16 %v3474
        %v3541 = vunpack.c.l.b16 %v3475
        %v3542 = vunpack.c.l.b16 %v3476
        %v3543 = vunpack.c.l.b16 %v3477
        %v3544 = vunpack.c.l.b16 %v3478
        %v3545 = vunpack.c.l.b16 %v3479
        %v3546 = vunpack.c.l.b16 %v3480
        %v3547 = vunpack.c.l.b16 %v3481
        %v3548 = vunpack.c.l.b16 %v3482
        %v3549 = vunpack.c.l.b16 %v3483
        %v3550 = vunpack.c.l.b16 %v3484
        %v3551 = vunpack.c.l.b16 %v3485
        %v3552 = vunpack.c.l.b16 %v3486
        %v3553 = vunpack.c.l.b16 %v3487
        %v3554 = vunpack.c.l.b16 %v3488
        %v3555 = vunpack.c.l.b16 %v3489
        %v3556 = vunpack.c.l.b16 %v3490
        %v3557 = vunpack.c.l.b16 %v3491
        %v3558 = vunpack.c.l.b16 %v3492
        %v3559 = vunpack.c.l.b16 %v3493
        %v3560 = vunpack.c.l.b16 %v3494
        %v3561 = vpack.c.b16 %v3530, %v3529
        %v3562 = vpack.c.b16 %v3532, %v3531
        %v3563 = vpack.c.b16 %v3534, %v3533
        %v3564 = vpack.c.b16 %v3536, %v3535
        %v3565 = vpack.c.b16 %v3538, %v3537
        %v3566 = vpack.c.b16 %v3540, %v3539
        %v3567 = vpack.c.b16 %v3542, %v3541
        %v3568 = vpack.c.b16 %v3544, %v3543
        %v3569 = vpack.c.b16 %v3546, %v3545
        %v3570 = vpack.c.b16 %v3548, %v3547
        %v3571 = vpack.c.b16 %v3550, %v3549
        %v3572 = vpack.c.b16 %v3552, %v3551
        %v3573 = vpack.c.b16 %v3554, %v3553
        %v3574 = vpack.c.b16 %v3556, %v3555
        %v3575 = vpack.c.b16 %v3558, %v3557
        %v3576 = vpack.c.b16 %v3560, %v3559
        %3593 = vmatpush.bf16.msra.mxu0 %v3568
        %3594 = vmatpush.bf16.msra.mxu0 %v3567
        %3595 = vmatpush.bf16.msra.mxu0 %v3566
        %3596 = vmatpush.bf16.msra.mxu0 %v3565
        %3597 = vmatpush.bf16.msra.mxu0 %v3564
        %3598 = vmatpush.bf16.msra.mxu0 %v3563
        %3599 = vmatpush.bf16.msra.mxu0 %v3562
        %3600 = vmatpush.bf16.msra.mxu0 %v3561
        %3601 = vmatmul.bf16.gmra.mxu0 %v3459
        %v3602 = vpop.f32.mrf.mxu0
        %v3603 = vadd.f32 %v3496, %v3602
        %v3604 = vpop.f32.mrf.mxu0
        %v3605 = vadd.f32 %v3496, %v3604
        %3606 = vmatmul.bf16.gmra.mxu0 %v3461
        %v3607 = vpop.f32.mrf.mxu0
        %v3608 = vadd.f32 %v3496, %v3607
        %v3609 = vpop.f32.mrf.mxu0
        %v3610 = vadd.f32 %v3496, %v3609
        %3611 = vdwg.mxu0
        %3612 = vmatpush.bf16.msra.mxu0 %v3576
        %3613 = vmatpush.bf16.msra.mxu0 %v3575
        %3614 = vmatpush.bf16.msra.mxu0 %v3574
        %3615 = vmatpush.bf16.msra.mxu0 %v3573
        %3616 = vmatpush.bf16.msra.mxu0 %v3572
        %3617 = vmatpush.bf16.msra.mxu0 %v3571
        %3618 = vmatpush.bf16.msra.mxu0 %v3570
        %3619 = vmatpush.bf16.msra.mxu0 %v3569
        %3620 = vmatmul.bf16.gmra.mxu0 %v3460
        %v3621 = vpop.f32.mrf.mxu0
        %v3622 = vadd.f32 %v3603, %v3621
        %v3623 = vpop.f32.mrf.mxu0
        %v3624 = vadd.f32 %v3605, %v3623
        %3625 = vmatmul.bf16.gmra.mxu0 %v3462
        %v3626 = vpop.f32.mrf.mxu0
        %v3627 = vadd.f32 %v3608, %v3626
        %v3628 = vpop.f32.mrf.mxu0
        %v3629 = vadd.f32 %v3610, %v3628
        %3630 = vdwg.mxu0
        %v3631 = vxor.u32 %v3622, 2147483648
        %v3632 = vxor.u32 %v3624, 2147483648
        %v3633 = vxor.u32 %v3627, 2147483648
        %v3634 = vxor.u32 %v3629, 2147483648
        %v3635 = vmul.f32 %v3631, 1.442695
        %v3636 = vpow.pop %v3635
        %v3637 = vmul.f32 %v3632, 1.442695
        %v3638 = vpow.pop %v3637
        %v3639 = vmul.f32 %v3633, 1.442695
        %v3640 = vpow.pop %v3639
        %v3641 = vmul.f32 %v3634, 1.442695
        %v3642 = vpow.pop %v3641
        %v3643 = vadd.f32 %v3636, 1.0
        %v3644 = vadd.f32 %v3638, 1.0
        %v3645 = vadd.f32 %v3640, 1.0
        %v3646 = vadd.f32 %v3642, 1.0
        %v3647 = vrcp.pop %v3643
        %v3648 = vmul.f32 %v3643, %v3647
        %v3649 = vsub.f32 1.0, %v3648
        %v3650 = vmul.f32 %v3647, %v3649
        %v3651 = vadd.f32 %v3647, %v3650
        %vm3652 = vweird.f32 %v3643
        %vm3653 = vweird.f32 %v3647
        %vm3654 = vmor %vm3652, %vm3653
        %v3655 = vsel %vm3654, %v3647, %v3651
        %v3656 = vand.u32 2147483647, %v3643
        %vm3657 = vcmp.eq.f32.partialorder %v3656, 8.507059e+37
        %v3658 = vand.u32 %v3643, 2147483648
        %v3659 = vor.u32 1.1754944e-38, %v3658
        %v3660 = vsel %vm3657, %v3659, %v3655
        %v3661 = vmul.f32 1.0, %v3660
        %v3662 = vrcp.pop %v3644
        %v3663 = vmul.f32 %v3644, %v3662
        %v3664 = vsub.f32 1.0, %v3663
        %v3665 = vmul.f32 %v3662, %v3664
        %v3666 = vadd.f32 %v3662, %v3665
        %vm3667 = vweird.f32 %v3644
        %vm3668 = vweird.f32 %v3662
        %vm3669 = vmor %vm3667, %vm3668
        %v3670 = vsel %vm3669, %v3662, %v3666
        %v3671 = vand.u32 2147483647, %v3644
        %vm3672 = vcmp.eq.f32.partialorder %v3671, 8.507059e+37
        %v3673 = vand.u32 %v3644, 2147483648
        %v3674 = vor.u32 1.1754944e-38, %v3673
        %v3675 = vsel %vm3672, %v3674, %v3670
        %v3676 = vmul.f32 1.0, %v3675
        %v3677 = vrcp.pop %v3645
        %v3678 = vmul.f32 %v3645, %v3677
        %v3679 = vsub.f32 1.0, %v3678
        %v3680 = vmul.f32 %v3677, %v3679
        %v3681 = vadd.f32 %v3677, %v3680
        %vm3682 = vweird.f32 %v3645
        %vm3683 = vweird.f32 %v3677
        %vm3684 = vmor %vm3682, %vm3683
        %v3685 = vsel %vm3684, %v3677, %v3681
        %v3686 = vand.u32 2147483647, %v3645
        %vm3687 = vcmp.eq.f32.partialorder %v3686, 8.507059e+37
        %v3688 = vand.u32 %v3645, 2147483648
        %v3689 = vor.u32 1.1754944e-38, %v3688
        %v3690 = vsel %vm3687, %v3689, %v3685
        %v3691 = vmul.f32 1.0, %v3690
        %v3692 = vrcp.pop %v3646
        %v3693 = vmul.f32 %v3646, %v3692
        %v3694 = vsub.f32 1.0, %v3693
        %v3695 = vmul.f32 %v3692, %v3694
        %v3696 = vadd.f32 %v3692, %v3695
        %vm3697 = vweird.f32 %v3646
        %vm3698 = vweird.f32 %v3692
        %vm3699 = vmor %vm3697, %vm3698
        %v3700 = vsel %vm3699, %v3692, %v3696
        %v3701 = vand.u32 2147483647, %v3646
        %vm3702 = vcmp.eq.f32.partialorder %v3701, 8.507059e+37
        %v3703 = vand.u32 %v3646, 2147483648
        %v3704 = vor.u32 1.1754944e-38, %v3703
        %v3705 = vsel %vm3702, %v3704, %v3700
        %v3706 = vmul.f32 1.0, %v3705
        %vm3707 = vcmask 7168
        %3708 = vst.msk [vmem:[%s450] sm:$0xff] %vm3707, %v3661
        %3709 = vst.msk [vmem:[%s450 + $0x8] sm:$0xff] %vm3707, %v3676
        %3710 = vst.msk [vmem:[%s450 + $0x10] sm:$0xff] %vm3707, %v3691
        %3711 = vst.msk [vmem:[%s450 + $0x18] sm:$0xff] %vm3707, %v3706
        %s3712 = sand.u32 %s178, 1
        %s3713 = scalar_lea.sflag [#allocation4], %s3712
        %s3714 = sand.u32 %s178, 1
        %s3715 = smul.addr %s3714, 16
        %s3716 = scalar_lea.vmem [#allocation13], %s3715
        %s3717 = sand.u32 %s204, 1
        %s3718 = scalar_lea.sflag [#allocation15], %s3717
        %s3719 = sand.u32 %s204, 1
        %s3720 = smul.addr %s3719, 16
        %s3721 = scalar_lea.vmem [#allocation14], %s3720
        %s3722 = smul.u32 4, %s34
        %p3723 = scmp.lt.s32.totalorder %s3722, 7
        %s3724 = scalar_select %p3723, %s3722, 7
        %s3725 = smul.addr %s3724, 8
        %s3726 = scalar_lea.vmem %s8, %s3725
        // Predicated region
        $region69: #{tpu_custom_call.1} parent=43 // pred_check
          %p3727 = pneg %p188
        $region70: #{tpu_custom_call.1} parent=43 // pred_check_branch
          %3729 = sbr.rel (%p3727) target = $region72
        $region71: #{tpu_custom_call.1} parent=43 // pred_region
          %s3730 = smul.u32 4, %s34
          %3732 = vsyncadd %s3713, 0
          %s3733 = smul.addr %s3730, 4
          %s3734 = scalar_lea.hbm %s6, %s3733
          %s3735 = sshll.u32 %s3716, 4
          %s3736 = int_to_ptr.vmem [resolvable:$true] %s3735
          %s3737 = sshll.u32 %s3734, 4
          %s3738 = int_to_ptr.hbm [resolvable:$true] %s3737
          %3743 = dma.vmem_to_hbm [thread:$0]  %s3736, 256, %s3738, %s3713, 64, 64, 4
        $region72: #{tpu_custom_call.1} parent=43 // pred_fallthru
          _
        // Predicated region
        $region73: #{tpu_custom_call.1} parent=43 // pred_check
          %p3744 = pneg %p214
        $region74: #{tpu_custom_call.1} parent=43 // pred_check_branch
          %3746 = sbr.rel (%p3744) target = $region76
        $region75: #{tpu_custom_call.1} parent=43 // pred_region
          %s3747 = smul.u32 4, %s34
          %3749 = vsyncadd %s3718, 0
          %s3750 = smul.addr %s3747, 4
          %s3751 = scalar_lea.hbm %s7, %s3750
          %s3752 = sshll.u32 %s3721, 4
          %s3753 = int_to_ptr.vmem [resolvable:$true] %s3752
          %s3754 = sshll.u32 %s3751, 4
          %s3755 = int_to_ptr.hbm [resolvable:$true] %s3754
          %3760 = dma.vmem_to_hbm [thread:$0]  %s3753, 256, %s3755, %s3718, 64, 64, 4
        $region76: #{tpu_custom_call.1} parent=43 // pred_fallthru
          _
        // Predicated region
        $region77: #{tpu_custom_call.1} parent=43 // pred_check
          %p3761 = pneg %p240
        $region78: #{tpu_custom_call.1} parent=43 // pred_check_branch
          %3763 = sbr.rel (%p3761) target = $region80
        $region79: #{tpu_custom_call.1} parent=43 // pred_region
          %s3764 = smul.u32 4, %s34
        $region80: #{tpu_custom_call.1} parent=43 // pred_fallthru
          _
      $region44: #{tpu_custom_call.1} parent=5 // pred_fallthru
        _
      %p3765 = scmp.le.s32.totalorder 2, %s29
      // Predicated region
      $region81: #{tpu_custom_call.1} parent=5 // pred_check
        %p3766 = pneg %p3765
      $region82: #{tpu_custom_call.1} parent=5 // pred_check_branch
        %3768 = sbr.rel (%p3766) target = $region84
      $region83: #{tpu_custom_call.1} parent=5 // pred_region
        %s3769 = ssub.s32 %s29, 2
        // Predicated region
        $region85: #{tpu_custom_call.1} parent=83 // pred_check
          %p3770 = pneg %p194
        $region86: #{tpu_custom_call.1} parent=83 // pred_check_branch
          %3772 = sbr.rel (%p3770) target = $region88
        $region87: #{tpu_custom_call.1} parent=83 // pred_region
          %s3773 = sand.u32 %s179, 1
          %s3774 = scalar_lea.sflag [#allocation4], %s3773
          %s3775 = sand.u32 %s179, 1
          %s3776 = smul.addr %s3775, 16
          %s3777 = scalar_lea.vmem [#allocation13], %s3776
          %3779 = dma.done %s3774, 256
        $region88: #{tpu_custom_call.1} parent=83 // pred_fallthru
          _
        // Predicated region
        $region89: #{tpu_custom_call.1} parent=83 // pred_check
          %p3780 = pneg %p220
        $region90: #{tpu_custom_call.1} parent=83 // pred_check_branch
          %3782 = sbr.rel (%p3780) target = $region92
        $region91: #{tpu_custom_call.1} parent=83 // pred_region
          %s3783 = sand.u32 %s205, 1
          %s3784 = scalar_lea.sflag [#allocation15], %s3783
          %s3785 = sand.u32 %s205, 1
          %s3786 = smul.addr %s3785, 16
          %s3787 = scalar_lea.vmem [#allocation14], %s3786
          %3789 = dma.done %s3784, 256
        $region92: #{tpu_custom_call.1} parent=83 // pred_fallthru
          _
        // Predicated region
        $region93: #{tpu_custom_call.1} parent=83 // pred_check
          %p3790 = pneg %p246
        $region94: #{tpu_custom_call.1} parent=83 // pred_check_branch
          %3792 = sbr.rel (%p3790) target = $region96
        $region95: #{tpu_custom_call.1} parent=83 // pred_region
          %s3793 = smul.u32 4, %s35
          %p3794 = scmp.lt.s32.totalorder %s3793, 7
          %s3795 = scalar_select %p3794, %s3793, 7
          %s3796 = smul.addr %s3795, 8
          %s3797 = scalar_lea.vmem %s8, %s3796
        $region96: #{tpu_custom_call.1} parent=83 // pred_fallthru
          _
      $region84: #{tpu_custom_call.1} parent=5 // pred_fallthru
        _
    $region6: #{tpu_custom_call.1} parent=1 // loop_footer
      %s33 = sadd.s32 1, %s29
    $region7: #{tpu_custom_call.1} parent=1 // loop_footer_branch
      %28 = sbr.rel target = $region3
    $region8: #{tpu_custom_call.1} parent=1 // loop_exit
      _
    %3798 = vsyncpa [#allocation3], 1
    %s3799 = scalar_lea.sflag [#allocation3], 1
    %3800 = vsyncpa %s3799, 1
    %3801 = vsyncpa [#allocation6], 1
    %s3802 = scalar_lea.sflag [#allocation6], 1
    %3803 = vsyncpa %s3802, 1
    %3804 = vsyncpa [#allocation9], 1
    %3805 = vsyncpa [#allocation12], 1
    %3806 = vsyncpa [#allocation4], 1
    %s3807 = scalar_lea.sflag [#allocation4], 1
    %3808 = vsyncpa %s3807, 1
    %3809 = vsyncpa [#allocation15], 1
    %s3810 = scalar_lea.sflag [#allocation15], 1
    %3811 = vsyncpa %s3810, 1

</llo_original>
